<compile_context>
chip_gen: v7x
topology: tpu7x:2x2x1
jax: 0.10.0
libtpu: 0.0.40
codegen_flags: <defaults>
</compile_context>

<pallas_src>
import functools

import numpy as np

import jax
import jax.numpy as jnp
from jax.experimental import pallas as pl

C_MID = 128      # channels after 1x1 conv
C_FEAT = 768     # channels after 2x2 conv
POOL_K = 5
POOL_S = 2
BN_EPS = 1e-5
LANE = 128       # classifier padding granularity (lane width)


def _aux_head_kernel(x_ref, pool_ref, w1_ref, gamma_ref, beta_ref, w2_ref,
                     wfc_ref, bfc_ref, out_ref, *, batch, hw, inv_pool):
    """Single-invocation kernel (no grid).

    x_ref     : (B*H*W, C)   bf16  flattened NHWC input (rows ordered (b, h, w))
    pool_ref  : (P, H*W)     bf16  0/1 window-membership matrix for AvgPool2d(5,2)
    w1_ref    : (C, 128)     bf16  1x1 conv weight (in, out)
    gamma_ref : (1, 128)     f32   BN gamma
    beta_ref  : (1, 128)     f32   BN beta
    w2_ref    : (P*128, 768) bf16  2x2 conv weight flattened (kh, kw, cin) x cout
    wfc_ref   : (768, Npad)  bf16  classifier weight, lane-dense padded
    bfc_ref   : (1, Npad)    f32   classifier bias, padded
    out_ref   : (B, Npad)    f32   padded logits
    """
    # --- ReLU -> AvgPool2d(5, stride=2) -> Conv2d(C,128,1) per image ---------
    # `batch` is a small static Python int, so this unrolls to `batch` tiny MXU
    # matmuls plus one lane-full sublane concatenation.
    # TODO(synk): for large batch sizes, move this loop onto a 'parallel' batch
    # grid axis (BN batch statistics would then need a two-pass reduction).
    rows = []
    for b in range(batch):
        xb = jnp.maximum(x_ref[b * hw:(b + 1) * hw, :], 0.0)        # (HW, C) bf16
        pooled = jnp.dot(pool_ref[...], xb,
                         preferred_element_type=jnp.float32) * inv_pool  # (P, C) f32
        rows.append(jnp.dot(pooled.astype(jnp.bfloat16), w1_ref[...],
                            preferred_element_type=jnp.float32))    # (P, 128) f32
    y = jnp.concatenate(rows, axis=0)                               # (B*P, 128)

    # --- BatchNorm2d(128): training-mode batch stats over (B, OH, OW) --------
    # TODO(synk): eval-mode BatchNorm (running mean/var) would need those stats
    # as extra inputs; only train-mode batch statistics are implemented here.
    mean = jnp.mean(y, axis=0, keepdims=True)                       # (1, 128)
    var = jnp.mean((y - mean) ** 2, axis=0, keepdims=True)          # biased
    yn = (y - mean) * jax.lax.rsqrt(var + BN_EPS)
    yn = jnp.maximum(yn * gamma_ref[...] + beta_ref[...], 0.0)      # ReLU

    # --- Conv2d(128,768,2,bias=False): 2x2 -> 1x1 == one matmul over the -----
    # --- flattened (oh, ow, cin) receptive field, then ReLU. ------------------
    feat_in = yn.reshape(batch, -1).astype(jnp.bfloat16)            # (B, P*128)
    feat = jnp.maximum(jnp.dot(feat_in, w2_ref[...],
                               preferred_element_type=jnp.float32), 0.0)  # (B, 768)

    # --- Linear(768, num_classes): one lane-dense padded tile ----------------
    out_ref[...] = (jnp.dot(feat.astype(jnp.bfloat16), wfc_ref[...],
                            preferred_element_type=jnp.float32)
                    + bfc_ref[...])


def _make_pool_matrix(H, W):
    """(P, H*W) 0/1 window-membership matrix for AvgPool2d(5, stride=2, pad=0).

    Entries are 0/1 (exact in bf16); the 1/25 normalisation is applied in f32
    inside the kernel (count_include_pad is irrelevant since padding=0).
    """
    OH = (H - POOL_K) // POOL_S + 1
    OW = (W - POOL_K) // POOL_S + 1
    P = OH * OW
    m = np.zeros((P, H * W), np.float32)
    for oh in range(OH):
        for ow in range(OW):
            p = oh * OW + ow
            for kh in range(POOL_K):
                for kw in range(POOL_K):
                    m[p, (POOL_S * oh + kh) * W + (POOL_S * ow + kw)] = 1.0
    return jnp.asarray(m, jnp.bfloat16), OH, OW, P


def auxiliary_head_imagenet(x_nchw, params, num_classes):
    """JAX wrapper: layout conversion + weight repacking + pallas_call."""
    x = jnp.transpose(x_nchw, (0, 2, 3, 1))                 # NCHW -> NHWC
    B, H, W, C = x.shape
    pool01, OH, OW, P = _make_pool_matrix(H, W)
    assert OH == 2 and OW == 2, (
        "classifier expects 768 flattened features -> the 2x2 conv output "
        "must be 1x1, i.e. input spatial must be 7 or 8")

    x2 = x.reshape(B * H * W, C).astype(jnp.bfloat16)       # (BHW, C) bf16

    # Conv1 weight: torch (128, C, 1, 1) -> (C, 128), bf16 for the MXU.
    w1 = jnp.transpose(params["conv1_w"].reshape(C_MID, C),
                       (1, 0)).astype(jnp.bfloat16)
    # Conv2 weight: torch (768, 128, 2, 2) -> (kh, kw, cin, cout) -> (512, 768)
    # (row order kh-major, kw, cin  ==  the pooled (oh, ow) x channel order).
    w2 = jnp.transpose(params["conv2_w"], (2, 3, 1, 0)).reshape(
        P * C_MID, C_FEAT).astype(jnp.bfloat16)
    gamma = params["bn_gamma"].reshape(1, C_MID).astype(jnp.float32)
    beta = params["bn_beta"].reshape(1, C_MID).astype(jnp.float32)

    # Classifier: torch (num_classes, 768) -> (768, N_pad), lane-dense padded.
    n_pad = pl.cdiv(num_classes, LANE) * LANE
    wfc = jnp.transpose(params["fc_w"], (1, 0))
    wfc = jnp.pad(wfc, ((0, 0), (0, n_pad - num_classes))).astype(jnp.bfloat16)
    bfc = jnp.pad(params["fc_b"].reshape(1, num_classes),
                  ((0, 0), (0, n_pad - num_classes))).astype(jnp.float32)

    flops = 2 * (B * P * H * W * C            # avg-pool matmuls
                 + B * P * C * C_MID          # conv1 (1x1)
                 + B * (P * C_MID) * C_FEAT   # conv2 (2x2 -> 1x1)
                 + B * C_FEAT * n_pad)        # classifier
    bytes_accessed = (x2.size * 2 + pool01.size * 2 + w1.size * 2
                      + gamma.size * 4 + beta.size * 4 + w2.size * 2
                      + wfc.size * 2 + bfc.size * 4 + B * n_pad * 4)

    out_padded = pl.pallas_call(
        functools.partial(_aux_head_kernel, batch=B, hw=H * W,
                          inv_pool=1.0 / float(POOL_K * POOL_K)),
        out_shape=jax.ShapeDtypeStruct((B, n_pad), jnp.float32),
        cost_estimate=pl.CostEstimate(flops=flops,
                                      transcendentals=C_MID,   # BN rsqrt
                                      bytes_accessed=bytes_accessed),
    )(x2, pool01, w1, gamma, beta, w2, wfc, bfc)

    return out_padded[:, :num_classes]


def make_params(key, C, num_classes):
    """Deterministic synthetic parameters (shapes per the torch __init__)."""
    k1, k2, k3, k4, k5, k6 = jax.random.split(key, 6)
    return {
        "conv1_w": 0.1 * jax.random.normal(k1, (C_MID, C, 1, 1), jnp.float32),
        "bn_gamma": 1.0 + 0.05 * jax.random.normal(k2, (C_MID,), jnp.float32),
        "bn_beta": 0.05 * jax.random.normal(k3, (C_MID,), jnp.float32),
        "conv2_w": 0.05 * jax.random.normal(k4, (C_FEAT, C_MID, 2, 2),
                                            jnp.float32),
        "fc_w": 0.05 * jax.random.normal(k5, (num_classes, C_FEAT),
                                         jnp.float32),
        "fc_b": 0.05 * jax.random.normal(k6, (num_classes,), jnp.float32),
    }


if __name__ == "__main__":
    key = jax.random.PRNGKey(0)
    kx, kp = jax.random.split(key)

    B, C, H, W = 2, 8, 8, 8          # 8x8 input -> pool 2x2 -> conv2 1x1 -> 768
    num_classes = 1000               # ImageNet head -> padded to 1024 lanes

    x = jax.random.normal(kx, (B, C, H, W), jnp.float32)   # NCHW like PyTorch
    params = make_params(kp, C, num_classes)

    fn = jax.jit(functools.partial(auxiliary_head_imagenet,
                                   num_classes=num_classes))
    out = fn(x, params)
    jax.block_until_ready(out)

    assert out.shape == (B, num_classes)
    assert bool(jnp.all(jnp.isfinite(out)))
    print("KERNEL_OK")
</pallas_src>

<mosaic_0001>
module attributes {stable_mosaic.version = 11 : i64} {
  func.func @_aux_head_kernel(%arg0: memref<128x8xbf16, #tpu.memory_space<vmem>>, %arg1: memref<4x64xbf16, #tpu.memory_space<vmem>>, %arg2: memref<8x128xbf16, #tpu.memory_space<vmem>>, %arg3: memref<1x128xf32, #tpu.memory_space<vmem>>, %arg4: memref<1x128xf32, #tpu.memory_space<vmem>>, %arg5: memref<512x768xbf16, #tpu.memory_space<vmem>>, %arg6: memref<768x1024xbf16, #tpu.memory_space<vmem>>, %arg7: memref<1x1024xf32, #tpu.memory_space<vmem>>, %arg8: memref<2x1024xf32, #tpu.memory_space<vmem>>) attributes {dimension_semantics = [], scalar_prefetch = 0 : i64, scratch_operands = 0 : i64, tpu.core_type = #tpu.core_type<tc>} {
    %c0 = arith.constant 0 : index
    %c0_0 = arith.constant 0 : index
    %0 = vector.load %arg0[%c0, %c0_0] : memref<128x8xbf16, #tpu.memory_space<vmem>>, vector<64x8xbf16>
    %cst = arith.constant 0.000000e+00 : bf16
    %1 = vector.broadcast %cst : bf16 to vector<64x8xbf16>
    %2 = arith.maximumf %0, %1 : vector<64x8xbf16>
    %c0_1 = arith.constant 0 : index
    %c0_2 = arith.constant 0 : index
    %3 = vector.load %arg1[%c0_1, %c0_2] : memref<4x64xbf16, #tpu.memory_space<vmem>>, vector<4x64xbf16>
    %cst_3 = arith.constant dense<0.000000e+00> : vector<4x8xf32>
    %4 = tpu.matmul %3, %2, %cst_3 {dimension_numbers = #tpu.dot_dimension_numbers<[1], [0], [0], [1], [0, 0, 1, 1], [], []>} : vector<4x64xbf16>, vector<64x8xbf16>, vector<4x8xf32> -> vector<4x8xf32>
    %cst_4 = arith.constant 4.000000e-02 : f32
    %5 = vector.broadcast %cst_4 : f32 to vector<4x8xf32>
    %6 = arith.mulf %4, %5 : vector<4x8xf32>
    %7 = arith.truncf %6 : vector<4x8xf32> to vector<4x8xbf16>
    %c0_5 = arith.constant 0 : index
    %c0_6 = arith.constant 0 : index
    %8 = vector.load %arg2[%c0_5, %c0_6] : memref<8x128xbf16, #tpu.memory_space<vmem>>, vector<8x128xbf16>
    %cst_7 = arith.constant dense<0.000000e+00> : vector<4x128xf32>
    %9 = tpu.matmul %7, %8, %cst_7 {dimension_numbers = #tpu.dot_dimension_numbers<[1], [0], [0], [1], [0, 0, 1, 1], [], []>} : vector<4x8xbf16>, vector<8x128xbf16>, vector<4x128xf32> -> vector<4x128xf32>
    %c64 = arith.constant 64 : index
    %c0_8 = arith.constant 0 : index
    %10 = vector.load %arg0[%c64, %c0_8] : memref<128x8xbf16, #tpu.memory_space<vmem>>, vector<64x8xbf16>
    %cst_9 = arith.constant 0.000000e+00 : bf16
    %11 = vector.broadcast %cst_9 : bf16 to vector<64x8xbf16>
    %12 = arith.maximumf %10, %11 : vector<64x8xbf16>
    %c0_10 = arith.constant 0 : index
    %c0_11 = arith.constant 0 : index
    %13 = vector.load %arg1[%c0_10, %c0_11] : memref<4x64xbf16, #tpu.memory_space<vmem>>, vector<4x64xbf16>
    %cst_12 = arith.constant dense<0.000000e+00> : vector<4x8xf32>
    %14 = tpu.matmul %13, %12, %cst_12 {dimension_numbers = #tpu.dot_dimension_numbers<[1], [0], [0], [1], [0, 0, 1, 1], [], []>} : vector<4x64xbf16>, vector<64x8xbf16>, vector<4x8xf32> -> vector<4x8xf32>
    %cst_13 = arith.constant 4.000000e-02 : f32
    %15 = vector.broadcast %cst_13 : f32 to vector<4x8xf32>
    %16 = arith.mulf %14, %15 : vector<4x8xf32>
    %17 = arith.truncf %16 : vector<4x8xf32> to vector<4x8xbf16>
    %c0_14 = arith.constant 0 : index
    %c0_15 = arith.constant 0 : index
    %18 = vector.load %arg2[%c0_14, %c0_15] : memref<8x128xbf16, #tpu.memory_space<vmem>>, vector<8x128xbf16>
    %cst_16 = arith.constant dense<0.000000e+00> : vector<4x128xf32>
    %19 = tpu.matmul %17, %18, %cst_16 {dimension_numbers = #tpu.dot_dimension_numbers<[1], [0], [0], [1], [0, 0, 1, 1], [], []>} : vector<4x8xbf16>, vector<8x128xbf16>, vector<4x128xf32> -> vector<4x128xf32>
    %20 = tpu.concatenate %9, %19 in 0 : vector<4x128xf32>, vector<4x128xf32> -> vector<8x128xf32>
    %cst_17 = arith.constant dense<0.000000e+00> : vector<128xf32>
    %21 = vector.multi_reduction <add>, %20, %cst_17 [0] : vector<8x128xf32> to vector<128xf32>
    %22 = vector.shape_cast %21 : vector<128xf32> to vector<1x128xf32>
    %cst_18 = arith.constant 8.000000e+00 : f32
    %23 = vector.broadcast %cst_18 : f32 to vector<1x128xf32>
    %24 = arith.divf %22, %23 : vector<1x128xf32>
    %25 = vector.broadcast %24 : vector<1x128xf32> to vector<8x128xf32>
    %26 = arith.subf %20, %25 : vector<8x128xf32>
    %27 = arith.mulf %26, %26 : vector<8x128xf32>
    %cst_19 = arith.constant dense<0.000000e+00> : vector<128xf32>
    %28 = vector.multi_reduction <add>, %27, %cst_19 [0] : vector<8x128xf32> to vector<128xf32>
    %29 = vector.shape_cast %28 : vector<128xf32> to vector<1x128xf32>
    %cst_20 = arith.constant 8.000000e+00 : f32
    %30 = vector.broadcast %cst_20 : f32 to vector<1x128xf32>
    %31 = arith.divf %29, %30 : vector<1x128xf32>
    %32 = vector.broadcast %24 : vector<1x128xf32> to vector<8x128xf32>
    %33 = arith.subf %20, %32 : vector<8x128xf32>
    %cst_21 = arith.constant 9.99999974E-6 : f32
    %34 = vector.broadcast %cst_21 : f32 to vector<1x128xf32>
    %35 = arith.addf %31, %34 : vector<1x128xf32>
    %36 = math.rsqrt %35 : vector<1x128xf32>
    %37 = vector.broadcast %36 : vector<1x128xf32> to vector<8x128xf32>
    %38 = arith.mulf %33, %37 : vector<8x128xf32>
    %c0_22 = arith.constant 0 : index
    %c0_23 = arith.constant 0 : index
    %39 = vector.load %arg3[%c0_22, %c0_23] : memref<1x128xf32, #tpu.memory_space<vmem>>, vector<1x128xf32>
    %40 = vector.broadcast %39 : vector<1x128xf32> to vector<8x128xf32>
    %41 = arith.mulf %38, %40 : vector<8x128xf32>
    %c0_24 = arith.constant 0 : index
    %c0_25 = arith.constant 0 : index
    %42 = vector.load %arg4[%c0_24, %c0_25] : memref<1x128xf32, #tpu.memory_space<vmem>>, vector<1x128xf32>
    %43 = vector.broadcast %42 : vector<1x128xf32> to vector<8x128xf32>
    %44 = arith.addf %41, %43 : vector<8x128xf32>
    %cst_26 = arith.constant 0.000000e+00 : f32
    %45 = vector.broadcast %cst_26 : f32 to vector<8x128xf32>
    %46 = arith.maximumf %44, %45 : vector<8x128xf32>
    %47 = vector.shape_cast %46 : vector<8x128xf32> to vector<2x512xf32>
    %48 = arith.truncf %47 : vector<2x512xf32> to vector<2x512xbf16>
    %c0_27 = arith.constant 0 : index
    %c0_28 = arith.constant 0 : index
    %49 = vector.load %arg5[%c0_27, %c0_28] : memref<512x768xbf16, #tpu.memory_space<vmem>>, vector<512x768xbf16>
    %cst_29 = arith.constant dense<0.000000e+00> : vector<2x768xf32>
    %50 = tpu.matmul %48, %49, %cst_29 {dimension_numbers = #tpu.dot_dimension_numbers<[1], [0], [0], [1], [0, 0, 1, 1], [], []>} : vector<2x512xbf16>, vector<512x768xbf16>, vector<2x768xf32> -> vector<2x768xf32>
    %cst_30 = arith.constant 0.000000e+00 : f32
    %51 = vector.broadcast %cst_30 : f32 to vector<2x768xf32>
    %52 = arith.maximumf %50, %51 : vector<2x768xf32>
    %53 = arith.truncf %52 : vector<2x768xf32> to vector<2x768xbf16>
    %c0_31 = arith.constant 0 : index
    %c0_32 = arith.constant 0 : index
    %54 = vector.load %arg6[%c0_31, %c0_32] : memref<768x1024xbf16, #tpu.memory_space<vmem>>, vector<768x1024xbf16>
    %cst_33 = arith.constant dense<0.000000e+00> : vector<2x1024xf32>
    %55 = tpu.matmul %53, %54, %cst_33 {dimension_numbers = #tpu.dot_dimension_numbers<[1], [0], [0], [1], [0, 0, 1, 1], [], []>} : vector<2x768xbf16>, vector<768x1024xbf16>, vector<2x1024xf32> -> vector<2x1024xf32>
    %c0_34 = arith.constant 0 : index
    %c0_35 = arith.constant 0 : index
    %56 = vector.load %arg7[%c0_34, %c0_35] : memref<1x1024xf32, #tpu.memory_space<vmem>>, vector<1x1024xf32>
    %57 = vector.broadcast %56 : vector<1x1024xf32> to vector<2x1024xf32>
    %58 = arith.addf %55, %57 : vector<2x1024xf32>
    %c0_36 = arith.constant 0 : index
    %c0_37 = arith.constant 0 : index
    %59 = vector.load %arg8[%c0_36, %c0_37] : memref<2x1024xf32, #tpu.memory_space<vmem>>, vector<2x1024xf32>
    tpu.vector_store %arg8[%c0_36, %c0_37], %58 {strides = array<i32>} : memref<2x1024xf32, #tpu.memory_space<vmem>>, vector<2x1024xf32>,
    return
  }
}

</mosaic_0001>

<llo_original>
// kernel: auxiliary_head_imagenet.1
$region0: #{auxiliary_head_imagenet.1}
  #allocation0 [shape = 'u32[]', space=smem, size = 0x4, offset = 0x4, fixed_abs, tag = 'smem constant byte address 0x4 - core index']
  #allocation1 [shape = 'u32[144,128]{1,0:T(1,128)}', space=vmem, size = 0x12000, scoped, tag = 'internal scratch']
  %s0 = inlined_call_operand.vmem [shape: bf16[128,8], index: 0, kind: input, shape index: {}]
  %s1 = inlined_call_operand.vmem [shape: bf16[4,64], index: 1, kind: input, shape index: {}]
  %s2 = inlined_call_operand.vmem [shape: bf16[8,128], index: 2, kind: input, shape index: {}]
  %s3 = inlined_call_operand.vmem [shape: f32[1,128], index: 3, kind: input, shape index: {}]
  %s4 = inlined_call_operand.vmem [shape: f32[1,128], index: 4, kind: input, shape index: {}]
  %s5 = inlined_call_operand.vmem [shape: bf16[512,768], index: 5, kind: input, shape index: {}]
  %s6 = inlined_call_operand.vmem [shape: bf16[768,1024], index: 6, kind: input, shape index: {}]
  %s7 = inlined_call_operand.vmem [shape: f32[1,1024], index: 7, kind: input, shape index: {}]
  %s8 = inlined_call_operand.hbm [shape: f32[2,1024], index: 8, kind: output, shape index: {}]
  %s9 = sld [smem:[#allocation0]]
  $region42: #{auxiliary_head_imagenet.1} parent=0
    _
  %s11 = ssub.s32 1, %s9
  %s12 = scalar_select 0, %s11, %s9
  $region1: #{auxiliary_head_imagenet.1} parent=0
    #allocation2 [shape = 'u8[8192]{0}', space=vmem, size = 0x2000, scoped, tag = 'output window, operand 0, single buffered']
    #allocation3 [shape = 's32[1]{0}', space=sflag, size = 0x4, scoped, tag = 'scoped memory for auxiliary_head_imagenet.1']
    %13 = vsyncpa [#allocation3], 0
    // Predicated region
    $region2: #{auxiliary_head_imagenet.1} parent=1 // pred_check
      _
    $region3: #{auxiliary_head_imagenet.1} parent=1 // pred_check_branch
      %15 = sbr.rel (0) target = $region5
    $region4: #{auxiliary_head_imagenet.1} parent=1 // pred_region
      _
    $region5: #{auxiliary_head_imagenet.1} parent=1 // pred_fallthru
      _
    // Predicated region
    $region6: #{auxiliary_head_imagenet.1} parent=1 // pred_check
      _
    $region7: #{auxiliary_head_imagenet.1} parent=1 // pred_check_branch
      %17 = sbr.rel (0) target = $region9
    $region8: #{auxiliary_head_imagenet.1} parent=1 // pred_region
      _
    $region9: #{auxiliary_head_imagenet.1} parent=1 // pred_fallthru
      _
    // Predicated region
    $region10: #{auxiliary_head_imagenet.1} parent=1 // pred_check
      _
    $region11: #{auxiliary_head_imagenet.1} parent=1 // pred_check_branch
      %19 = sbr.rel (0) target = $region13
    $region12: #{auxiliary_head_imagenet.1} parent=1 // pred_region
      _
    $region13: #{auxiliary_head_imagenet.1} parent=1 // pred_fallthru
      _
    // Predicated region
    $region14: #{auxiliary_head_imagenet.1} parent=1 // pred_check
      _
    $region15: #{auxiliary_head_imagenet.1} parent=1 // pred_check_branch
      %21 = sbr.rel (0) target = $region17
    $region16: #{auxiliary_head_imagenet.1} parent=1 // pred_region
      _
    $region17: #{auxiliary_head_imagenet.1} parent=1 // pred_fallthru
      _
    // Predicated region
    $region18: #{auxiliary_head_imagenet.1} parent=1 // pred_check
      _
    $region19: #{auxiliary_head_imagenet.1} parent=1 // pred_check_branch
      %23 = sbr.rel (0) target = $region21
    $region20: #{auxiliary_head_imagenet.1} parent=1 // pred_region
      _
    $region21: #{auxiliary_head_imagenet.1} parent=1 // pred_fallthru
      _
    // Predicated region
    $region22: #{auxiliary_head_imagenet.1} parent=1 // pred_check
      _
    $region23: #{auxiliary_head_imagenet.1} parent=1 // pred_check_branch
      %25 = sbr.rel (0) target = $region25
    $region24: #{auxiliary_head_imagenet.1} parent=1 // pred_region
      _
    $region25: #{auxiliary_head_imagenet.1} parent=1 // pred_fallthru
      _
    // Predicated region
    $region26: #{auxiliary_head_imagenet.1} parent=1 // pred_check
      _
    $region27: #{auxiliary_head_imagenet.1} parent=1 // pred_check_branch
      %27 = sbr.rel (0) target = $region29
    $region28: #{auxiliary_head_imagenet.1} parent=1 // pred_region
      _
    $region29: #{auxiliary_head_imagenet.1} parent=1 // pred_fallthru
      _
    // Predicated region
    $region30: #{auxiliary_head_imagenet.1} parent=1 // pred_check
      _
    $region31: #{auxiliary_head_imagenet.1} parent=1 // pred_check_branch
      %29 = sbr.rel (0) target = $region33
    $region32: #{auxiliary_head_imagenet.1} parent=1 // pred_region
      _
    $region33: #{auxiliary_head_imagenet.1} parent=1 // pred_fallthru
      _
    %v31 = vld [vmem:[%s0] sm:$0xf]
    %v32 = vld [vmem:[%s0 + $0x4] sm:$0xf]
    %v33 = vld [vmem:[%s0 + $0x8] sm:$0xf]
    %v34 = vld [vmem:[%s0 + $0xc] sm:$0xf]
    %v35 = vld [vmem:[%s0 + $0x10] sm:$0xf]
    %v36 = vld [vmem:[%s0 + $0x14] sm:$0xf]
    %v37 = vld [vmem:[%s0 + $0x18] sm:$0xf]
    %v38 = vld [vmem:[%s0 + $0x1c] sm:$0xf]
    %v39 = vmax.bf16 %v31, 0
    %v40 = vmax.bf16 %v32, 0
    %v41 = vmax.bf16 %v33, 0
    %v42 = vmax.bf16 %v34, 0
    %v43 = vmax.bf16 %v35, 0
    %v44 = vmax.bf16 %v36, 0
    %v45 = vmax.bf16 %v37, 0
    %v46 = vmax.bf16 %v38, 0
    %v47 = vld [vmem:[%s1] sm:$0x3]
    %v56 = vunpack.c.l.b16 %v39
    %v57 = vunpack.c.l.b16 %v40
    %v58 = vunpack.c.l.b16 %v41
    %v59 = vunpack.c.l.b16 %v42
    %v60 = vunpack.c.l.b16 %v43
    %v61 = vunpack.c.l.b16 %v44
    %v62 = vunpack.c.l.b16 %v45
    %v63 = vunpack.c.l.b16 %v46
    %v64 = vpack.c.b16 %v57, %v56
    %v65 = vpack.c.b16 %v59, %v58
    %v66 = vpack.c.b16 %v61, %v60
    %v67 = vpack.c.b16 %v63, %v62
    %vm72 = vcmask 523264
    %v74 = vsel %vm72, %v47, 0
    %76 = vmatprep.subr.bf16.mxu0 0
    %77 = vmatpush1.bf16.msra.mxu0 %v64
    %78 = vmatprep.subr.bf16.mxu0 0
    %79 = vmatpush1.bf16.msra.mxu0 %v65
    %80 = vmatprep.subr.bf16.mxu0 0
    %81 = vmatpush1.bf16.msra.mxu0 %v66
    %82 = vmatprep.subr.bf16.mxu0 0
    %83 = vmatpush1.bf16.msra.mxu0 %v67
    %84 = vmatprep.subr.bf16.mxu0 0
    %85 = vmatpush1.bf16.msra.mxu0 0
    %86 = vmatprep.subr.bf16.mxu0 0
    %87 = vmatpush1.bf16.msra.mxu0 0
    %88 = vmatprep.subr.bf16.mxu0 0
    %89 = vmatpush1.bf16.msra.mxu0 0
    %90 = vmatprep.subr.bf16.mxu0 0
    %91 = vmatpush1.bf16.msra.mxu0 0
    %92 = vmatprep.subr.bf16.mxu0 0
    %93 = vmatpush1.bf16.msra.mxu0 0
    %94 = vmatprep.subr.bf16.mxu0 0
    %95 = vmatpush1.bf16.msra.mxu0 0
    %96 = vmatprep.subr.bf16.mxu0 0
    %97 = vmatpush1.bf16.msra.mxu0 0
    %98 = vmatprep.subr.bf16.mxu0 0
    %99 = vmatpush1.bf16.msra.mxu0 0
    %100 = vmatprep.subr.bf16.mxu0 0
    %101 = vmatpush1.bf16.msra.mxu0 0
    %102 = vmatprep.subr.bf16.mxu0 0
    %103 = vmatpush1.bf16.msra.mxu0 0
    %104 = vmatprep.subr.bf16.mxu0 0
    %105 = vmatpush1.bf16.msra.mxu0 0
    %106 = vmatprep.subr.bf16.mxu0 0
    %107 = vmatpush1.bf16.msra.mxu0 0
    %108 = vmatprep.mubr.bf16.mxu0 0
    %109 = vmatmul.mubr.bf16.gmra.mrb[0].mxu0 %v74
    %v110 = vpop.f32.mrb[0].mxu0
    %v111 = vadd.f32 0.0, %v110
    %v112 = vpop.f32.mrb[0].mxu0
    %v113 = vpop.f32.mrb[0].mxu0
    %v114 = vpop.f32.mrb[0].mxu0
    %115 = vdwg.mxu0
    %v116 = vmul.f32 %v111, 0.04
    %v117 = vpack.c.bf16 %v116, %v116
    %v118 = vld [vmem:[%s2] sm:$0xf]
    %vm119 = vcmask 64512
    %v121 = vsel %vm119, %v117, 0
    %vm123 = vcmask 1043456
    %v125 = vsel %vm123, %v118, 0
    %127 = vmatprep.subr.bf16.mxu0 0
    %128 = vmatpush1.bf16.msra.mxu0 %v125
    %129 = vmatprep.subr.bf16.mxu0 0
    %130 = vmatpush1.bf16.msra.mxu0 0
    %131 = vmatprep.subr.bf16.mxu0 0
    %132 = vmatpush1.bf16.msra.mxu0 0
    %133 = vmatprep.subr.bf16.mxu0 0
    %134 = vmatpush1.bf16.msra.mxu0 0
    %135 = vmatprep.subr.bf16.mxu0 0
    %136 = vmatpush1.bf16.msra.mxu0 0
    %137 = vmatprep.subr.bf16.mxu0 0
    %138 = vmatpush1.bf16.msra.mxu0 0
    %139 = vmatprep.subr.bf16.mxu0 0
    %140 = vmatpush1.bf16.msra.mxu0 0
    %141 = vmatprep.subr.bf16.mxu0 0
    %142 = vmatpush1.bf16.msra.mxu0 0
    %143 = vmatprep.subr.bf16.mxu0 0
    %144 = vmatpush1.bf16.msra.mxu0 0
    %145 = vmatprep.subr.bf16.mxu0 0
    %146 = vmatpush1.bf16.msra.mxu0 0
    %147 = vmatprep.subr.bf16.mxu0 0
    %148 = vmatpush1.bf16.msra.mxu0 0
    %149 = vmatprep.subr.bf16.mxu0 0
    %150 = vmatpush1.bf16.msra.mxu0 0
    %151 = vmatprep.subr.bf16.mxu0 0
    %152 = vmatpush1.bf16.msra.mxu0 0
    %153 = vmatprep.subr.bf16.mxu0 0
    %154 = vmatpush1.bf16.msra.mxu0 0
    %155 = vmatprep.subr.bf16.mxu0 0
    %156 = vmatpush1.bf16.msra.mxu0 0
    %157 = vmatprep.subr.bf16.mxu0 0
    %158 = vmatpush1.bf16.msra.mxu0 0
    %159 = vmatprep.mubr.bf16.mxu0 0
    %160 = vmatmul.mubr.bf16.gmra.mrb[0].mxu0 %v121
    %v161 = vpop.f32.mrb[0].mxu0
    %v162 = vadd.f32 0.0, %v161
    %v163 = vpop.f32.mrb[0].mxu0
    %v164 = vpop.f32.mrb[0].mxu0
    %v165 = vpop.f32.mrb[0].mxu0
    %166 = vdwg.mxu0
    %v167 = vld [vmem:[%s0 + $0x20] sm:$0xf]
    %v168 = vld [vmem:[%s0 + $0x24] sm:$0xf]
    %v169 = vld [vmem:[%s0 + $0x28] sm:$0xf]
    %v170 = vld [vmem:[%s0 + $0x2c] sm:$0xf]
    %v171 = vld [vmem:[%s0 + $0x30] sm:$0xf]
    %v172 = vld [vmem:[%s0 + $0x34] sm:$0xf]
    %v173 = vld [vmem:[%s0 + $0x38] sm:$0xf]
    %v174 = vld [vmem:[%s0 + $0x3c] sm:$0xf]
    %v175 = vmax.bf16 %v167, 0
    %v176 = vmax.bf16 %v168, 0
    %v177 = vmax.bf16 %v169, 0
    %v178 = vmax.bf16 %v170, 0
    %v179 = vmax.bf16 %v171, 0
    %v180 = vmax.bf16 %v172, 0
    %v181 = vmax.bf16 %v173, 0
    %v182 = vmax.bf16 %v174, 0
    %v191 = vunpack.c.l.b16 %v175
    %v192 = vunpack.c.l.b16 %v176
    %v193 = vunpack.c.l.b16 %v177
    %v194 = vunpack.c.l.b16 %v178
    %v195 = vunpack.c.l.b16 %v179
    %v196 = vunpack.c.l.b16 %v180
    %v197 = vunpack.c.l.b16 %v181
    %v198 = vunpack.c.l.b16 %v182
    %v199 = vpack.c.b16 %v192, %v191
    %v200 = vpack.c.b16 %v194, %v193
    %v201 = vpack.c.b16 %v196, %v195
    %v202 = vpack.c.b16 %v198, %v197
    %207 = vmatprep.subr.bf16.mxu0 0
    %208 = vmatpush1.bf16.msra.mxu0 %v199
    %209 = vmatprep.subr.bf16.mxu0 0
    %210 = vmatpush1.bf16.msra.mxu0 %v200
    %211 = vmatprep.subr.bf16.mxu0 0
    %212 = vmatpush1.bf16.msra.mxu0 %v201
    %213 = vmatprep.subr.bf16.mxu0 0
    %214 = vmatpush1.bf16.msra.mxu0 %v202
    %215 = vmatprep.subr.bf16.mxu0 0
    %216 = vmatpush1.bf16.msra.mxu0 0
    %217 = vmatprep.subr.bf16.mxu0 0
    %218 = vmatpush1.bf16.msra.mxu0 0
    %219 = vmatprep.subr.bf16.mxu0 0
    %220 = vmatpush1.bf16.msra.mxu0 0
    %221 = vmatprep.subr.bf16.mxu0 0
    %222 = vmatpush1.bf16.msra.mxu0 0
    %223 = vmatprep.subr.bf16.mxu0 0
    %224 = vmatpush1.bf16.msra.mxu0 0
    %225 = vmatprep.subr.bf16.mxu0 0
    %226 = vmatpush1.bf16.msra.mxu0 0
    %227 = vmatprep.subr.bf16.mxu0 0
    %228 = vmatpush1.bf16.msra.mxu0 0
    %229 = vmatprep.subr.bf16.mxu0 0
    %230 = vmatpush1.bf16.msra.mxu0 0
    %231 = vmatprep.subr.bf16.mxu0 0
    %232 = vmatpush1.bf16.msra.mxu0 0
    %233 = vmatprep.subr.bf16.mxu0 0
    %234 = vmatpush1.bf16.msra.mxu0 0
    %235 = vmatprep.subr.bf16.mxu0 0
    %236 = vmatpush1.bf16.msra.mxu0 0
    %237 = vmatprep.subr.bf16.mxu0 0
    %238 = vmatpush1.bf16.msra.mxu0 0
    %239 = vmatprep.mubr.bf16.mxu0 0
    %240 = vmatmul.mubr.bf16.gmra.mrb[0].mxu0 %v74
    %v241 = vpop.f32.mrb[0].mxu0
    %v242 = vadd.f32 0.0, %v241
    %v243 = vpop.f32.mrb[0].mxu0
    %v244 = vpop.f32.mrb[0].mxu0
    %v245 = vpop.f32.mrb[0].mxu0
    %246 = vdwg.mxu0
    %v247 = vmul.f32 %v242, 0.04
    %v248 = vpack.c.bf16 %v247, %v247
    %v250 = vsel %vm119, %v248, 0
    %252 = vmatprep.subr.bf16.mxu0 0
    %253 = vmatpush1.bf16.msra.mxu0 %v125
    %254 = vmatprep.subr.bf16.mxu0 0
    %255 = vmatpush1.bf16.msra.mxu0 0
    %256 = vmatprep.subr.bf16.mxu0 0
    %257 = vmatpush1.bf16.msra.mxu0 0
    %258 = vmatprep.subr.bf16.mxu0 0
    %259 = vmatpush1.bf16.msra.mxu0 0
    %260 = vmatprep.subr.bf16.mxu0 0
    %261 = vmatpush1.bf16.msra.mxu0 0
    %262 = vmatprep.subr.bf16.mxu0 0
    %263 = vmatpush1.bf16.msra.mxu0 0
    %264 = vmatprep.subr.bf16.mxu0 0
    %265 = vmatpush1.bf16.msra.mxu0 0
    %266 = vmatprep.subr.bf16.mxu0 0
    %267 = vmatpush1.bf16.msra.mxu0 0
    %268 = vmatprep.subr.bf16.mxu0 0
    %269 = vmatpush1.bf16.msra.mxu0 0
    %270 = vmatprep.subr.bf16.mxu0 0
    %271 = vmatpush1.bf16.msra.mxu0 0
    %272 = vmatprep.subr.bf16.mxu0 0
    %273 = vmatpush1.bf16.msra.mxu0 0
    %274 = vmatprep.subr.bf16.mxu0 0
    %275 = vmatpush1.bf16.msra.mxu0 0
    %276 = vmatprep.subr.bf16.mxu0 0
    %277 = vmatpush1.bf16.msra.mxu0 0
    %278 = vmatprep.subr.bf16.mxu0 0
    %279 = vmatpush1.bf16.msra.mxu0 0
    %280 = vmatprep.subr.bf16.mxu0 0
    %281 = vmatpush1.bf16.msra.mxu0 0
    %282 = vmatprep.subr.bf16.mxu0 0
    %283 = vmatpush1.bf16.msra.mxu0 0
    %284 = vmatprep.mubr.bf16.mxu0 0
    %285 = vmatmul.mubr.bf16.gmra.mrb[0].mxu0 %v250
    %v286 = vpop.f32.mrb[0].mxu0
    %v287 = vadd.f32 0.0, %v286
    %v288 = vpop.f32.mrb[0].mxu0
    %v289 = vpop.f32.mrb[0].mxu0
    %v290 = vpop.f32.mrb[0].mxu0
    %291 = vdwg.mxu0
    %v293 = vrot.slane %v287, 4
    %v295 = vsel %vm123, %v162, %v293
    %v296 = vrot.slane %v295, 4
    %v297 = vadd.f32 %v295, %v296
    %v298 = vrot.slane %v297, 2
    %v299 = vadd.f32 %v297, %v298
    %v300 = vrot.slane %v299, 1
    %v301 = vadd.f32 %v299, %v300
    %v302 = vrcp.pop 8.0
    %v303 = vmul.f32 %v301, %v302
    %v304 = vsub.f32 %v295, %v303
    %v305 = vmul.f32 %v304, %v304
    %v306 = vrot.slane %v305, 4
    %v307 = vadd.f32 %v305, %v306
    %v308 = vrot.slane %v307, 2
    %v309 = vadd.f32 %v307, %v308
    %v310 = vrot.slane %v309, 1
    %v311 = vadd.f32 %v309, %v310
    %v312 = vmul.f32 %v311, %v302
    %v313 = vadd.f32 %v312, 1e-05
    %v314 = vrsqrt.pop %v313
    %v315 = vmul.f32 %v304, %v314
    %v316 = vld [vmem:[%s3] sm:$0x1]
    %v318 = vlaneseq
    %v319 = vshrl.u32 %v318, 7
    %v320 = vsub.s32 0, %v319
    %v321 = vrot.slane %v316, %v320
    %v323 = vmul.f32 %v315, %v321
    %v324 = vld [vmem:[%s4] sm:$0x1]
    %v326 = vlaneseq
    %v327 = vshrl.u32 %v326, 7
    %v328 = vsub.s32 0, %v327
    %v329 = vrot.slane %v324, %v328
    %v331 = vadd.f32 %v323, %v329
    %v332 = vmax.f32 %v331, 0.0
    %v334 = vunpack.c.l.s4 1935823168
    %v335 = vunpack.c.0.s8 %v334
    %v336 = vlaneseq
    %v337 = vshrl.u32 %v336, 7
    %v338 = vsub.s32 %v335, %v337
    %v339 = vrot.slane %v332, %v338
    %v341 = vcombine.high %v339, %v339
    %v343 = vunpack.c.l.s4 1983009808
    %v344 = vunpack.c.0.s8 %v343
    %v345 = vlaneseq
    %v346 = vshrl.u32 %v345, 7
    %v347 = vsub.s32 %v344, %v346
    %v348 = vrot.slane %v339, %v347
    %v350 = vunpack.c.l.s4 1983009808
    %v351 = vunpack.c.0.s8 %v350
    %v352 = vlaneseq
    %v353 = vshrl.u32 %v352, 7
    %v354 = vsub.s32 %v351, %v353
    %v355 = vrot.slane %v341, %v354
    %v356 = vcombine.high %v348, %v348
    %v357 = vcombine.high %v355, %v355
    %v362 = vpack.c.bf16 %v348, %v348
    %v363 = vpack.c.bf16 %v356, %v356
    %v364 = vpack.c.bf16 %v355, %v355
    %v365 = vpack.c.bf16 %v357, %v357
    %v366 = vld [vmem:[%s5] sm:$0xff]
    %v367 = vld [vmem:[%s5 + $0x8] sm:$0xff]
    %v368 = vld [vmem:[%s5 + $0x10] sm:$0xff]
    %v369 = vld [vmem:[%s5 + $0x18] sm:$0xff]
    %v370 = vld [vmem:[%s5 + $0x20] sm:$0xff]
    %v371 = vld [vmem:[%s5 + $0x28] sm:$0xff]
    %v372 = vld [vmem:[%s5 + $0x30] sm:$0xff]
    %v373 = vld [vmem:[%s5 + $0x38] sm:$0xff]
    %v374 = vld [vmem:[%s5 + $0x40] sm:$0xff]
    %v375 = vld [vmem:[%s5 + $0x48] sm:$0xff]
    %v376 = vld [vmem:[%s5 + $0x50] sm:$0xff]
    %v377 = vld [vmem:[%s5 + $0x58] sm:$0xff]
    %v378 = vld [vmem:[%s5 + $0x60] sm:$0xff]
    %v379 = vld [vmem:[%s5 + $0x68] sm:$0xff]
    %v380 = vld [vmem:[%s5 + $0x70] sm:$0xff]
    %v381 = vld [vmem:[%s5 + $0x78] sm:$0xff]
    %v382 = vld [vmem:[%s5 + $0x80] sm:$0xff]
    %v383 = vld [vmem:[%s5 + $0x88] sm:$0xff]
    %v384 = vld [vmem:[%s5 + $0x90] sm:$0xff]
    %v385 = vld [vmem:[%s5 + $0x98] sm:$0xff]
    %v386 = vld [vmem:[%s5 + $0xa0] sm:$0xff]
    %v387 = vld [vmem:[%s5 + $0xa8] sm:$0xff]
    %v388 = vld [vmem:[%s5 + $0xb0] sm:$0xff]
    %v389 = vld [vmem:[%s5 + $0xb8] sm:$0xff]
    %v390 = vld [vmem:[%s5 + $0xc0] sm:$0xff]
    %v391 = vld [vmem:[%s5 + $0xc8] sm:$0xff]
    %v392 = vld [vmem:[%s5 + $0xd0] sm:$0xff]
    %v393 = vld [vmem:[%s5 + $0xd8] sm:$0xff]
    %v394 = vld [vmem:[%s5 + $0xe0] sm:$0xff]
    %v395 = vld [vmem:[%s5 + $0xe8] sm:$0xff]
    %v396 = vld [vmem:[%s5 + $0xf0] sm:$0xff]
    %v397 = vld [vmem:[%s5 + $0xf8] sm:$0xff]
    %v398 = vld [vmem:[%s5 + $0x100] sm:$0xff]
    %v399 = vld [vmem:[%s5 + $0x108] sm:$0xff]
    %v400 = vld [vmem:[%s5 + $0x110] sm:$0xff]
    %v401 = vld [vmem:[%s5 + $0x118] sm:$0xff]
    %v402 = vld [vmem:[%s5 + $0x120] sm:$0xff]
    %v403 = vld [vmem:[%s5 + $0x128] sm:$0xff]
    %v404 = vld [vmem:[%s5 + $0x130] sm:$0xff]
    %v405 = vld [vmem:[%s5 + $0x138] sm:$0xff]
    %v406 = vld [vmem:[%s5 + $0x140] sm:$0xff]
    %v407 = vld [vmem:[%s5 + $0x148] sm:$0xff]
    %v408 = vld [vmem:[%s5 + $0x150] sm:$0xff]
    %v409 = vld [vmem:[%s5 + $0x158] sm:$0xff]
    %v410 = vld [vmem:[%s5 + $0x160] sm:$0xff]
    %v411 = vld [vmem:[%s5 + $0x168] sm:$0xff]
    %v412 = vld [vmem:[%s5 + $0x170] sm:$0xff]
    %v413 = vld [vmem:[%s5 + $0x178] sm:$0xff]
    %v414 = vld [vmem:[%s5 + $0x180] sm:$0xff]
    %v415 = vld [vmem:[%s5 + $0x188] sm:$0xff]
    %v416 = vld [vmem:[%s5 + $0x190] sm:$0xff]
    %v417 = vld [vmem:[%s5 + $0x198] sm:$0xff]
    %v418 = vld [vmem:[%s5 + $0x1a0] sm:$0xff]
    %v419 = vld [vmem:[%s5 + $0x1a8] sm:$0xff]
    %v420 = vld [vmem:[%s5 + $0x1b0] sm:$0xff]
    %v421 = vld [vmem:[%s5 + $0x1b8] sm:$0xff]
    %v422 = vld [vmem:[%s5 + $0x1c0] sm:$0xff]
    %v423 = vld [vmem:[%s5 + $0x1c8] sm:$0xff]
    %v424 = vld [vmem:[%s5 + $0x1d0] sm:$0xff]
    %v425 = vld [vmem:[%s5 + $0x1d8] sm:$0xff]
    %v426 = vld [vmem:[%s5 + $0x1e0] sm:$0xff]
    %v427 = vld [vmem:[%s5 + $0x1e8] sm:$0xff]
    %v428 = vld [vmem:[%s5 + $0x1f0] sm:$0xff]
    %v429 = vld [vmem:[%s5 + $0x1f8] sm:$0xff]
    %v430 = vld [vmem:[%s5 + $0x200] sm:$0xff]
    %v431 = vld [vmem:[%s5 + $0x208] sm:$0xff]
    %v432 = vld [vmem:[%s5 + $0x210] sm:$0xff]
    %v433 = vld [vmem:[%s5 + $0x218] sm:$0xff]
    %v434 = vld [vmem:[%s5 + $0x220] sm:$0xff]
    %v435 = vld [vmem:[%s5 + $0x228] sm:$0xff]
    %v436 = vld [vmem:[%s5 + $0x230] sm:$0xff]
    %v437 = vld [vmem:[%s5 + $0x238] sm:$0xff]
    %v438 = vld [vmem:[%s5 + $0x240] sm:$0xff]
    %v439 = vld [vmem:[%s5 + $0x248] sm:$0xff]
    %v440 = vld [vmem:[%s5 + $0x250] sm:$0xff]
    %v441 = vld [vmem:[%s5 + $0x258] sm:$0xff]
    %v442 = vld [vmem:[%s5 + $0x260] sm:$0xff]
    %v443 = vld [vmem:[%s5 + $0x268] sm:$0xff]
    %v444 = vld [vmem:[%s5 + $0x270] sm:$0xff]
    %v445 = vld [vmem:[%s5 + $0x278] sm:$0xff]
    %v446 = vld [vmem:[%s5 + $0x280] sm:$0xff]
    %v447 = vld [vmem:[%s5 + $0x288] sm:$0xff]
    %v448 = vld [vmem:[%s5 + $0x290] sm:$0xff]
    %v449 = vld [vmem:[%s5 + $0x298] sm:$0xff]
    %v450 = vld [vmem:[%s5 + $0x2a0] sm:$0xff]
    %v451 = vld [vmem:[%s5 + $0x2a8] sm:$0xff]
    %v452 = vld [vmem:[%s5 + $0x2b0] sm:$0xff]
    %v453 = vld [vmem:[%s5 + $0x2b8] sm:$0xff]
    %v454 = vld [vmem:[%s5 + $0x2c0] sm:$0xff]
    %v455 = vld [vmem:[%s5 + $0x2c8] sm:$0xff]
    %v456 = vld [vmem:[%s5 + $0x2d0] sm:$0xff]
    %v457 = vld [vmem:[%s5 + $0x2d8] sm:$0xff]
    %v458 = vld [vmem:[%s5 + $0x2e0] sm:$0xff]
    %v459 = vld [vmem:[%s5 + $0x2e8] sm:$0xff]
    %v460 = vld [vmem:[%s5 + $0x2f0] sm:$0xff]
    %v461 = vld [vmem:[%s5 + $0x2f8] sm:$0xff]
    %v462 = vld [vmem:[%s5 + $0x300] sm:$0xff]
    %v463 = vld [vmem:[%s5 + $0x308] sm:$0xff]
    %v464 = vld [vmem:[%s5 + $0x310] sm:$0xff]
    %v465 = vld [vmem:[%s5 + $0x318] sm:$0xff]
    %v466 = vld [vmem:[%s5 + $0x320] sm:$0xff]
    %v467 = vld [vmem:[%s5 + $0x328] sm:$0xff]
    %v468 = vld [vmem:[%s5 + $0x330] sm:$0xff]
    %v469 = vld [vmem:[%s5 + $0x338] sm:$0xff]
    %v470 = vld [vmem:[%s5 + $0x340] sm:$0xff]
    %v471 = vld [vmem:[%s5 + $0x348] sm:$0xff]
    %v472 = vld [vmem:[%s5 + $0x350] sm:$0xff]
    %v473 = vld [vmem:[%s5 + $0x358] sm:$0xff]
    %v474 = vld [vmem:[%s5 + $0x360] sm:$0xff]
    %v475 = vld [vmem:[%s5 + $0x368] sm:$0xff]
    %v476 = vld [vmem:[%s5 + $0x370] sm:$0xff]
    %v477 = vld [vmem:[%s5 + $0x378] sm:$0xff]
    %v478 = vld [vmem:[%s5 + $0x380] sm:$0xff]
    %v479 = vld [vmem:[%s5 + $0x388] sm:$0xff]
    %v480 = vld [vmem:[%s5 + $0x390] sm:$0xff]
    %v481 = vld [vmem:[%s5 + $0x398] sm:$0xff]
    %v482 = vld [vmem:[%s5 + $0x3a0] sm:$0xff]
    %v483 = vld [vmem:[%s5 + $0x3a8] sm:$0xff]
    %v484 = vld [vmem:[%s5 + $0x3b0] sm:$0xff]
    %v485 = vld [vmem:[%s5 + $0x3b8] sm:$0xff]
    %v486 = vld [vmem:[%s5 + $0x3c0] sm:$0xff]
    %v487 = vld [vmem:[%s5 + $0x3c8] sm:$0xff]
    %v488 = vld [vmem:[%s5 + $0x3d0] sm:$0xff]
    %v489 = vld [vmem:[%s5 + $0x3d8] sm:$0xff]
    %v490 = vld [vmem:[%s5 + $0x3e0] sm:$0xff]
    %v491 = vld [vmem:[%s5 + $0x3e8] sm:$0xff]
    %v492 = vld [vmem:[%s5 + $0x3f0] sm:$0xff]
    %v493 = vld [vmem:[%s5 + $0x3f8] sm:$0xff]
    %v494 = vld [vmem:[%s5 + $0x400] sm:$0xff]
    %v495 = vld [vmem:[%s5 + $0x408] sm:$0xff]
    %v496 = vld [vmem:[%s5 + $0x410] sm:$0xff]
    %v497 = vld [vmem:[%s5 + $0x418] sm:$0xff]
    %v498 = vld [vmem:[%s5 + $0x420] sm:$0xff]
    %v499 = vld [vmem:[%s5 + $0x428] sm:$0xff]
    %v500 = vld [vmem:[%s5 + $0x430] sm:$0xff]
    %v501 = vld [vmem:[%s5 + $0x438] sm:$0xff]
    %v502 = vld [vmem:[%s5 + $0x440] sm:$0xff]
    %v503 = vld [vmem:[%s5 + $0x448] sm:$0xff]
    %v504 = vld [vmem:[%s5 + $0x450] sm:$0xff]
    %v505 = vld [vmem:[%s5 + $0x458] sm:$0xff]
    %v506 = vld [vmem:[%s5 + $0x460] sm:$0xff]
    %v507 = vld [vmem:[%s5 + $0x468] sm:$0xff]
    %v508 = vld [vmem:[%s5 + $0x470] sm:$0xff]
    %v509 = vld [vmem:[%s5 + $0x478] sm:$0xff]
    %v510 = vld [vmem:[%s5 + $0x480] sm:$0xff]
    %v511 = vld [vmem:[%s5 + $0x488] sm:$0xff]
    %v512 = vld [vmem:[%s5 + $0x490] sm:$0xff]
    %v513 = vld [vmem:[%s5 + $0x498] sm:$0xff]
    %v514 = vld [vmem:[%s5 + $0x4a0] sm:$0xff]
    %v515 = vld [vmem:[%s5 + $0x4a8] sm:$0xff]
    %v516 = vld [vmem:[%s5 + $0x4b0] sm:$0xff]
    %v517 = vld [vmem:[%s5 + $0x4b8] sm:$0xff]
    %v518 = vld [vmem:[%s5 + $0x4c0] sm:$0xff]
    %v519 = vld [vmem:[%s5 + $0x4c8] sm:$0xff]
    %v520 = vld [vmem:[%s5 + $0x4d0] sm:$0xff]
    %v521 = vld [vmem:[%s5 + $0x4d8] sm:$0xff]
    %v522 = vld [vmem:[%s5 + $0x4e0] sm:$0xff]
    %v523 = vld [vmem:[%s5 + $0x4e8] sm:$0xff]
    %v524 = vld [vmem:[%s5 + $0x4f0] sm:$0xff]
    %v525 = vld [vmem:[%s5 + $0x4f8] sm:$0xff]
    %v526 = vld [vmem:[%s5 + $0x500] sm:$0xff]
    %v527 = vld [vmem:[%s5 + $0x508] sm:$0xff]
    %v528 = vld [vmem:[%s5 + $0x510] sm:$0xff]
    %v529 = vld [vmem:[%s5 + $0x518] sm:$0xff]
    %v530 = vld [vmem:[%s5 + $0x520] sm:$0xff]
    %v531 = vld [vmem:[%s5 + $0x528] sm:$0xff]
    %v532 = vld [vmem:[%s5 + $0x530] sm:$0xff]
    %v533 = vld [vmem:[%s5 + $0x538] sm:$0xff]
    %v534 = vld [vmem:[%s5 + $0x540] sm:$0xff]
    %v535 = vld [vmem:[%s5 + $0x548] sm:$0xff]
    %v536 = vld [vmem:[%s5 + $0x550] sm:$0xff]
    %v537 = vld [vmem:[%s5 + $0x558] sm:$0xff]
    %v538 = vld [vmem:[%s5 + $0x560] sm:$0xff]
    %v539 = vld [vmem:[%s5 + $0x568] sm:$0xff]
    %v540 = vld [vmem:[%s5 + $0x570] sm:$0xff]
    %v541 = vld [vmem:[%s5 + $0x578] sm:$0xff]
    %v542 = vld [vmem:[%s5 + $0x580] sm:$0xff]
    %v543 = vld [vmem:[%s5 + $0x588] sm:$0xff]
    %v544 = vld [vmem:[%s5 + $0x590] sm:$0xff]
    %v545 = vld [vmem:[%s5 + $0x598] sm:$0xff]
    %v546 = vld [vmem:[%s5 + $0x5a0] sm:$0xff]
    %v547 = vld [vmem:[%s5 + $0x5a8] sm:$0xff]
    %v548 = vld [vmem:[%s5 + $0x5b0] sm:$0xff]
    %v549 = vld [vmem:[%s5 + $0x5b8] sm:$0xff]
    %v550 = vld [vmem:[%s5 + $0x5c0] sm:$0xff]
    %v551 = vld [vmem:[%s5 + $0x5c8] sm:$0xff]
    %v552 = vld [vmem:[%s5 + $0x5d0] sm:$0xff]
    %v553 = vld [vmem:[%s5 + $0x5d8] sm:$0xff]
    %v554 = vld [vmem:[%s5 + $0x5e0] sm:$0xff]
    %v555 = vld [vmem:[%s5 + $0x5e8] sm:$0xff]
    %v556 = vld [vmem:[%s5 + $0x5f0] sm:$0xff]
    %v557 = vld [vmem:[%s5 + $0x5f8] sm:$0xff]
    %v750 = vunpack.c.l.b16 %v366
    %v751 = vunpack.c.h.b16 %v366
    %v752 = vunpack.c.l.b16 %v367
    %v753 = vunpack.c.h.b16 %v367
    %v754 = vunpack.c.l.b16 %v368
    %v755 = vunpack.c.h.b16 %v368
    %v756 = vunpack.c.l.b16 %v369
    %v757 = vunpack.c.h.b16 %v369
    %v758 = vunpack.c.l.b16 %v370
    %v759 = vunpack.c.h.b16 %v370
    %v760 = vunpack.c.l.b16 %v371
    %v761 = vunpack.c.h.b16 %v371
    %v762 = vunpack.c.l.b16 %v372
    %v763 = vunpack.c.h.b16 %v372
    %v764 = vunpack.c.l.b16 %v373
    %v765 = vunpack.c.h.b16 %v373
    %v766 = vunpack.c.l.b16 %v374
    %v767 = vunpack.c.h.b16 %v374
    %v768 = vunpack.c.l.b16 %v375
    %v769 = vunpack.c.h.b16 %v375
    %v770 = vunpack.c.l.b16 %v376
    %v771 = vunpack.c.h.b16 %v376
    %v772 = vunpack.c.l.b16 %v377
    %v773 = vunpack.c.h.b16 %v377
    %v774 = vunpack.c.l.b16 %v378
    %v775 = vunpack.c.h.b16 %v378
    %v776 = vunpack.c.l.b16 %v379
    %v777 = vunpack.c.h.b16 %v379
    %v778 = vunpack.c.l.b16 %v380
    %v779 = vunpack.c.h.b16 %v380
    %v780 = vunpack.c.l.b16 %v381
    %v781 = vunpack.c.h.b16 %v381
    %v782 = vunpack.c.l.b16 %v382
    %v783 = vunpack.c.h.b16 %v382
    %v784 = vunpack.c.l.b16 %v383
    %v785 = vunpack.c.h.b16 %v383
    %v786 = vunpack.c.l.b16 %v384
    %v787 = vunpack.c.h.b16 %v384
    %v788 = vunpack.c.l.b16 %v385
    %v789 = vunpack.c.h.b16 %v385
    %v790 = vunpack.c.l.b16 %v386
    %v791 = vunpack.c.h.b16 %v386
    %v792 = vunpack.c.l.b16 %v387
    %v793 = vunpack.c.h.b16 %v387
    %v794 = vunpack.c.l.b16 %v388
    %v795 = vunpack.c.h.b16 %v388
    %v796 = vunpack.c.l.b16 %v389
    %v797 = vunpack.c.h.b16 %v389
    %v798 = vunpack.c.l.b16 %v390
    %v799 = vunpack.c.h.b16 %v390
    %v800 = vunpack.c.l.b16 %v391
    %v801 = vunpack.c.h.b16 %v391
    %v802 = vunpack.c.l.b16 %v392
    %v803 = vunpack.c.h.b16 %v392
    %v804 = vunpack.c.l.b16 %v393
    %v805 = vunpack.c.h.b16 %v393
    %v806 = vunpack.c.l.b16 %v394
    %v807 = vunpack.c.h.b16 %v394
    %v808 = vunpack.c.l.b16 %v395
    %v809 = vunpack.c.h.b16 %v395
    %v810 = vunpack.c.l.b16 %v396
    %v811 = vunpack.c.h.b16 %v396
    %v812 = vunpack.c.l.b16 %v397
    %v813 = vunpack.c.h.b16 %v397
    %v814 = vunpack.c.l.b16 %v398
    %v815 = vunpack.c.h.b16 %v398
    %v816 = vunpack.c.l.b16 %v399
    %v817 = vunpack.c.h.b16 %v399
    %v818 = vunpack.c.l.b16 %v400
    %v819 = vunpack.c.h.b16 %v400
    %v820 = vunpack.c.l.b16 %v401
    %v821 = vunpack.c.h.b16 %v401
    %v822 = vunpack.c.l.b16 %v402
    %v823 = vunpack.c.h.b16 %v402
    %v824 = vunpack.c.l.b16 %v403
    %v825 = vunpack.c.h.b16 %v403
    %v826 = vunpack.c.l.b16 %v404
    %v827 = vunpack.c.h.b16 %v404
    %v828 = vunpack.c.l.b16 %v405
    %v829 = vunpack.c.h.b16 %v405
    %v830 = vunpack.c.l.b16 %v406
    %v831 = vunpack.c.h.b16 %v406
    %v832 = vunpack.c.l.b16 %v407
    %v833 = vunpack.c.h.b16 %v407
    %v834 = vunpack.c.l.b16 %v408
    %v835 = vunpack.c.h.b16 %v408
    %v836 = vunpack.c.l.b16 %v409
    %v837 = vunpack.c.h.b16 %v409
    %v838 = vunpack.c.l.b16 %v410
    %v839 = vunpack.c.h.b16 %v410
    %v840 = vunpack.c.l.b16 %v411
    %v841 = vunpack.c.h.b16 %v411
    %v842 = vunpack.c.l.b16 %v412
    %v843 = vunpack.c.h.b16 %v412
    %v844 = vunpack.c.l.b16 %v413
    %v845 = vunpack.c.h.b16 %v413
    %v846 = vunpack.c.l.b16 %v414
    %v847 = vunpack.c.h.b16 %v414
    %v848 = vunpack.c.l.b16 %v415
    %v849 = vunpack.c.h.b16 %v415
    %v850 = vunpack.c.l.b16 %v416
    %v851 = vunpack.c.h.b16 %v416
    %v852 = vunpack.c.l.b16 %v417
    %v853 = vunpack.c.h.b16 %v417
    %v854 = vunpack.c.l.b16 %v418
    %v855 = vunpack.c.h.b16 %v418
    %v856 = vunpack.c.l.b16 %v419
    %v857 = vunpack.c.h.b16 %v419
    %v858 = vunpack.c.l.b16 %v420
    %v859 = vunpack.c.h.b16 %v420
    %v860 = vunpack.c.l.b16 %v421
    %v861 = vunpack.c.h.b16 %v421
    %v862 = vunpack.c.l.b16 %v422
    %v863 = vunpack.c.h.b16 %v422
    %v864 = vunpack.c.l.b16 %v423
    %v865 = vunpack.c.h.b16 %v423
    %v866 = vunpack.c.l.b16 %v424
    %v867 = vunpack.c.h.b16 %v424
    %v868 = vunpack.c.l.b16 %v425
    %v869 = vunpack.c.h.b16 %v425
    %v870 = vunpack.c.l.b16 %v426
    %v871 = vunpack.c.h.b16 %v426
    %v872 = vunpack.c.l.b16 %v427
    %v873 = vunpack.c.h.b16 %v427
    %v874 = vunpack.c.l.b16 %v428
    %v875 = vunpack.c.h.b16 %v428
    %v876 = vunpack.c.l.b16 %v429
    %v877 = vunpack.c.h.b16 %v429
    %v878 = vunpack.c.l.b16 %v430
    %v879 = vunpack.c.h.b16 %v430
    %v880 = vunpack.c.l.b16 %v431
    %v881 = vunpack.c.h.b16 %v431
    %v882 = vunpack.c.l.b16 %v432
    %v883 = vunpack.c.h.b16 %v432
    %v884 = vunpack.c.l.b16 %v433
    %v885 = vunpack.c.h.b16 %v433
    %v886 = vunpack.c.l.b16 %v434
    %v887 = vunpack.c.h.b16 %v434
    %v888 = vunpack.c.l.b16 %v435
    %v889 = vunpack.c.h.b16 %v435
    %v890 = vunpack.c.l.b16 %v436
    %v891 = vunpack.c.h.b16 %v436
    %v892 = vunpack.c.l.b16 %v437
    %v893 = vunpack.c.h.b16 %v437
    %v894 = vunpack.c.l.b16 %v438
    %v895 = vunpack.c.h.b16 %v438
    %v896 = vunpack.c.l.b16 %v439
    %v897 = vunpack.c.h.b16 %v439
    %v898 = vunpack.c.l.b16 %v440
    %v899 = vunpack.c.h.b16 %v440
    %v900 = vunpack.c.l.b16 %v441
    %v901 = vunpack.c.h.b16 %v441
    %v902 = vunpack.c.l.b16 %v442
    %v903 = vunpack.c.h.b16 %v442
    %v904 = vunpack.c.l.b16 %v443
    %v905 = vunpack.c.h.b16 %v443
    %v906 = vunpack.c.l.b16 %v444
    %v907 = vunpack.c.h.b16 %v444
    %v908 = vunpack.c.l.b16 %v445
    %v909 = vunpack.c.h.b16 %v445
    %v910 = vunpack.c.l.b16 %v446
    %v911 = vunpack.c.h.b16 %v446
    %v912 = vunpack.c.l.b16 %v447
    %v913 = vunpack.c.h.b16 %v447
    %v914 = vunpack.c.l.b16 %v448
    %v915 = vunpack.c.h.b16 %v448
    %v916 = vunpack.c.l.b16 %v449
    %v917 = vunpack.c.h.b16 %v449
    %v918 = vunpack.c.l.b16 %v450
    %v919 = vunpack.c.h.b16 %v450
    %v920 = vunpack.c.l.b16 %v451
    %v921 = vunpack.c.h.b16 %v451
    %v922 = vunpack.c.l.b16 %v452
    %v923 = vunpack.c.h.b16 %v452
    %v924 = vunpack.c.l.b16 %v453
    %v925 = vunpack.c.h.b16 %v453
    %v926 = vunpack.c.l.b16 %v454
    %v927 = vunpack.c.h.b16 %v454
    %v928 = vunpack.c.l.b16 %v455
    %v929 = vunpack.c.h.b16 %v455
    %v930 = vunpack.c.l.b16 %v456
    %v931 = vunpack.c.h.b16 %v456
    %v932 = vunpack.c.l.b16 %v457
    %v933 = vunpack.c.h.b16 %v457
    %v934 = vunpack.c.l.b16 %v458
    %v935 = vunpack.c.h.b16 %v458
    %v936 = vunpack.c.l.b16 %v459
    %v937 = vunpack.c.h.b16 %v459
    %v938 = vunpack.c.l.b16 %v460
    %v939 = vunpack.c.h.b16 %v460
    %v940 = vunpack.c.l.b16 %v461
    %v941 = vunpack.c.h.b16 %v461
    %v942 = vunpack.c.l.b16 %v462
    %v943 = vunpack.c.h.b16 %v462
    %v944 = vunpack.c.l.b16 %v463
    %v945 = vunpack.c.h.b16 %v463
    %v946 = vunpack.c.l.b16 %v464
    %v947 = vunpack.c.h.b16 %v464
    %v948 = vunpack.c.l.b16 %v465
    %v949 = vunpack.c.h.b16 %v465
    %v950 = vunpack.c.l.b16 %v466
    %v951 = vunpack.c.h.b16 %v466
    %v952 = vunpack.c.l.b16 %v467
    %v953 = vunpack.c.h.b16 %v467
    %v954 = vunpack.c.l.b16 %v468
    %v955 = vunpack.c.h.b16 %v468
    %v956 = vunpack.c.l.b16 %v469
    %v957 = vunpack.c.h.b16 %v469
    %v958 = vunpack.c.l.b16 %v470
    %v959 = vunpack.c.h.b16 %v470
    %v960 = vunpack.c.l.b16 %v471
    %v961 = vunpack.c.h.b16 %v471
    %v962 = vunpack.c.l.b16 %v472
    %v963 = vunpack.c.h.b16 %v472
    %v964 = vunpack.c.l.b16 %v473
    %v965 = vunpack.c.h.b16 %v473
    %v966 = vunpack.c.l.b16 %v474
    %v967 = vunpack.c.h.b16 %v474
    %v968 = vunpack.c.l.b16 %v475
    %v969 = vunpack.c.h.b16 %v475
    %v970 = vunpack.c.l.b16 %v476
    %v971 = vunpack.c.h.b16 %v476
    %v972 = vunpack.c.l.b16 %v477
    %v973 = vunpack.c.h.b16 %v477
    %v974 = vunpack.c.l.b16 %v478
    %v975 = vunpack.c.h.b16 %v478
    %v976 = vunpack.c.l.b16 %v479
    %v977 = vunpack.c.h.b16 %v479
    %v978 = vunpack.c.l.b16 %v480
    %v979 = vunpack.c.h.b16 %v480
    %v980 = vunpack.c.l.b16 %v481
    %v981 = vunpack.c.h.b16 %v481
    %v982 = vunpack.c.l.b16 %v482
    %v983 = vunpack.c.h.b16 %v482
    %v984 = vunpack.c.l.b16 %v483
    %v985 = vunpack.c.h.b16 %v483
    %v986 = vunpack.c.l.b16 %v484
    %v987 = vunpack.c.h.b16 %v484
    %v988 = vunpack.c.l.b16 %v485
    %v989 = vunpack.c.h.b16 %v485
    %v990 = vunpack.c.l.b16 %v486
    %v991 = vunpack.c.h.b16 %v486
    %v992 = vunpack.c.l.b16 %v487
    %v993 = vunpack.c.h.b16 %v487
    %v994 = vunpack.c.l.b16 %v488
    %v995 = vunpack.c.h.b16 %v488
    %v996 = vunpack.c.l.b16 %v489
    %v997 = vunpack.c.h.b16 %v489
    %v998 = vunpack.c.l.b16 %v490
    %v999 = vunpack.c.h.b16 %v490
    %v1000 = vunpack.c.l.b16 %v491
    %v1001 = vunpack.c.h.b16 %v491
    %v1002 = vunpack.c.l.b16 %v492
    %v1003 = vunpack.c.h.b16 %v492
    %v1004 = vunpack.c.l.b16 %v493
    %v1005 = vunpack.c.h.b16 %v493
    %v1006 = vunpack.c.l.b16 %v494
    %v1007 = vunpack.c.h.b16 %v494
    %v1008 = vunpack.c.l.b16 %v495
    %v1009 = vunpack.c.h.b16 %v495
    %v1010 = vunpack.c.l.b16 %v496
    %v1011 = vunpack.c.h.b16 %v496
    %v1012 = vunpack.c.l.b16 %v497
    %v1013 = vunpack.c.h.b16 %v497
    %v1014 = vunpack.c.l.b16 %v498
    %v1015 = vunpack.c.h.b16 %v498
    %v1016 = vunpack.c.l.b16 %v499
    %v1017 = vunpack.c.h.b16 %v499
    %v1018 = vunpack.c.l.b16 %v500
    %v1019 = vunpack.c.h.b16 %v500
    %v1020 = vunpack.c.l.b16 %v501
    %v1021 = vunpack.c.h.b16 %v501
    %v1022 = vunpack.c.l.b16 %v502
    %v1023 = vunpack.c.h.b16 %v502
    %v1024 = vunpack.c.l.b16 %v503
    %v1025 = vunpack.c.h.b16 %v503
    %v1026 = vunpack.c.l.b16 %v504
    %v1027 = vunpack.c.h.b16 %v504
    %v1028 = vunpack.c.l.b16 %v505
    %v1029 = vunpack.c.h.b16 %v505
    %v1030 = vunpack.c.l.b16 %v506
    %v1031 = vunpack.c.h.b16 %v506
    %v1032 = vunpack.c.l.b16 %v507
    %v1033 = vunpack.c.h.b16 %v507
    %v1034 = vunpack.c.l.b16 %v508
    %v1035 = vunpack.c.h.b16 %v508
    %v1036 = vunpack.c.l.b16 %v509
    %v1037 = vunpack.c.h.b16 %v509
    %v1038 = vunpack.c.l.b16 %v510
    %v1039 = vunpack.c.h.b16 %v510
    %v1040 = vunpack.c.l.b16 %v511
    %v1041 = vunpack.c.h.b16 %v511
    %v1042 = vunpack.c.l.b16 %v512
    %v1043 = vunpack.c.h.b16 %v512
    %v1044 = vunpack.c.l.b16 %v513
    %v1045 = vunpack.c.h.b16 %v513
    %v1046 = vunpack.c.l.b16 %v514
    %v1047 = vunpack.c.h.b16 %v514
    %v1048 = vunpack.c.l.b16 %v515
    %v1049 = vunpack.c.h.b16 %v515
    %v1050 = vunpack.c.l.b16 %v516
    %v1051 = vunpack.c.h.b16 %v516
    %v1052 = vunpack.c.l.b16 %v517
    %v1053 = vunpack.c.h.b16 %v517
    %v1054 = vunpack.c.l.b16 %v518
    %v1055 = vunpack.c.h.b16 %v518
    %v1056 = vunpack.c.l.b16 %v519
    %v1057 = vunpack.c.h.b16 %v519
    %v1058 = vunpack.c.l.b16 %v520
    %v1059 = vunpack.c.h.b16 %v520
    %v1060 = vunpack.c.l.b16 %v521
    %v1061 = vunpack.c.h.b16 %v521
    %v1062 = vunpack.c.l.b16 %v522
    %v1063 = vunpack.c.h.b16 %v522
    %v1064 = vunpack.c.l.b16 %v523
    %v1065 = vunpack.c.h.b16 %v523
    %v1066 = vunpack.c.l.b16 %v524
    %v1067 = vunpack.c.h.b16 %v524
    %v1068 = vunpack.c.l.b16 %v525
    %v1069 = vunpack.c.h.b16 %v525
    %v1070 = vunpack.c.l.b16 %v526
    %v1071 = vunpack.c.h.b16 %v526
    %v1072 = vunpack.c.l.b16 %v527
    %v1073 = vunpack.c.h.b16 %v527
    %v1074 = vunpack.c.l.b16 %v528
    %v1075 = vunpack.c.h.b16 %v528
    %v1076 = vunpack.c.l.b16 %v529
    %v1077 = vunpack.c.h.b16 %v529
    %v1078 = vunpack.c.l.b16 %v530
    %v1079 = vunpack.c.h.b16 %v530
    %v1080 = vunpack.c.l.b16 %v531
    %v1081 = vunpack.c.h.b16 %v531
    %v1082 = vunpack.c.l.b16 %v532
    %v1083 = vunpack.c.h.b16 %v532
    %v1084 = vunpack.c.l.b16 %v533
    %v1085 = vunpack.c.h.b16 %v533
    %v1086 = vunpack.c.l.b16 %v534
    %v1087 = vunpack.c.h.b16 %v534
    %v1088 = vunpack.c.l.b16 %v535
    %v1089 = vunpack.c.h.b16 %v535
    %v1090 = vunpack.c.l.b16 %v536
    %v1091 = vunpack.c.h.b16 %v536
    %v1092 = vunpack.c.l.b16 %v537
    %v1093 = vunpack.c.h.b16 %v537
    %v1094 = vunpack.c.l.b16 %v538
    %v1095 = vunpack.c.h.b16 %v538
    %v1096 = vunpack.c.l.b16 %v539
    %v1097 = vunpack.c.h.b16 %v539
    %v1098 = vunpack.c.l.b16 %v540
    %v1099 = vunpack.c.h.b16 %v540
    %v1100 = vunpack.c.l.b16 %v541
    %v1101 = vunpack.c.h.b16 %v541
    %v1102 = vunpack.c.l.b16 %v542
    %v1103 = vunpack.c.h.b16 %v542
    %v1104 = vunpack.c.l.b16 %v543
    %v1105 = vunpack.c.h.b16 %v543
    %v1106 = vunpack.c.l.b16 %v544
    %v1107 = vunpack.c.h.b16 %v544
    %v1108 = vunpack.c.l.b16 %v545
    %v1109 = vunpack.c.h.b16 %v545
    %v1110 = vunpack.c.l.b16 %v546
    %v1111 = vunpack.c.h.b16 %v546
    %v1112 = vunpack.c.l.b16 %v547
    %v1113 = vunpack.c.h.b16 %v547
    %v1114 = vunpack.c.l.b16 %v548
    %v1115 = vunpack.c.h.b16 %v548
    %v1116 = vunpack.c.l.b16 %v549
    %v1117 = vunpack.c.h.b16 %v549
    %v1118 = vunpack.c.l.b16 %v550
    %v1119 = vunpack.c.h.b16 %v550
    %v1120 = vunpack.c.l.b16 %v551
    %v1121 = vunpack.c.h.b16 %v551
    %v1122 = vunpack.c.l.b16 %v552
    %v1123 = vunpack.c.h.b16 %v552
    %v1124 = vunpack.c.l.b16 %v553
    %v1125 = vunpack.c.h.b16 %v553
    %v1126 = vunpack.c.l.b16 %v554
    %v1127 = vunpack.c.h.b16 %v554
    %v1128 = vunpack.c.l.b16 %v555
    %v1129 = vunpack.c.h.b16 %v555
    %v1130 = vunpack.c.l.b16 %v556
    %v1131 = vunpack.c.h.b16 %v556
    %v1132 = vunpack.c.l.b16 %v557
    %v1133 = vunpack.c.h.b16 %v557
    %v1134 = vpack.c.b16 %v756, %v750
    %v1135 = vpack.c.b16 %v757, %v751
    %v1136 = vpack.c.b16 %v758, %v752
    %v1137 = vpack.c.b16 %v759, %v753
    %v1138 = vpack.c.b16 %v760, %v754
    %v1139 = vpack.c.b16 %v761, %v755
    %v1140 = vpack.c.b16 %v768, %v762
    %v1141 = vpack.c.b16 %v769, %v763
    %v1142 = vpack.c.b16 %v770, %v764
    %v1143 = vpack.c.b16 %v771, %v765
    %v1144 = vpack.c.b16 %v772, %v766
    %v1145 = vpack.c.b16 %v773, %v767
    %v1146 = vpack.c.b16 %v780, %v774
    %v1147 = vpack.c.b16 %v781, %v775
    %v1148 = vpack.c.b16 %v782, %v776
    %v1149 = vpack.c.b16 %v783, %v777
    %v1150 = vpack.c.b16 %v784, %v778
    %v1151 = vpack.c.b16 %v785, %v779
    %v1152 = vpack.c.b16 %v792, %v786
    %v1153 = vpack.c.b16 %v793, %v787
    %v1154 = vpack.c.b16 %v794, %v788
    %v1155 = vpack.c.b16 %v795, %v789
    %v1156 = vpack.c.b16 %v796, %v790
    %v1157 = vpack.c.b16 %v797, %v791
    %v1158 = vpack.c.b16 %v804, %v798
    %v1159 = vpack.c.b16 %v805, %v799
    %v1160 = vpack.c.b16 %v806, %v800
    %v1161 = vpack.c.b16 %v807, %v801
    %v1162 = vpack.c.b16 %v808, %v802
    %v1163 = vpack.c.b16 %v809, %v803
    %v1164 = vpack.c.b16 %v816, %v810
    %v1165 = vpack.c.b16 %v817, %v811
    %v1166 = vpack.c.b16 %v818, %v812
    %v1167 = vpack.c.b16 %v819, %v813
    %v1168 = vpack.c.b16 %v820, %v814
    %v1169 = vpack.c.b16 %v821, %v815
    %v1170 = vpack.c.b16 %v828, %v822
    %v1171 = vpack.c.b16 %v829, %v823
    %v1172 = vpack.c.b16 %v830, %v824
    %v1173 = vpack.c.b16 %v831, %v825
    %v1174 = vpack.c.b16 %v832, %v826
    %v1175 = vpack.c.b16 %v833, %v827
    %v1176 = vpack.c.b16 %v840, %v834
    %v1177 = vpack.c.b16 %v841, %v835
    %v1178 = vpack.c.b16 %v842, %v836
    %v1179 = vpack.c.b16 %v843, %v837
    %v1180 = vpack.c.b16 %v844, %v838
    %v1181 = vpack.c.b16 %v845, %v839
    %v1182 = vpack.c.b16 %v852, %v846
    %v1183 = vpack.c.b16 %v853, %v847
    %v1184 = vpack.c.b16 %v854, %v848
    %v1185 = vpack.c.b16 %v855, %v849
    %v1186 = vpack.c.b16 %v856, %v850
    %v1187 = vpack.c.b16 %v857, %v851
    %v1188 = vpack.c.b16 %v864, %v858
    %v1189 = vpack.c.b16 %v865, %v859
    %v1190 = vpack.c.b16 %v866, %v860
    %v1191 = vpack.c.b16 %v867, %v861
    %v1192 = vpack.c.b16 %v868, %v862
    %v1193 = vpack.c.b16 %v869, %v863
    %v1194 = vpack.c.b16 %v876, %v870
    %v1195 = vpack.c.b16 %v877, %v871
    %v1196 = vpack.c.b16 %v878, %v872
    %v1197 = vpack.c.b16 %v879, %v873
    %v1198 = vpack.c.b16 %v880, %v874
    %v1199 = vpack.c.b16 %v881, %v875
    %v1200 = vpack.c.b16 %v888, %v882
    %v1201 = vpack.c.b16 %v889, %v883
    %v1202 = vpack.c.b16 %v890, %v884
    %v1203 = vpack.c.b16 %v891, %v885
    %v1204 = vpack.c.b16 %v892, %v886
    %v1205 = vpack.c.b16 %v893, %v887
    %v1206 = vpack.c.b16 %v900, %v894
    %v1207 = vpack.c.b16 %v901, %v895
    %v1208 = vpack.c.b16 %v902, %v896
    %v1209 = vpack.c.b16 %v903, %v897
    %v1210 = vpack.c.b16 %v904, %v898
    %v1211 = vpack.c.b16 %v905, %v899
    %v1212 = vpack.c.b16 %v912, %v906
    %v1213 = vpack.c.b16 %v913, %v907
    %v1214 = vpack.c.b16 %v914, %v908
    %v1215 = vpack.c.b16 %v915, %v909
    %v1216 = vpack.c.b16 %v916, %v910
    %v1217 = vpack.c.b16 %v917, %v911
    %v1218 = vpack.c.b16 %v924, %v918
    %v1219 = vpack.c.b16 %v925, %v919
    %v1220 = vpack.c.b16 %v926, %v920
    %v1221 = vpack.c.b16 %v927, %v921
    %v1222 = vpack.c.b16 %v928, %v922
    %v1223 = vpack.c.b16 %v929, %v923
    %v1224 = vpack.c.b16 %v936, %v930
    %v1225 = vpack.c.b16 %v937, %v931
    %v1226 = vpack.c.b16 %v938, %v932
    %v1227 = vpack.c.b16 %v939, %v933
    %v1228 = vpack.c.b16 %v940, %v934
    %v1229 = vpack.c.b16 %v941, %v935
    %v1230 = vpack.c.b16 %v948, %v942
    %v1231 = vpack.c.b16 %v949, %v943
    %v1232 = vpack.c.b16 %v950, %v944
    %v1233 = vpack.c.b16 %v951, %v945
    %v1234 = vpack.c.b16 %v952, %v946
    %v1235 = vpack.c.b16 %v953, %v947
    %v1236 = vpack.c.b16 %v960, %v954
    %v1237 = vpack.c.b16 %v961, %v955
    %v1238 = vpack.c.b16 %v962, %v956
    %v1239 = vpack.c.b16 %v963, %v957
    %v1240 = vpack.c.b16 %v964, %v958
    %v1241 = vpack.c.b16 %v965, %v959
    %v1242 = vpack.c.b16 %v972, %v966
    %v1243 = vpack.c.b16 %v973, %v967
    %v1244 = vpack.c.b16 %v974, %v968
    %v1245 = vpack.c.b16 %v975, %v969
    %v1246 = vpack.c.b16 %v976, %v970
    %v1247 = vpack.c.b16 %v977, %v971
    %v1248 = vpack.c.b16 %v984, %v978
    %v1249 = vpack.c.b16 %v985, %v979
    %v1250 = vpack.c.b16 %v986, %v980
    %v1251 = vpack.c.b16 %v987, %v981
    %v1252 = vpack.c.b16 %v988, %v982
    %v1253 = vpack.c.b16 %v989, %v983
    %v1254 = vpack.c.b16 %v996, %v990
    %v1255 = vpack.c.b16 %v997, %v991
    %v1256 = vpack.c.b16 %v998, %v992
    %v1257 = vpack.c.b16 %v999, %v993
    %v1258 = vpack.c.b16 %v1000, %v994
    %v1259 = vpack.c.b16 %v1001, %v995
    %v1260 = vpack.c.b16 %v1008, %v1002
    %v1261 = vpack.c.b16 %v1009, %v1003
    %v1262 = vpack.c.b16 %v1010, %v1004
    %v1263 = vpack.c.b16 %v1011, %v1005
    %v1264 = vpack.c.b16 %v1012, %v1006
    %v1265 = vpack.c.b16 %v1013, %v1007
    %v1266 = vpack.c.b16 %v1020, %v1014
    %v1267 = vpack.c.b16 %v1021, %v1015
    %v1268 = vpack.c.b16 %v1022, %v1016
    %v1269 = vpack.c.b16 %v1023, %v1017
    %v1270 = vpack.c.b16 %v1024, %v1018
    %v1271 = vpack.c.b16 %v1025, %v1019
    %v1272 = vpack.c.b16 %v1032, %v1026
    %v1273 = vpack.c.b16 %v1033, %v1027
    %v1274 = vpack.c.b16 %v1034, %v1028
    %v1275 = vpack.c.b16 %v1035, %v1029
    %v1276 = vpack.c.b16 %v1036, %v1030
    %v1277 = vpack.c.b16 %v1037, %v1031
    %v1278 = vpack.c.b16 %v1044, %v1038
    %v1279 = vpack.c.b16 %v1045, %v1039
    %v1280 = vpack.c.b16 %v1046, %v1040
    %v1281 = vpack.c.b16 %v1047, %v1041
    %v1282 = vpack.c.b16 %v1048, %v1042
    %v1283 = vpack.c.b16 %v1049, %v1043
    %v1284 = vpack.c.b16 %v1056, %v1050
    %v1285 = vpack.c.b16 %v1057, %v1051
    %v1286 = vpack.c.b16 %v1058, %v1052
    %v1287 = vpack.c.b16 %v1059, %v1053
    %v1288 = vpack.c.b16 %v1060, %v1054
    %v1289 = vpack.c.b16 %v1061, %v1055
    %v1290 = vpack.c.b16 %v1068, %v1062
    %v1291 = vpack.c.b16 %v1069, %v1063
    %v1292 = vpack.c.b16 %v1070, %v1064
    %v1293 = vpack.c.b16 %v1071, %v1065
    %v1294 = vpack.c.b16 %v1072, %v1066
    %v1295 = vpack.c.b16 %v1073, %v1067
    %v1296 = vpack.c.b16 %v1080, %v1074
    %v1297 = vpack.c.b16 %v1081, %v1075
    %v1298 = vpack.c.b16 %v1082, %v1076
    %v1299 = vpack.c.b16 %v1083, %v1077
    %v1300 = vpack.c.b16 %v1084, %v1078
    %v1301 = vpack.c.b16 %v1085, %v1079
    %v1302 = vpack.c.b16 %v1092, %v1086
    %v1303 = vpack.c.b16 %v1093, %v1087
    %v1304 = vpack.c.b16 %v1094, %v1088
    %v1305 = vpack.c.b16 %v1095, %v1089
    %v1306 = vpack.c.b16 %v1096, %v1090
    %v1307 = vpack.c.b16 %v1097, %v1091
    %v1308 = vpack.c.b16 %v1104, %v1098
    %v1309 = vpack.c.b16 %v1105, %v1099
    %v1310 = vpack.c.b16 %v1106, %v1100
    %v1311 = vpack.c.b16 %v1107, %v1101
    %v1312 = vpack.c.b16 %v1108, %v1102
    %v1313 = vpack.c.b16 %v1109, %v1103
    %v1314 = vpack.c.b16 %v1116, %v1110
    %v1315 = vpack.c.b16 %v1117, %v1111
    %v1316 = vpack.c.b16 %v1118, %v1112
    %v1317 = vpack.c.b16 %v1119, %v1113
    %v1318 = vpack.c.b16 %v1120, %v1114
    %v1319 = vpack.c.b16 %v1121, %v1115
    %v1320 = vpack.c.b16 %v1128, %v1122
    %v1321 = vpack.c.b16 %v1129, %v1123
    %v1322 = vpack.c.b16 %v1130, %v1124
    %v1323 = vpack.c.b16 %v1131, %v1125
    %v1324 = vpack.c.b16 %v1132, %v1126
    %v1325 = vpack.c.b16 %v1133, %v1127
    %1518 = vmatprep.subr.bf16.mxu0 %v1135
    %1519 = vmatpush1.bf16.msra.mxu0 %v1134
    %1520 = vmatprep.subr.bf16.mxu0 %v1141
    %1521 = vmatpush1.bf16.msra.mxu0 %v1140
    %1522 = vmatprep.subr.bf16.mxu0 %v1147
    %1523 = vmatpush1.bf16.msra.mxu0 %v1146
    %1524 = vmatprep.subr.bf16.mxu0 %v1153
    %1525 = vmatpush1.bf16.msra.mxu0 %v1152
    %1526 = vmatprep.subr.bf16.mxu0 %v1159
    %1527 = vmatpush1.bf16.msra.mxu0 %v1158
    %1528 = vmatprep.subr.bf16.mxu0 %v1165
    %1529 = vmatpush1.bf16.msra.mxu0 %v1164
    %1530 = vmatprep.subr.bf16.mxu0 %v1171
    %1531 = vmatpush1.bf16.msra.mxu0 %v1170
    %1532 = vmatprep.subr.bf16.mxu0 %v1177
    %1533 = vmatpush1.bf16.msra.mxu0 %v1176
    %1534 = vmatprep.subr.bf16.mxu0 %v1183
    %1535 = vmatpush1.bf16.msra.mxu0 %v1182
    %1536 = vmatprep.subr.bf16.mxu0 %v1189
    %1537 = vmatpush1.bf16.msra.mxu0 %v1188
    %1538 = vmatprep.subr.bf16.mxu0 %v1195
    %1539 = vmatpush1.bf16.msra.mxu0 %v1194
    %1540 = vmatprep.subr.bf16.mxu0 %v1201
    %1541 = vmatpush1.bf16.msra.mxu0 %v1200
    %1542 = vmatprep.subr.bf16.mxu0 %v1207
    %1543 = vmatpush1.bf16.msra.mxu0 %v1206
    %1544 = vmatprep.subr.bf16.mxu0 %v1213
    %1545 = vmatpush1.bf16.msra.mxu0 %v1212
    %1546 = vmatprep.subr.bf16.mxu0 %v1219
    %1547 = vmatpush1.bf16.msra.mxu0 %v1218
    %1548 = vmatprep.subr.bf16.mxu0 %v1225
    %1549 = vmatpush1.bf16.msra.mxu0 %v1224
    %1550 = vmatprep.mubr.bf16.mxu0 %v363
    %1551 = vmatmul.mubr.bf16.gmra.mrb[0].mxu0 %v362
    %v1552 = vpop.f32.mrb[0].mxu0
    %v1553 = vadd.f32 0.0, %v1552
    %v1554 = vpop.f32.mrb[0].mxu0
    %v1555 = vadd.f32 0.0, %v1554
    %v1556 = vpop.f32.mrb[0].mxu0
    %v1557 = vpop.f32.mrb[0].mxu0
    %1558 = vdwg.mxu0
    %1559 = vmatprep.subr.bf16.mxu0 %v1231
    %1560 = vmatpush1.bf16.msra.mxu0 %v1230
    %1561 = vmatprep.subr.bf16.mxu0 %v1237
    %1562 = vmatpush1.bf16.msra.mxu0 %v1236
    %1563 = vmatprep.subr.bf16.mxu0 %v1243
    %1564 = vmatpush1.bf16.msra.mxu0 %v1242
    %1565 = vmatprep.subr.bf16.mxu0 %v1249
    %1566 = vmatpush1.bf16.msra.mxu0 %v1248
    %1567 = vmatprep.subr.bf16.mxu0 %v1255
    %1568 = vmatpush1.bf16.msra.mxu0 %v1254
    %1569 = vmatprep.subr.bf16.mxu0 %v1261
    %1570 = vmatpush1.bf16.msra.mxu0 %v1260
    %1571 = vmatprep.subr.bf16.mxu0 %v1267
    %1572 = vmatpush1.bf16.msra.mxu0 %v1266
    %1573 = vmatprep.subr.bf16.mxu0 %v1273
    %1574 = vmatpush1.bf16.msra.mxu0 %v1272
    %1575 = vmatprep.subr.bf16.mxu0 %v1279
    %1576 = vmatpush1.bf16.msra.mxu0 %v1278
    %1577 = vmatprep.subr.bf16.mxu0 %v1285
    %1578 = vmatpush1.bf16.msra.mxu0 %v1284
    %1579 = vmatprep.subr.bf16.mxu0 %v1291
    %1580 = vmatpush1.bf16.msra.mxu0 %v1290
    %1581 = vmatprep.subr.bf16.mxu0 %v1297
    %1582 = vmatpush1.bf16.msra.mxu0 %v1296
    %1583 = vmatprep.subr.bf16.mxu0 %v1303
    %1584 = vmatpush1.bf16.msra.mxu0 %v1302
    %1585 = vmatprep.subr.bf16.mxu0 %v1309
    %1586 = vmatpush1.bf16.msra.mxu0 %v1308
    %1587 = vmatprep.subr.bf16.mxu0 %v1315
    %1588 = vmatpush1.bf16.msra.mxu0 %v1314
    %1589 = vmatprep.subr.bf16.mxu0 %v1321
    %1590 = vmatpush1.bf16.msra.mxu0 %v1320
    %1591 = vmatprep.mubr.bf16.mxu0 %v365
    %1592 = vmatmul.mubr.bf16.gmra.mrb[0].mxu0 %v364
    %v1593 = vpop.f32.mrb[0].mxu0
    %v1594 = vadd.f32 %v1553, %v1593
    %v1595 = vpop.f32.mrb[0].mxu0
    %v1596 = vadd.f32 %v1555, %v1595
    %v1597 = vpop.f32.mrb[0].mxu0
    %v1598 = vpop.f32.mrb[0].mxu0
    %1599 = vdwg.mxu0
    %1600 = vmatprep.subr.bf16.mxu0 %v1137
    %1601 = vmatpush1.bf16.msra.mxu0 %v1136
    %1602 = vmatprep.subr.bf16.mxu0 %v1143
    %1603 = vmatpush1.bf16.msra.mxu0 %v1142
    %1604 = vmatprep.subr.bf16.mxu0 %v1149
    %1605 = vmatpush1.bf16.msra.mxu0 %v1148
    %1606 = vmatprep.subr.bf16.mxu0 %v1155
    %1607 = vmatpush1.bf16.msra.mxu0 %v1154
    %1608 = vmatprep.subr.bf16.mxu0 %v1161
    %1609 = vmatpush1.bf16.msra.mxu0 %v1160
    %1610 = vmatprep.subr.bf16.mxu0 %v1167
    %1611 = vmatpush1.bf16.msra.mxu0 %v1166
    %1612 = vmatprep.subr.bf16.mxu0 %v1173
    %1613 = vmatpush1.bf16.msra.mxu0 %v1172
    %1614 = vmatprep.subr.bf16.mxu0 %v1179
    %1615 = vmatpush1.bf16.msra.mxu0 %v1178
    %1616 = vmatprep.subr.bf16.mxu0 %v1185
    %1617 = vmatpush1.bf16.msra.mxu0 %v1184
    %1618 = vmatprep.subr.bf16.mxu0 %v1191
    %1619 = vmatpush1.bf16.msra.mxu0 %v1190
    %1620 = vmatprep.subr.bf16.mxu0 %v1197
    %1621 = vmatpush1.bf16.msra.mxu0 %v1196
    %1622 = vmatprep.subr.bf16.mxu0 %v1203
    %1623 = vmatpush1.bf16.msra.mxu0 %v1202
    %1624 = vmatprep.subr.bf16.mxu0 %v1209
    %1625 = vmatpush1.bf16.msra.mxu0 %v1208
    %1626 = vmatprep.subr.bf16.mxu0 %v1215
    %1627 = vmatpush1.bf16.msra.mxu0 %v1214
    %1628 = vmatprep.subr.bf16.mxu0 %v1221
    %1629 = vmatpush1.bf16.msra.mxu0 %v1220
    %1630 = vmatprep.subr.bf16.mxu0 %v1227
    %1631 = vmatpush1.bf16.msra.mxu0 %v1226
    %1632 = vmatprep.mubr.bf16.mxu0 %v363
    %1633 = vmatmul.mubr.bf16.gmra.mrb[0].mxu0 %v362
    %v1634 = vpop.f32.mrb[0].mxu0
    %v1635 = vadd.f32 0.0, %v1634
    %v1636 = vpop.f32.mrb[0].mxu0
    %v1637 = vadd.f32 0.0, %v1636
    %v1638 = vpop.f32.mrb[0].mxu0
    %v1639 = vpop.f32.mrb[0].mxu0
    %1640 = vdwg.mxu0
    %1641 = vmatprep.subr.bf16.mxu0 %v1233
    %1642 = vmatpush1.bf16.msra.mxu0 %v1232
    %1643 = vmatprep.subr.bf16.mxu0 %v1239
    %1644 = vmatpush1.bf16.msra.mxu0 %v1238
    %1645 = vmatprep.subr.bf16.mxu0 %v1245
    %1646 = vmatpush1.bf16.msra.mxu0 %v1244
    %1647 = vmatprep.subr.bf16.mxu0 %v1251
    %1648 = vmatpush1.bf16.msra.mxu0 %v1250
    %1649 = vmatprep.subr.bf16.mxu0 %v1257
    %1650 = vmatpush1.bf16.msra.mxu0 %v1256
    %1651 = vmatprep.subr.bf16.mxu0 %v1263
    %1652 = vmatpush1.bf16.msra.mxu0 %v1262
    %1653 = vmatprep.subr.bf16.mxu0 %v1269
    %1654 = vmatpush1.bf16.msra.mxu0 %v1268
    %1655 = vmatprep.subr.bf16.mxu0 %v1275
    %1656 = vmatpush1.bf16.msra.mxu0 %v1274
    %1657 = vmatprep.subr.bf16.mxu0 %v1281
    %1658 = vmatpush1.bf16.msra.mxu0 %v1280
    %1659 = vmatprep.subr.bf16.mxu0 %v1287
    %1660 = vmatpush1.bf16.msra.mxu0 %v1286
    %1661 = vmatprep.subr.bf16.mxu0 %v1293
    %1662 = vmatpush1.bf16.msra.mxu0 %v1292
    %1663 = vmatprep.subr.bf16.mxu0 %v1299
    %1664 = vmatpush1.bf16.msra.mxu0 %v1298
    %1665 = vmatprep.subr.bf16.mxu0 %v1305
    %1666 = vmatpush1.bf16.msra.mxu0 %v1304
    %1667 = vmatprep.subr.bf16.mxu0 %v1311
    %1668 = vmatpush1.bf16.msra.mxu0 %v1310
    %1669 = vmatprep.subr.bf16.mxu0 %v1317
    %1670 = vmatpush1.bf16.msra.mxu0 %v1316
    %1671 = vmatprep.subr.bf16.mxu0 %v1323
    %1672 = vmatpush1.bf16.msra.mxu0 %v1322
    %1673 = vmatprep.mubr.bf16.mxu0 %v365
    %1674 = vmatmul.mubr.bf16.gmra.mrb[0].mxu0 %v364
    %v1675 = vpop.f32.mrb[0].mxu0
    %v1676 = vadd.f32 %v1635, %v1675
    %v1677 = vpop.f32.mrb[0].mxu0
    %v1678 = vadd.f32 %v1637, %v1677
    %v1679 = vpop.f32.mrb[0].mxu0
    %v1680 = vpop.f32.mrb[0].mxu0
    %1681 = vdwg.mxu0
    %1682 = vmatprep.subr.bf16.mxu0 %v1139
    %1683 = vmatpush1.bf16.msra.mxu0 %v1138
    %1684 = vmatprep.subr.bf16.mxu0 %v1145
    %1685 = vmatpush1.bf16.msra.mxu0 %v1144
    %1686 = vmatprep.subr.bf16.mxu0 %v1151
    %1687 = vmatpush1.bf16.msra.mxu0 %v1150
    %1688 = vmatprep.subr.bf16.mxu0 %v1157
    %1689 = vmatpush1.bf16.msra.mxu0 %v1156
    %1690 = vmatprep.subr.bf16.mxu0 %v1163
    %1691 = vmatpush1.bf16.msra.mxu0 %v1162
    %1692 = vmatprep.subr.bf16.mxu0 %v1169
    %1693 = vmatpush1.bf16.msra.mxu0 %v1168
    %1694 = vmatprep.subr.bf16.mxu0 %v1175
    %1695 = vmatpush1.bf16.msra.mxu0 %v1174
    %1696 = vmatprep.subr.bf16.mxu0 %v1181
    %1697 = vmatpush1.bf16.msra.mxu0 %v1180
    %1698 = vmatprep.subr.bf16.mxu0 %v1187
    %1699 = vmatpush1.bf16.msra.mxu0 %v1186
    %1700 = vmatprep.subr.bf16.mxu0 %v1193
    %1701 = vmatpush1.bf16.msra.mxu0 %v1192
    %1702 = vmatprep.subr.bf16.mxu0 %v1199
    %1703 = vmatpush1.bf16.msra.mxu0 %v1198
    %1704 = vmatprep.subr.bf16.mxu0 %v1205
    %1705 = vmatpush1.bf16.msra.mxu0 %v1204
    %1706 = vmatprep.subr.bf16.mxu0 %v1211
    %1707 = vmatpush1.bf16.msra.mxu0 %v1210
    %1708 = vmatprep.subr.bf16.mxu0 %v1217
    %1709 = vmatpush1.bf16.msra.mxu0 %v1216
    %1710 = vmatprep.subr.bf16.mxu0 %v1223
    %1711 = vmatpush1.bf16.msra.mxu0 %v1222
    %1712 = vmatprep.subr.bf16.mxu0 %v1229
    %1713 = vmatpush1.bf16.msra.mxu0 %v1228
    %1714 = vmatprep.mubr.bf16.mxu0 %v363
    %1715 = vmatmul.mubr.bf16.gmra.mrb[0].mxu0 %v362
    %v1716 = vpop.f32.mrb[0].mxu0
    %v1717 = vadd.f32 0.0, %v1716
    %v1718 = vpop.f32.mrb[0].mxu0
    %v1719 = vadd.f32 0.0, %v1718
    %v1720 = vpop.f32.mrb[0].mxu0
    %v1721 = vpop.f32.mrb[0].mxu0
    %1722 = vdwg.mxu0
    %1723 = vmatprep.subr.bf16.mxu0 %v1235
    %1724 = vmatpush1.bf16.msra.mxu0 %v1234
    %1725 = vmatprep.subr.bf16.mxu0 %v1241
    %1726 = vmatpush1.bf16.msra.mxu0 %v1240
    %1727 = vmatprep.subr.bf16.mxu0 %v1247
    %1728 = vmatpush1.bf16.msra.mxu0 %v1246
    %1729 = vmatprep.subr.bf16.mxu0 %v1253
    %1730 = vmatpush1.bf16.msra.mxu0 %v1252
    %1731 = vmatprep.subr.bf16.mxu0 %v1259
    %1732 = vmatpush1.bf16.msra.mxu0 %v1258
    %1733 = vmatprep.subr.bf16.mxu0 %v1265
    %1734 = vmatpush1.bf16.msra.mxu0 %v1264
    %1735 = vmatprep.subr.bf16.mxu0 %v1271
    %1736 = vmatpush1.bf16.msra.mxu0 %v1270
    %1737 = vmatprep.subr.bf16.mxu0 %v1277
    %1738 = vmatpush1.bf16.msra.mxu0 %v1276
    %1739 = vmatprep.subr.bf16.mxu0 %v1283
    %1740 = vmatpush1.bf16.msra.mxu0 %v1282
    %1741 = vmatprep.subr.bf16.mxu0 %v1289
    %1742 = vmatpush1.bf16.msra.mxu0 %v1288
    %1743 = vmatprep.subr.bf16.mxu0 %v1295
    %1744 = vmatpush1.bf16.msra.mxu0 %v1294
    %1745 = vmatprep.subr.bf16.mxu0 %v1301
    %1746 = vmatpush1.bf16.msra.mxu0 %v1300
    %1747 = vmatprep.subr.bf16.mxu0 %v1307
    %1748 = vmatpush1.bf16.msra.mxu0 %v1306
    %1749 = vmatprep.subr.bf16.mxu0 %v1313
    %1750 = vmatpush1.bf16.msra.mxu0 %v1312
    %1751 = vmatprep.subr.bf16.mxu0 %v1319
    %1752 = vmatpush1.bf16.msra.mxu0 %v1318
    %1753 = vmatprep.subr.bf16.mxu0 %v1325
    %1754 = vmatpush1.bf16.msra.mxu0 %v1324
    %1755 = vmatprep.mubr.bf16.mxu0 %v365
    %1756 = vmatmul.mubr.bf16.gmra.mrb[0].mxu0 %v364
    %v1757 = vpop.f32.mrb[0].mxu0
    %v1758 = vadd.f32 %v1717, %v1757
    %v1759 = vpop.f32.mrb[0].mxu0
    %v1760 = vadd.f32 %v1719, %v1759
    %v1761 = vpop.f32.mrb[0].mxu0
    %v1762 = vpop.f32.mrb[0].mxu0
    %1763 = vdwg.mxu0
    %v1764 = vmax.f32 %v1594, 0.0
    %v1765 = vmax.f32 %v1596, 0.0
    %v1766 = vmax.f32 %v1676, 0.0
    %v1767 = vmax.f32 %v1678, 0.0
    %v1768 = vmax.f32 %v1758, 0.0
    %v1769 = vmax.f32 %v1760, 0.0
    %v1770 = vpack.c.bf16 %v1764, %v1764
    %v1771 = vpack.c.bf16 %v1765, %v1765
    %v1772 = vpack.c.bf16 %v1766, %v1766
    %v1773 = vpack.c.bf16 %v1767, %v1767
    %v1774 = vpack.c.bf16 %v1768, %v1768
    %v1775 = vpack.c.bf16 %v1769, %v1769
    %v1776 = vld [vmem:[%s6] sm:$0xff]
    %v1777 = vld [vmem:[%s6 + $0x8] sm:$0xff]
    %v1778 = vld [vmem:[%s6 + $0x10] sm:$0xff]
    %v1779 = vld [vmem:[%s6 + $0x18] sm:$0xff]
    %v1780 = vld [vmem:[%s6 + $0x20] sm:$0xff]
    %v1781 = vld [vmem:[%s6 + $0x28] sm:$0xff]
    %v1782 = vld [vmem:[%s6 + $0x30] sm:$0xff]
    %v1783 = vld [vmem:[%s6 + $0x38] sm:$0xff]
    %v1784 = vld [vmem:[%s6 + $0x40] sm:$0xff]
    %v1785 = vld [vmem:[%s6 + $0x48] sm:$0xff]
    %v1786 = vld [vmem:[%s6 + $0x50] sm:$0xff]
    %v1787 = vld [vmem:[%s6 + $0x58] sm:$0xff]
    %v1788 = vld [vmem:[%s6 + $0x60] sm:$0xff]
    %v1789 = vld [vmem:[%s6 + $0x68] sm:$0xff]
    %v1790 = vld [vmem:[%s6 + $0x70] sm:$0xff]
    %v1791 = vld [vmem:[%s6 + $0x78] sm:$0xff]
    %v1792 = vld [vmem:[%s6 + $0x80] sm:$0xff]
    %v1793 = vld [vmem:[%s6 + $0x88] sm:$0xff]
    %v1794 = vld [vmem:[%s6 + $0x90] sm:$0xff]
    %v1795 = vld [vmem:[%s6 + $0x98] sm:$0xff]
    %v1796 = vld [vmem:[%s6 + $0xa0] sm:$0xff]
    %v1797 = vld [vmem:[%s6 + $0xa8] sm:$0xff]
    %v1798 = vld [vmem:[%s6 + $0xb0] sm:$0xff]
    %v1799 = vld [vmem:[%s6 + $0xb8] sm:$0xff]
    %v1800 = vld [vmem:[%s6 + $0xc0] sm:$0xff]
    %v1801 = vld [vmem:[%s6 + $0xc8] sm:$0xff]
    %v1802 = vld [vmem:[%s6 + $0xd0] sm:$0xff]
    %v1803 = vld [vmem:[%s6 + $0xd8] sm:$0xff]
    %v1804 = vld [vmem:[%s6 + $0xe0] sm:$0xff]
    %v1805 = vld [vmem:[%s6 + $0xe8] sm:$0xff]
    %v1806 = vld [vmem:[%s6 + $0xf0] sm:$0xff]
    %v1807 = vld [vmem:[%s6 + $0xf8] sm:$0xff]
    %v1808 = vld [vmem:[%s6 + $0x100] sm:$0xff]
    %v1809 = vld [vmem:[%s6 + $0x108] sm:$0xff]
    %v1810 = vld [vmem:[%s6 + $0x110] sm:$0xff]
    %v1811 = vld [vmem:[%s6 + $0x118] sm:$0xff]
    %v1812 = vld [vmem:[%s6 + $0x120] sm:$0xff]
    %v1813 = vld [vmem:[%s6 + $0x128] sm:$0xff]
    %v1814 = vld [vmem:[%s6 + $0x130] sm:$0xff]
    %v1815 = vld [vmem:[%s6 + $0x138] sm:$0xff]
    %v1816 = vld [vmem:[%s6 + $0x140] sm:$0xff]
    %v1817 = vld [vmem:[%s6 + $0x148] sm:$0xff]
    %v1818 = vld [vmem:[%s6 + $0x150] sm:$0xff]
    %v1819 = vld [vmem:[%s6 + $0x158] sm:$0xff]
    %v1820 = vld [vmem:[%s6 + $0x160] sm:$0xff]
    %v1821 = vld [vmem:[%s6 + $0x168] sm:$0xff]
    %v1822 = vld [vmem:[%s6 + $0x170] sm:$0xff]
    %v1823 = vld [vmem:[%s6 + $0x178] sm:$0xff]
    %v1824 = vld [vmem:[%s6 + $0x180] sm:$0xff]
    %v1825 = vld [vmem:[%s6 + $0x188] sm:$0xff]
    %v1826 = vld [vmem:[%s6 + $0x190] sm:$0xff]
    %v1827 = vld [vmem:[%s6 + $0x198] sm:$0xff]
    %v1828 = vld [vmem:[%s6 + $0x1a0] sm:$0xff]
    %v1829 = vld [vmem:[%s6 + $0x1a8] sm:$0xff]
    %v1830 = vld [vmem:[%s6 + $0x1b0] sm:$0xff]
    %v1831 = vld [vmem:[%s6 + $0x1b8] sm:$0xff]
    %v1832 = vld [vmem:[%s6 + $0x1c0] sm:$0xff]
    %v1833 = vld [vmem:[%s6 + $0x1c8] sm:$0xff]
    %v1834 = vld [vmem:[%s6 + $0x1d0] sm:$0xff]
    %v1835 = vld [vmem:[%s6 + $0x1d8] sm:$0xff]
    %v1836 = vld [vmem:[%s6 + $0x1e0] sm:$0xff]
    %v1837 = vld [vmem:[%s6 + $0x1e8] sm:$0xff]
    %v1838 = vld [vmem:[%s6 + $0x1f0] sm:$0xff]
    %v1839 = vld [vmem:[%s6 + $0x1f8] sm:$0xff]
    %v1840 = vld [vmem:[%s6 + $0x200] sm:$0xff]
    %v1841 = vld [vmem:[%s6 + $0x208] sm:$0xff]
    %v1842 = vld [vmem:[%s6 + $0x210] sm:$0xff]
    %v1843 = vld [vmem:[%s6 + $0x218] sm:$0xff]
    %v1844 = vld [vmem:[%s6 + $0x220] sm:$0xff]
    %v1845 = vld [vmem:[%s6 + $0x228] sm:$0xff]
    %v1846 = vld [vmem:[%s6 + $0x230] sm:$0xff]
    %v1847 = vld [vmem:[%s6 + $0x238] sm:$0xff]
    %v1848 = vld [vmem:[%s6 + $0x240] sm:$0xff]
    %v1849 = vld [vmem:[%s6 + $0x248] sm:$0xff]
    %v1850 = vld [vmem:[%s6 + $0x250] sm:$0xff]
    %v1851 = vld [vmem:[%s6 + $0x258] sm:$0xff]
    %v1852 = vld [vmem:[%s6 + $0x260] sm:$0xff]
    %v1853 = vld [vmem:[%s6 + $0x268] sm:$0xff]
    %v1854 = vld [vmem:[%s6 + $0x270] sm:$0xff]
    %v1855 = vld [vmem:[%s6 + $0x278] sm:$0xff]
    %v1856 = vld [vmem:[%s6 + $0x280] sm:$0xff]
    %v1857 = vld [vmem:[%s6 + $0x288] sm:$0xff]
    %v1858 = vld [vmem:[%s6 + $0x290] sm:$0xff]
    %v1859 = vld [vmem:[%s6 + $0x298] sm:$0xff]
    %v1860 = vld [vmem:[%s6 + $0x2a0] sm:$0xff]
    %v1861 = vld [vmem:[%s6 + $0x2a8] sm:$0xff]
    %v1862 = vld [vmem:[%s6 + $0x2b0] sm:$0xff]
    %v1863 = vld [vmem:[%s6 + $0x2b8] sm:$0xff]
    %v1864 = vld [vmem:[%s6 + $0x2c0] sm:$0xff]
    %v1865 = vld [vmem:[%s6 + $0x2c8] sm:$0xff]
    %v1866 = vld [vmem:[%s6 + $0x2d0] sm:$0xff]
    %v1867 = vld [vmem:[%s6 + $0x2d8] sm:$0xff]
    %v1868 = vld [vmem:[%s6 + $0x2e0] sm:$0xff]
    %v1869 = vld [vmem:[%s6 + $0x2e8] sm:$0xff]
    %v1870 = vld [vmem:[%s6 + $0x2f0] sm:$0xff]
    %v1871 = vld [vmem:[%s6 + $0x2f8] sm:$0xff]
    %v1872 = vld [vmem:[%s6 + $0x300] sm:$0xff]
    %v1873 = vld [vmem:[%s6 + $0x308] sm:$0xff]
    %v1874 = vld [vmem:[%s6 + $0x310] sm:$0xff]
    %v1875 = vld [vmem:[%s6 + $0x318] sm:$0xff]
    %v1876 = vld [vmem:[%s6 + $0x320] sm:$0xff]
    %v1877 = vld [vmem:[%s6 + $0x328] sm:$0xff]
    %v1878 = vld [vmem:[%s6 + $0x330] sm:$0xff]
    %v1879 = vld [vmem:[%s6 + $0x338] sm:$0xff]
    %v1880 = vld [vmem:[%s6 + $0x340] sm:$0xff]
    %v1881 = vld [vmem:[%s6 + $0x348] sm:$0xff]
    %v1882 = vld [vmem:[%s6 + $0x350] sm:$0xff]
    %v1883 = vld [vmem:[%s6 + $0x358] sm:$0xff]
    %v1884 = vld [vmem:[%s6 + $0x360] sm:$0xff]
    %v1885 = vld [vmem:[%s6 + $0x368] sm:$0xff]
    %v1886 = vld [vmem:[%s6 + $0x370] sm:$0xff]
    %v1887 = vld [vmem:[%s6 + $0x378] sm:$0xff]
    %v1888 = vld [vmem:[%s6 + $0x380] sm:$0xff]
    %v1889 = vld [vmem:[%s6 + $0x388] sm:$0xff]
    %v1890 = vld [vmem:[%s6 + $0x390] sm:$0xff]
    %v1891 = vld [vmem:[%s6 + $0x398] sm:$0xff]
    %v1892 = vld [vmem:[%s6 + $0x3a0] sm:$0xff]
    %v1893 = vld [vmem:[%s6 + $0x3a8] sm:$0xff]
    %v1894 = vld [vmem:[%s6 + $0x3b0] sm:$0xff]
    %v1895 = vld [vmem:[%s6 + $0x3b8] sm:$0xff]
    %v1896 = vld [vmem:[%s6 + $0x3c0] sm:$0xff]
    %v1897 = vld [vmem:[%s6 + $0x3c8] sm:$0xff]
    %v1898 = vld [vmem:[%s6 + $0x3d0] sm:$0xff]
    %v1899 = vld [vmem:[%s6 + $0x3d8] sm:$0xff]
    %v1900 = vld [vmem:[%s6 + $0x3e0] sm:$0xff]
    %v1901 = vld [vmem:[%s6 + $0x3e8] sm:$0xff]
    %v1902 = vld [vmem:[%s6 + $0x3f0] sm:$0xff]
    %v1903 = vld [vmem:[%s6 + $0x3f8] sm:$0xff]
    %v1904 = vld [vmem:[%s6 + $0x400] sm:$0xff]
    %v1905 = vld [vmem:[%s6 + $0x408] sm:$0xff]
    %v1906 = vld [vmem:[%s6 + $0x410] sm:$0xff]
    %v1907 = vld [vmem:[%s6 + $0x418] sm:$0xff]
    %v1908 = vld [vmem:[%s6 + $0x420] sm:$0xff]
    %v1909 = vld [vmem:[%s6 + $0x428] sm:$0xff]
    %v1910 = vld [vmem:[%s6 + $0x430] sm:$0xff]
    %v1911 = vld [vmem:[%s6 + $0x438] sm:$0xff]
    %v1912 = vld [vmem:[%s6 + $0x440] sm:$0xff]
    %v1913 = vld [vmem:[%s6 + $0x448] sm:$0xff]
    %v1914 = vld [vmem:[%s6 + $0x450] sm:$0xff]
    %v1915 = vld [vmem:[%s6 + $0x458] sm:$0xff]
    %v1916 = vld [vmem:[%s6 + $0x460] sm:$0xff]
    %v1917 = vld [vmem:[%s6 + $0x468] sm:$0xff]
    %v1918 = vld [vmem:[%s6 + $0x470] sm:$0xff]
    %v1919 = vld [vmem:[%s6 + $0x478] sm:$0xff]
    %v1920 = vld [vmem:[%s6 + $0x480] sm:$0xff]
    %v1921 = vld [vmem:[%s6 + $0x488] sm:$0xff]
    %v1922 = vld [vmem:[%s6 + $0x490] sm:$0xff]
    %v1923 = vld [vmem:[%s6 + $0x498] sm:$0xff]
    %v1924 = vld [vmem:[%s6 + $0x4a0] sm:$0xff]
    %v1925 = vld [vmem:[%s6 + $0x4a8] sm:$0xff]
    %v1926 = vld [vmem:[%s6 + $0x4b0] sm:$0xff]
    %v1927 = vld [vmem:[%s6 + $0x4b8] sm:$0xff]
    %v1928 = vld [vmem:[%s6 + $0x4c0] sm:$0xff]
    %v1929 = vld [vmem:[%s6 + $0x4c8] sm:$0xff]
    %v1930 = vld [vmem:[%s6 + $0x4d0] sm:$0xff]
    %v1931 = vld [vmem:[%s6 + $0x4d8] sm:$0xff]
    %v1932 = vld [vmem:[%s6 + $0x4e0] sm:$0xff]
    %v1933 = vld [vmem:[%s6 + $0x4e8] sm:$0xff]
    %v1934 = vld [vmem:[%s6 + $0x4f0] sm:$0xff]
    %v1935 = vld [vmem:[%s6 + $0x4f8] sm:$0xff]
    %v1936 = vld [vmem:[%s6 + $0x500] sm:$0xff]
    %v1937 = vld [vmem:[%s6 + $0x508] sm:$0xff]
    %v1938 = vld [vmem:[%s6 + $0x510] sm:$0xff]
    %v1939 = vld [vmem:[%s6 + $0x518] sm:$0xff]
    %v1940 = vld [vmem:[%s6 + $0x520] sm:$0xff]
    %v1941 = vld [vmem:[%s6 + $0x528] sm:$0xff]
    %v1942 = vld [vmem:[%s6 + $0x530] sm:$0xff]
    %v1943 = vld [vmem:[%s6 + $0x538] sm:$0xff]
    %v1944 = vld [vmem:[%s6 + $0x540] sm:$0xff]
    %v1945 = vld [vmem:[%s6 + $0x548] sm:$0xff]
    %v1946 = vld [vmem:[%s6 + $0x550] sm:$0xff]
    %v1947 = vld [vmem:[%s6 + $0x558] sm:$0xff]
    %v1948 = vld [vmem:[%s6 + $0x560] sm:$0xff]
    %v1949 = vld [vmem:[%s6 + $0x568] sm:$0xff]
    %v1950 = vld [vmem:[%s6 + $0x570] sm:$0xff]
    %v1951 = vld [vmem:[%s6 + $0x578] sm:$0xff]
    %v1952 = vld [vmem:[%s6 + $0x580] sm:$0xff]
    %v1953 = vld [vmem:[%s6 + $0x588] sm:$0xff]
    %v1954 = vld [vmem:[%s6 + $0x590] sm:$0xff]
    %v1955 = vld [vmem:[%s6 + $0x598] sm:$0xff]
    %v1956 = vld [vmem:[%s6 + $0x5a0] sm:$0xff]
    %v1957 = vld [vmem:[%s6 + $0x5a8] sm:$0xff]
    %v1958 = vld [vmem:[%s6 + $0x5b0] sm:$0xff]
    %v1959 = vld [vmem:[%s6 + $0x5b8] sm:$0xff]
    %v1960 = vld [vmem:[%s6 + $0x5c0] sm:$0xff]
    %v1961 = vld [vmem:[%s6 + $0x5c8] sm:$0xff]
    %v1962 = vld [vmem:[%s6 + $0x5d0] sm:$0xff]
    %v1963 = vld [vmem:[%s6 + $0x5d8] sm:$0xff]
    %v1964 = vld [vmem:[%s6 + $0x5e0] sm:$0xff]
    %v1965 = vld [vmem:[%s6 + $0x5e8] sm:$0xff]
    %v1966 = vld [vmem:[%s6 + $0x5f0] sm:$0xff]
    %v1967 = vld [vmem:[%s6 + $0x5f8] sm:$0xff]
    %v1968 = vld [vmem:[%s6 + $0x600] sm:$0xff]
    %v1969 = vld [vmem:[%s6 + $0x608] sm:$0xff]
    %v1970 = vld [vmem:[%s6 + $0x610] sm:$0xff]
    %v1971 = vld [vmem:[%s6 + $0x618] sm:$0xff]
    %v1972 = vld [vmem:[%s6 + $0x620] sm:$0xff]
    %v1973 = vld [vmem:[%s6 + $0x628] sm:$0xff]
    %v1974 = vld [vmem:[%s6 + $0x630] sm:$0xff]
    %v1975 = vld [vmem:[%s6 + $0x638] sm:$0xff]
    %v1976 = vld [vmem:[%s6 + $0x640] sm:$0xff]
    %v1977 = vld [vmem:[%s6 + $0x648] sm:$0xff]
    %v1978 = vld [vmem:[%s6 + $0x650] sm:$0xff]
    %v1979 = vld [vmem:[%s6 + $0x658] sm:$0xff]
    %v1980 = vld [vmem:[%s6 + $0x660] sm:$0xff]
    %v1981 = vld [vmem:[%s6 + $0x668] sm:$0xff]
    %v1982 = vld [vmem:[%s6 + $0x670] sm:$0xff]
    %v1983 = vld [vmem:[%s6 + $0x678] sm:$0xff]
    %v1984 = vld [vmem:[%s6 + $0x680] sm:$0xff]
    %v1985 = vld [vmem:[%s6 + $0x688] sm:$0xff]
    %v1986 = vld [vmem:[%s6 + $0x690] sm:$0xff]
    %v1987 = vld [vmem:[%s6 + $0x698] sm:$0xff]
    %v1988 = vld [vmem:[%s6 + $0x6a0] sm:$0xff]
    %v1989 = vld [vmem:[%s6 + $0x6a8] sm:$0xff]
    %v1990 = vld [vmem:[%s6 + $0x6b0] sm:$0xff]
    %v1991 = vld [vmem:[%s6 + $0x6b8] sm:$0xff]
    %v1992 = vld [vmem:[%s6 + $0x6c0] sm:$0xff]
    %v1993 = vld [vmem:[%s6 + $0x6c8] sm:$0xff]
    %v1994 = vld [vmem:[%s6 + $0x6d0] sm:$0xff]
    %v1995 = vld [vmem:[%s6 + $0x6d8] sm:$0xff]
    %v1996 = vld [vmem:[%s6 + $0x6e0] sm:$0xff]
    %v1997 = vld [vmem:[%s6 + $0x6e8] sm:$0xff]
    %v1998 = vld [vmem:[%s6 + $0x6f0] sm:$0xff]
    %v1999 = vld [vmem:[%s6 + $0x6f8] sm:$0xff]
    %v2000 = vld [vmem:[%s6 + $0x700] sm:$0xff]
    %v2001 = vld [vmem:[%s6 + $0x708] sm:$0xff]
    %v2002 = vld [vmem:[%s6 + $0x710] sm:$0xff]
    %v2003 = vld [vmem:[%s6 + $0x718] sm:$0xff]
    %v2004 = vld [vmem:[%s6 + $0x720] sm:$0xff]
    %v2005 = vld [vmem:[%s6 + $0x728] sm:$0xff]
    %v2006 = vld [vmem:[%s6 + $0x730] sm:$0xff]
    %v2007 = vld [vmem:[%s6 + $0x738] sm:$0xff]
    %v2008 = vld [vmem:[%s6 + $0x740] sm:$0xff]
    %v2009 = vld [vmem:[%s6 + $0x748] sm:$0xff]
    %v2010 = vld [vmem:[%s6 + $0x750] sm:$0xff]
    %v2011 = vld [vmem:[%s6 + $0x758] sm:$0xff]
    %v2012 = vld [vmem:[%s6 + $0x760] sm:$0xff]
    %v2013 = vld [vmem:[%s6 + $0x768] sm:$0xff]
    %v2014 = vld [vmem:[%s6 + $0x770] sm:$0xff]
    %v2015 = vld [vmem:[%s6 + $0x778] sm:$0xff]
    %v2016 = vld [vmem:[%s6 + $0x780] sm:$0xff]
    %v2017 = vld [vmem:[%s6 + $0x788] sm:$0xff]
    %v2018 = vld [vmem:[%s6 + $0x790] sm:$0xff]
    %v2019 = vld [vmem:[%s6 + $0x798] sm:$0xff]
    %v2020 = vld [vmem:[%s6 + $0x7a0] sm:$0xff]
    %v2021 = vld [vmem:[%s6 + $0x7a8] sm:$0xff]
    %v2022 = vld [vmem:[%s6 + $0x7b0] sm:$0xff]
    %v2023 = vld [vmem:[%s6 + $0x7b8] sm:$0xff]
    %v2024 = vld [vmem:[%s6 + $0x7c0] sm:$0xff]
    %v2025 = vld [vmem:[%s6 + $0x7c8] sm:$0xff]
    %v2026 = vld [vmem:[%s6 + $0x7d0] sm:$0xff]
    %v2027 = vld [vmem:[%s6 + $0x7d8] sm:$0xff]
    %v2028 = vld [vmem:[%s6 + $0x7e0] sm:$0xff]
    %v2029 = vld [vmem:[%s6 + $0x7e8] sm:$0xff]
    %v2030 = vld [vmem:[%s6 + $0x7f0] sm:$0xff]
    %v2031 = vld [vmem:[%s6 + $0x7f8] sm:$0xff]
    %v2032 = vld [vmem:[%s6 + $0x800] sm:$0xff]
    %v2033 = vld [vmem:[%s6 + $0x808] sm:$0xff]
    %v2034 = vld [vmem:[%s6 + $0x810] sm:$0xff]
    %v2035 = vld [vmem:[%s6 + $0x818] sm:$0xff]
    %v2036 = vld [vmem:[%s6 + $0x820] sm:$0xff]
    %v2037 = vld [vmem:[%s6 + $0x828] sm:$0xff]
    %v2038 = vld [vmem:[%s6 + $0x830] sm:$0xff]
    %v2039 = vld [vmem:[%s6 + $0x838] sm:$0xff]
    %v2040 = vld [vmem:[%s6 + $0x840] sm:$0xff]
    %v2041 = vld [vmem:[%s6 + $0x848] sm:$0xff]
    %v2042 = vld [vmem:[%s6 + $0x850] sm:$0xff]
    %v2043 = vld [vmem:[%s6 + $0x858] sm:$0xff]
    %v2044 = vld [vmem:[%s6 + $0x860] sm:$0xff]
    %v2045 = vld [vmem:[%s6 + $0x868] sm:$0xff]
    %v2046 = vld [vmem:[%s6 + $0x870] sm:$0xff]
    %v2047 = vld [vmem:[%s6 + $0x878] sm:$0xff]
    %v2048 = vld [vmem:[%s6 + $0x880] sm:$0xff]
    %v2049 = vld [vmem:[%s6 + $0x888] sm:$0xff]
    %v2050 = vld [vmem:[%s6 + $0x890] sm:$0xff]
    %v2051 = vld [vmem:[%s6 + $0x898] sm:$0xff]
    %v2052 = vld [vmem:[%s6 + $0x8a0] sm:$0xff]
    %v2053 = vld [vmem:[%s6 + $0x8a8] sm:$0xff]
    %v2054 = vld [vmem:[%s6 + $0x8b0] sm:$0xff]
    %v2055 = vld [vmem:[%s6 + $0x8b8] sm:$0xff]
    %v2056 = vld [vmem:[%s6 + $0x8c0] sm:$0xff]
    %v2057 = vld [vmem:[%s6 + $0x8c8] sm:$0xff]
    %v2058 = vld [vmem:[%s6 + $0x8d0] sm:$0xff]
    %v2059 = vld [vmem:[%s6 + $0x8d8] sm:$0xff]
    %v2060 = vld [vmem:[%s6 + $0x8e0] sm:$0xff]
    %v2061 = vld [vmem:[%s6 + $0x8e8] sm:$0xff]
    %v2062 = vld [vmem:[%s6 + $0x8f0] sm:$0xff]
    %v2063 = vld [vmem:[%s6 + $0x8f8] sm:$0xff]
    %v2064 = vld [vmem:[%s6 + $0x900] sm:$0xff]
    %v2065 = vld [vmem:[%s6 + $0x908] sm:$0xff]
    %v2066 = vld [vmem:[%s6 + $0x910] sm:$0xff]
    %v2067 = vld [vmem:[%s6 + $0x918] sm:$0xff]
    %v2068 = vld [vmem:[%s6 + $0x920] sm:$0xff]
    %v2069 = vld [vmem:[%s6 + $0x928] sm:$0xff]
    %v2070 = vld [vmem:[%s6 + $0x930] sm:$0xff]
    %v2071 = vld [vmem:[%s6 + $0x938] sm:$0xff]
    %v2072 = vld [vmem:[%s6 + $0x940] sm:$0xff]
    %v2073 = vld [vmem:[%s6 + $0x948] sm:$0xff]
    %v2074 = vld [vmem:[%s6 + $0x950] sm:$0xff]
    %v2075 = vld [vmem:[%s6 + $0x958] sm:$0xff]
    %v2076 = vld [vmem:[%s6 + $0x960] sm:$0xff]
    %v2077 = vld [vmem:[%s6 + $0x968] sm:$0xff]
    %v2078 = vld [vmem:[%s6 + $0x970] sm:$0xff]
    %v2079 = vld [vmem:[%s6 + $0x978] sm:$0xff]
    %v2080 = vld [vmem:[%s6 + $0x980] sm:$0xff]
    %v2081 = vld [vmem:[%s6 + $0x988] sm:$0xff]
    %v2082 = vld [vmem:[%s6 + $0x990] sm:$0xff]
    %v2083 = vld [vmem:[%s6 + $0x998] sm:$0xff]
    %v2084 = vld [vmem:[%s6 + $0x9a0] sm:$0xff]
    %v2085 = vld [vmem:[%s6 + $0x9a8] sm:$0xff]
    %v2086 = vld [vmem:[%s6 + $0x9b0] sm:$0xff]
    %v2087 = vld [vmem:[%s6 + $0x9b8] sm:$0xff]
    %v2088 = vld [vmem:[%s6 + $0x9c0] sm:$0xff]
    %v2089 = vld [vmem:[%s6 + $0x9c8] sm:$0xff]
    %v2090 = vld [vmem:[%s6 + $0x9d0] sm:$0xff]
    %v2091 = vld [vmem:[%s6 + $0x9d8] sm:$0xff]
    %v2092 = vld [vmem:[%s6 + $0x9e0] sm:$0xff]
    %v2093 = vld [vmem:[%s6 + $0x9e8] sm:$0xff]
    %v2094 = vld [vmem:[%s6 + $0x9f0] sm:$0xff]
    %v2095 = vld [vmem:[%s6 + $0x9f8] sm:$0xff]
    %v2096 = vld [vmem:[%s6 + $0xa00] sm:$0xff]
    %v2097 = vld [vmem:[%s6 + $0xa08] sm:$0xff]
    %v2098 = vld [vmem:[%s6 + $0xa10] sm:$0xff]
    %v2099 = vld [vmem:[%s6 + $0xa18] sm:$0xff]
    %v2100 = vld [vmem:[%s6 + $0xa20] sm:$0xff]
    %v2101 = vld [vmem:[%s6 + $0xa28] sm:$0xff]
    %v2102 = vld [vmem:[%s6 + $0xa30] sm:$0xff]
    %v2103 = vld [vmem:[%s6 + $0xa38] sm:$0xff]
    %v2104 = vld [vmem:[%s6 + $0xa40] sm:$0xff]
    %v2105 = vld [vmem:[%s6 + $0xa48] sm:$0xff]
    %v2106 = vld [vmem:[%s6 + $0xa50] sm:$0xff]
    %v2107 = vld [vmem:[%s6 + $0xa58] sm:$0xff]
    %v2108 = vld [vmem:[%s6 + $0xa60] sm:$0xff]
    %v2109 = vld [vmem:[%s6 + $0xa68] sm:$0xff]
    %v2110 = vld [vmem:[%s6 + $0xa70] sm:$0xff]
    %v2111 = vld [vmem:[%s6 + $0xa78] sm:$0xff]
    %v2112 = vld [vmem:[%s6 + $0xa80] sm:$0xff]
    %v2113 = vld [vmem:[%s6 + $0xa88] sm:$0xff]
    %v2114 = vld [vmem:[%s6 + $0xa90] sm:$0xff]
    %v2115 = vld [vmem:[%s6 + $0xa98] sm:$0xff]
    %v2116 = vld [vmem:[%s6 + $0xaa0] sm:$0xff]
    %v2117 = vld [vmem:[%s6 + $0xaa8] sm:$0xff]
    %v2118 = vld [vmem:[%s6 + $0xab0] sm:$0xff]
    %v2119 = vld [vmem:[%s6 + $0xab8] sm:$0xff]
    %v2120 = vld [vmem:[%s6 + $0xac0] sm:$0xff]
    %v2121 = vld [vmem:[%s6 + $0xac8] sm:$0xff]
    %v2122 = vld [vmem:[%s6 + $0xad0] sm:$0xff]
    %v2123 = vld [vmem:[%s6 + $0xad8] sm:$0xff]
    %v2124 = vld [vmem:[%s6 + $0xae0] sm:$0xff]
    %v2125 = vld [vmem:[%s6 + $0xae8] sm:$0xff]
    %v2126 = vld [vmem:[%s6 + $0xaf0] sm:$0xff]
    %v2127 = vld [vmem:[%s6 + $0xaf8] sm:$0xff]
    %v2128 = vld [vmem:[%s6 + $0xb00] sm:$0xff]
    %v2129 = vld [vmem:[%s6 + $0xb08] sm:$0xff]
    %v2130 = vld [vmem:[%s6 + $0xb10] sm:$0xff]
    %v2131 = vld [vmem:[%s6 + $0xb18] sm:$0xff]
    %v2132 = vld [vmem:[%s6 + $0xb20] sm:$0xff]
    %v2133 = vld [vmem:[%s6 + $0xb28] sm:$0xff]
    %v2134 = vld [vmem:[%s6 + $0xb30] sm:$0xff]
    %v2135 = vld [vmem:[%s6 + $0xb38] sm:$0xff]
    %v2136 = vld [vmem:[%s6 + $0xb40] sm:$0xff]
    %v2137 = vld [vmem:[%s6 + $0xb48] sm:$0xff]
    %v2138 = vld [vmem:[%s6 + $0xb50] sm:$0xff]
    %v2139 = vld [vmem:[%s6 + $0xb58] sm:$0xff]
    %v2140 = vld [vmem:[%s6 + $0xb60] sm:$0xff]
    %v2141 = vld [vmem:[%s6 + $0xb68] sm:$0xff]
    %v2142 = vld [vmem:[%s6 + $0xb70] sm:$0xff]
    %v2143 = vld [vmem:[%s6 + $0xb78] sm:$0xff]
    %v2144 = vld [vmem:[%s6 + $0xb80] sm:$0xff]
    %v2145 = vld [vmem:[%s6 + $0xb88] sm:$0xff]
    %v2146 = vld [vmem:[%s6 + $0xb90] sm:$0xff]
    %v2147 = vld [vmem:[%s6 + $0xb98] sm:$0xff]
    %v2148 = vld [vmem:[%s6 + $0xba0] sm:$0xff]
    %v2149 = vld [vmem:[%s6 + $0xba8] sm:$0xff]
    %v2150 = vld [vmem:[%s6 + $0xbb0] sm:$0xff]
    %v2151 = vld [vmem:[%s6 + $0xbb8] sm:$0xff]
    %v2152 = vld [vmem:[%s6 + $0xbc0] sm:$0xff]
    %v2153 = vld [vmem:[%s6 + $0xbc8] sm:$0xff]
    %v2154 = vld [vmem:[%s6 + $0xbd0] sm:$0xff]
    %v2155 = vld [vmem:[%s6 + $0xbd8] sm:$0xff]
    %v2156 = vld [vmem:[%s6 + $0xbe0] sm:$0xff]
    %v2157 = vld [vmem:[%s6 + $0xbe8] sm:$0xff]
    %v2158 = vld [vmem:[%s6 + $0xbf0] sm:$0xff]
    %v2159 = vld [vmem:[%s6 + $0xbf8] sm:$0xff]
    %v2160 = vld [vmem:[%s7] sm:$0xff]
    %v2162 = vlaneseq
    %v2163 = vshrl.u32 %v2162, 7
    %v2164 = vsub.s32 0, %v2163
    %v2165 = vrot.slane %v2160, %v2164
    %v2166 = vlaneseq
    %v2167 = vshrl.u32 %v2166, 7
    %v2168 = vsub.s32 1, %v2167
    %v2169 = vrot.slane %v2160, %v2168
    %v2170 = vlaneseq
    %v2171 = vshrl.u32 %v2170, 7
    %v2172 = vsub.s32 2, %v2171
    %v2173 = vrot.slane %v2160, %v2172
    %v2174 = vlaneseq
    %v2175 = vshrl.u32 %v2174, 7
    %v2176 = vsub.s32 3, %v2175
    %v2177 = vrot.slane %v2160, %v2176
    %v2178 = vlaneseq
    %v2179 = vshrl.u32 %v2178, 7
    %v2180 = vsub.s32 4, %v2179
    %v2181 = vrot.slane %v2160, %v2180
    %v2182 = vlaneseq
    %v2183 = vshrl.u32 %v2182, 7
    %v2184 = vsub.s32 5, %v2183
    %v2185 = vrot.slane %v2160, %v2184
    %v2186 = vlaneseq
    %v2187 = vshrl.u32 %v2186, 7
    %v2188 = vsub.s32 6, %v2187
    %v2189 = vrot.slane %v2160, %v2188
    %v2190 = vlaneseq
    %v2191 = vshrl.u32 %v2190, 7
    %v2192 = vsub.s32 7, %v2191
    %v2193 = vrot.slane %v2160, %v2192
    %v2586 = vunpack.c.l.b16 %v1776
    %v2587 = vunpack.c.h.b16 %v1776
    %v2588 = vunpack.c.l.b16 %v1777
    %v2589 = vunpack.c.h.b16 %v1777
    %v2590 = vunpack.c.l.b16 %v1778
    %v2591 = vunpack.c.h.b16 %v1778
    %v2592 = vunpack.c.l.b16 %v1779
    %v2593 = vunpack.c.h.b16 %v1779
    %v2594 = vunpack.c.l.b16 %v1780
    %v2595 = vunpack.c.h.b16 %v1780
    %v2596 = vunpack.c.l.b16 %v1781
    %v2597 = vunpack.c.h.b16 %v1781
    %v2598 = vunpack.c.l.b16 %v1782
    %v2599 = vunpack.c.h.b16 %v1782
    %v2600 = vunpack.c.l.b16 %v1783
    %v2601 = vunpack.c.h.b16 %v1783
    %v2602 = vunpack.c.l.b16 %v1784
    %v2603 = vunpack.c.h.b16 %v1784
    %v2604 = vunpack.c.l.b16 %v1785
    %v2605 = vunpack.c.h.b16 %v1785
    %v2606 = vunpack.c.l.b16 %v1786
    %v2607 = vunpack.c.h.b16 %v1786
    %v2608 = vunpack.c.l.b16 %v1787
    %v2609 = vunpack.c.h.b16 %v1787
    %v2610 = vunpack.c.l.b16 %v1788
    %v2611 = vunpack.c.h.b16 %v1788
    %v2612 = vunpack.c.l.b16 %v1789
    %v2613 = vunpack.c.h.b16 %v1789
    %v2614 = vunpack.c.l.b16 %v1790
    %v2615 = vunpack.c.h.b16 %v1790
    %v2616 = vunpack.c.l.b16 %v1791
    %v2617 = vunpack.c.h.b16 %v1791
    %v2618 = vunpack.c.l.b16 %v1792
    %v2619 = vunpack.c.h.b16 %v1792
    %v2620 = vunpack.c.l.b16 %v1793
    %v2621 = vunpack.c.h.b16 %v1793
    %v2622 = vunpack.c.l.b16 %v1794
    %v2623 = vunpack.c.h.b16 %v1794
    %v2624 = vunpack.c.l.b16 %v1795
    %v2625 = vunpack.c.h.b16 %v1795
    %v2626 = vunpack.c.l.b16 %v1796
    %v2627 = vunpack.c.h.b16 %v1796
    %v2628 = vunpack.c.l.b16 %v1797
    %v2629 = vunpack.c.h.b16 %v1797
    %v2630 = vunpack.c.l.b16 %v1798
    %v2631 = vunpack.c.h.b16 %v1798
    %v2632 = vunpack.c.l.b16 %v1799
    %v2633 = vunpack.c.h.b16 %v1799
    %v2634 = vunpack.c.l.b16 %v1800
    %v2635 = vunpack.c.h.b16 %v1800
    %v2636 = vunpack.c.l.b16 %v1801
    %v2637 = vunpack.c.h.b16 %v1801
    %v2638 = vunpack.c.l.b16 %v1802
    %v2639 = vunpack.c.h.b16 %v1802
    %v2640 = vunpack.c.l.b16 %v1803
    %v2641 = vunpack.c.h.b16 %v1803
    %v2642 = vunpack.c.l.b16 %v1804
    %v2643 = vunpack.c.h.b16 %v1804
    %v2644 = vunpack.c.l.b16 %v1805
    %v2645 = vunpack.c.h.b16 %v1805
    %v2646 = vunpack.c.l.b16 %v1806
    %v2647 = vunpack.c.h.b16 %v1806
    %v2648 = vunpack.c.l.b16 %v1807
    %v2649 = vunpack.c.h.b16 %v1807
    %v2650 = vunpack.c.l.b16 %v1808
    %v2651 = vunpack.c.h.b16 %v1808
    %v2652 = vunpack.c.l.b16 %v1809
    %v2653 = vunpack.c.h.b16 %v1809
    %v2654 = vunpack.c.l.b16 %v1810
    %v2655 = vunpack.c.h.b16 %v1810
    %v2656 = vunpack.c.l.b16 %v1811
    %v2657 = vunpack.c.h.b16 %v1811
    %v2658 = vunpack.c.l.b16 %v1812
    %v2659 = vunpack.c.h.b16 %v1812
    %v2660 = vunpack.c.l.b16 %v1813
    %v2661 = vunpack.c.h.b16 %v1813
    %v2662 = vunpack.c.l.b16 %v1814
    %v2663 = vunpack.c.h.b16 %v1814
    %v2664 = vunpack.c.l.b16 %v1815
    %v2665 = vunpack.c.h.b16 %v1815
    %v2666 = vunpack.c.l.b16 %v1816
    %v2667 = vunpack.c.h.b16 %v1816
    %v2668 = vunpack.c.l.b16 %v1817
    %v2669 = vunpack.c.h.b16 %v1817
    %v2670 = vunpack.c.l.b16 %v1818
    %v2671 = vunpack.c.h.b16 %v1818
    %v2672 = vunpack.c.l.b16 %v1819
    %v2673 = vunpack.c.h.b16 %v1819
    %v2674 = vunpack.c.l.b16 %v1820
    %v2675 = vunpack.c.h.b16 %v1820
    %v2676 = vunpack.c.l.b16 %v1821
    %v2677 = vunpack.c.h.b16 %v1821
    %v2678 = vunpack.c.l.b16 %v1822
    %v2679 = vunpack.c.h.b16 %v1822
    %v2680 = vunpack.c.l.b16 %v1823
    %v2681 = vunpack.c.h.b16 %v1823
    %v2682 = vunpack.c.l.b16 %v1824
    %v2683 = vunpack.c.h.b16 %v1824
    %v2684 = vunpack.c.l.b16 %v1825
    %v2685 = vunpack.c.h.b16 %v1825
    %v2686 = vunpack.c.l.b16 %v1826
    %v2687 = vunpack.c.h.b16 %v1826
    %v2688 = vunpack.c.l.b16 %v1827
    %v2689 = vunpack.c.h.b16 %v1827
    %v2690 = vunpack.c.l.b16 %v1828
    %v2691 = vunpack.c.h.b16 %v1828
    %v2692 = vunpack.c.l.b16 %v1829
    %v2693 = vunpack.c.h.b16 %v1829
    %v2694 = vunpack.c.l.b16 %v1830
    %v2695 = vunpack.c.h.b16 %v1830
    %v2696 = vunpack.c.l.b16 %v1831
    %v2697 = vunpack.c.h.b16 %v1831
    %v2698 = vunpack.c.l.b16 %v1832
    %v2699 = vunpack.c.h.b16 %v1832
    %v2700 = vunpack.c.l.b16 %v1833
    %v2701 = vunpack.c.h.b16 %v1833
    %v2702 = vunpack.c.l.b16 %v1834
    %v2703 = vunpack.c.h.b16 %v1834
    %v2704 = vunpack.c.l.b16 %v1835
    %v2705 = vunpack.c.h.b16 %v1835
    %v2706 = vunpack.c.l.b16 %v1836
    %v2707 = vunpack.c.h.b16 %v1836
    %v2708 = vunpack.c.l.b16 %v1837
    %v2709 = vunpack.c.h.b16 %v1837
    %v2710 = vunpack.c.l.b16 %v1838
    %v2711 = vunpack.c.h.b16 %v1838
    %v2712 = vunpack.c.l.b16 %v1839
    %v2713 = vunpack.c.h.b16 %v1839
    %v2714 = vunpack.c.l.b16 %v1840
    %v2715 = vunpack.c.h.b16 %v1840
    %v2716 = vunpack.c.l.b16 %v1841
    %v2717 = vunpack.c.h.b16 %v1841
    %v2718 = vunpack.c.l.b16 %v1842
    %v2719 = vunpack.c.h.b16 %v1842
    %v2720 = vunpack.c.l.b16 %v1843
    %v2721 = vunpack.c.h.b16 %v1843
    %v2722 = vunpack.c.l.b16 %v1844
    %v2723 = vunpack.c.h.b16 %v1844
    %v2724 = vunpack.c.l.b16 %v1845
    %v2725 = vunpack.c.h.b16 %v1845
    %v2726 = vunpack.c.l.b16 %v1846
    %v2727 = vunpack.c.h.b16 %v1846
    %v2728 = vunpack.c.l.b16 %v1847
    %v2729 = vunpack.c.h.b16 %v1847
    %v2730 = vunpack.c.l.b16 %v1848
    %v2731 = vunpack.c.h.b16 %v1848
    %v2732 = vunpack.c.l.b16 %v1849
    %v2733 = vunpack.c.h.b16 %v1849
    %v2734 = vunpack.c.l.b16 %v1850
    %v2735 = vunpack.c.h.b16 %v1850
    %v2736 = vunpack.c.l.b16 %v1851
    %v2737 = vunpack.c.h.b16 %v1851
    %v2738 = vunpack.c.l.b16 %v1852
    %v2739 = vunpack.c.h.b16 %v1852
    %v2740 = vunpack.c.l.b16 %v1853
    %v2741 = vunpack.c.h.b16 %v1853
    %v2742 = vunpack.c.l.b16 %v1854
    %v2743 = vunpack.c.h.b16 %v1854
    %v2744 = vunpack.c.l.b16 %v1855
    %v2745 = vunpack.c.h.b16 %v1855
    %v2746 = vunpack.c.l.b16 %v1856
    %v2747 = vunpack.c.h.b16 %v1856
    %v2748 = vunpack.c.l.b16 %v1857
    %v2749 = vunpack.c.h.b16 %v1857
    %v2750 = vunpack.c.l.b16 %v1858
    %v2751 = vunpack.c.h.b16 %v1858
    %v2752 = vunpack.c.l.b16 %v1859
    %v2753 = vunpack.c.h.b16 %v1859
    %v2754 = vunpack.c.l.b16 %v1860
    %v2755 = vunpack.c.h.b16 %v1860
    %v2756 = vunpack.c.l.b16 %v1861
    %v2757 = vunpack.c.h.b16 %v1861
    %v2758 = vunpack.c.l.b16 %v1862
    %v2759 = vunpack.c.h.b16 %v1862
    %v2760 = vunpack.c.l.b16 %v1863
    %v2761 = vunpack.c.h.b16 %v1863
    %v2762 = vunpack.c.l.b16 %v1864
    %v2763 = vunpack.c.h.b16 %v1864
    %v2764 = vunpack.c.l.b16 %v1865
    %v2765 = vunpack.c.h.b16 %v1865
    %v2766 = vunpack.c.l.b16 %v1866
    %v2767 = vunpack.c.h.b16 %v1866
    %v2768 = vunpack.c.l.b16 %v1867
    %v2769 = vunpack.c.h.b16 %v1867
    %v2770 = vunpack.c.l.b16 %v1868
    %v2771 = vunpack.c.h.b16 %v1868
    %v2772 = vunpack.c.l.b16 %v1869
    %v2773 = vunpack.c.h.b16 %v1869
    %v2774 = vunpack.c.l.b16 %v1870
    %v2775 = vunpack.c.h.b16 %v1870
    %v2776 = vunpack.c.l.b16 %v1871
    %v2777 = vunpack.c.h.b16 %v1871
    %v2778 = vunpack.c.l.b16 %v1872
    %v2779 = vunpack.c.h.b16 %v1872
    %v2780 = vunpack.c.l.b16 %v1873
    %v2781 = vunpack.c.h.b16 %v1873
    %v2782 = vunpack.c.l.b16 %v1874
    %v2783 = vunpack.c.h.b16 %v1874
    %v2784 = vunpack.c.l.b16 %v1875
    %v2785 = vunpack.c.h.b16 %v1875
    %v2786 = vunpack.c.l.b16 %v1876
    %v2787 = vunpack.c.h.b16 %v1876
    %v2788 = vunpack.c.l.b16 %v1877
    %v2789 = vunpack.c.h.b16 %v1877
    %v2790 = vunpack.c.l.b16 %v1878
    %v2791 = vunpack.c.h.b16 %v1878
    %v2792 = vunpack.c.l.b16 %v1879
    %v2793 = vunpack.c.h.b16 %v1879
    %v2794 = vunpack.c.l.b16 %v1880
    %v2795 = vunpack.c.h.b16 %v1880
    %v2796 = vunpack.c.l.b16 %v1881
    %v2797 = vunpack.c.h.b16 %v1881
    %v2798 = vunpack.c.l.b16 %v1882
    %v2799 = vunpack.c.h.b16 %v1882
    %v2800 = vunpack.c.l.b16 %v1883
    %v2801 = vunpack.c.h.b16 %v1883
    %v2802 = vunpack.c.l.b16 %v1884
    %v2803 = vunpack.c.h.b16 %v1884
    %v2804 = vunpack.c.l.b16 %v1885
    %v2805 = vunpack.c.h.b16 %v1885
    %v2806 = vunpack.c.l.b16 %v1886
    %v2807 = vunpack.c.h.b16 %v1886
    %v2808 = vunpack.c.l.b16 %v1887
    %v2809 = vunpack.c.h.b16 %v1887
    %v2810 = vunpack.c.l.b16 %v1888
    %v2811 = vunpack.c.h.b16 %v1888
    %v2812 = vunpack.c.l.b16 %v1889
    %v2813 = vunpack.c.h.b16 %v1889
    %v2814 = vunpack.c.l.b16 %v1890
    %v2815 = vunpack.c.h.b16 %v1890
    %v2816 = vunpack.c.l.b16 %v1891
    %v2817 = vunpack.c.h.b16 %v1891
    %v2818 = vunpack.c.l.b16 %v1892
    %v2819 = vunpack.c.h.b16 %v1892
    %v2820 = vunpack.c.l.b16 %v1893
    %v2821 = vunpack.c.h.b16 %v1893
    %v2822 = vunpack.c.l.b16 %v1894
    %v2823 = vunpack.c.h.b16 %v1894
    %v2824 = vunpack.c.l.b16 %v1895
    %v2825 = vunpack.c.h.b16 %v1895
    %v2826 = vunpack.c.l.b16 %v1896
    %v2827 = vunpack.c.h.b16 %v1896
    %v2828 = vunpack.c.l.b16 %v1897
    %v2829 = vunpack.c.h.b16 %v1897
    %v2830 = vunpack.c.l.b16 %v1898
    %v2831 = vunpack.c.h.b16 %v1898
    %v2832 = vunpack.c.l.b16 %v1899
    %v2833 = vunpack.c.h.b16 %v1899
    %v2834 = vunpack.c.l.b16 %v1900
    %v2835 = vunpack.c.h.b16 %v1900
    %v2836 = vunpack.c.l.b16 %v1901
    %v2837 = vunpack.c.h.b16 %v1901
    %v2838 = vunpack.c.l.b16 %v1902
    %v2839 = vunpack.c.h.b16 %v1902
    %v2840 = vunpack.c.l.b16 %v1903
    %v2841 = vunpack.c.h.b16 %v1903
    %v2842 = vunpack.c.l.b16 %v1904
    %v2843 = vunpack.c.h.b16 %v1904
    %v2844 = vunpack.c.l.b16 %v1905
    %v2845 = vunpack.c.h.b16 %v1905
    %v2846 = vunpack.c.l.b16 %v1906
    %v2847 = vunpack.c.h.b16 %v1906
    %v2848 = vunpack.c.l.b16 %v1907
    %v2849 = vunpack.c.h.b16 %v1907
    %v2850 = vunpack.c.l.b16 %v1908
    %v2851 = vunpack.c.h.b16 %v1908
    %v2852 = vunpack.c.l.b16 %v1909
    %v2853 = vunpack.c.h.b16 %v1909
    %v2854 = vunpack.c.l.b16 %v1910
    %v2855 = vunpack.c.h.b16 %v1910
    %v2856 = vunpack.c.l.b16 %v1911
    %v2857 = vunpack.c.h.b16 %v1911
    %v2858 = vunpack.c.l.b16 %v1912
    %v2859 = vunpack.c.h.b16 %v1912
    %v2860 = vunpack.c.l.b16 %v1913
    %v2861 = vunpack.c.h.b16 %v1913
    %v2862 = vunpack.c.l.b16 %v1914
    %v2863 = vunpack.c.h.b16 %v1914
    %v2864 = vunpack.c.l.b16 %v1915
    %v2865 = vunpack.c.h.b16 %v1915
    %v2866 = vunpack.c.l.b16 %v1916
    %v2867 = vunpack.c.h.b16 %v1916
    %v2868 = vunpack.c.l.b16 %v1917
    %v2869 = vunpack.c.h.b16 %v1917
    %v2870 = vunpack.c.l.b16 %v1918
    %v2871 = vunpack.c.h.b16 %v1918
    %v2872 = vunpack.c.l.b16 %v1919
    %v2873 = vunpack.c.h.b16 %v1919
    %v2874 = vunpack.c.l.b16 %v1920
    %v2875 = vunpack.c.h.b16 %v1920
    %v2876 = vunpack.c.l.b16 %v1921
    %v2877 = vunpack.c.h.b16 %v1921
    %v2878 = vunpack.c.l.b16 %v1922
    %v2879 = vunpack.c.h.b16 %v1922
    %v2880 = vunpack.c.l.b16 %v1923
    %v2881 = vunpack.c.h.b16 %v1923
    %v2882 = vunpack.c.l.b16 %v1924
    %v2883 = vunpack.c.h.b16 %v1924
    %v2884 = vunpack.c.l.b16 %v1925
    %v2885 = vunpack.c.h.b16 %v1925
    %v2886 = vunpack.c.l.b16 %v1926
    %v2887 = vunpack.c.h.b16 %v1926
    %v2888 = vunpack.c.l.b16 %v1927
    %v2889 = vunpack.c.h.b16 %v1927
    %v2890 = vunpack.c.l.b16 %v1928
    %v2891 = vunpack.c.h.b16 %v1928
    %v2892 = vunpack.c.l.b16 %v1929
    %v2893 = vunpack.c.h.b16 %v1929
    %v2894 = vunpack.c.l.b16 %v1930
    %v2895 = vunpack.c.h.b16 %v1930
    %v2896 = vunpack.c.l.b16 %v1931
    %v2897 = vunpack.c.h.b16 %v1931
    %v2898 = vunpack.c.l.b16 %v1932
    %v2899 = vunpack.c.h.b16 %v1932
    %v2900 = vunpack.c.l.b16 %v1933
    %v2901 = vunpack.c.h.b16 %v1933
    %v2902 = vunpack.c.l.b16 %v1934
    %v2903 = vunpack.c.h.b16 %v1934
    %v2904 = vunpack.c.l.b16 %v1935
    %v2905 = vunpack.c.h.b16 %v1935
    %v2906 = vunpack.c.l.b16 %v1936
    %v2907 = vunpack.c.h.b16 %v1936
    %v2908 = vunpack.c.l.b16 %v1937
    %v2909 = vunpack.c.h.b16 %v1937
    %v2910 = vunpack.c.l.b16 %v1938
    %v2911 = vunpack.c.h.b16 %v1938
    %v2912 = vunpack.c.l.b16 %v1939
    %v2913 = vunpack.c.h.b16 %v1939
    %v2914 = vunpack.c.l.b16 %v1940
    %v2915 = vunpack.c.h.b16 %v1940
    %v2916 = vunpack.c.l.b16 %v1941
    %v2917 = vunpack.c.h.b16 %v1941
    %v2918 = vunpack.c.l.b16 %v1942
    %v2919 = vunpack.c.h.b16 %v1942
    %v2920 = vunpack.c.l.b16 %v1943
    %v2921 = vunpack.c.h.b16 %v1943
    %v2922 = vunpack.c.l.b16 %v1944
    %v2923 = vunpack.c.h.b16 %v1944
    %v2924 = vunpack.c.l.b16 %v1945
    %v2925 = vunpack.c.h.b16 %v1945
    %v2926 = vunpack.c.l.b16 %v1946
    %v2927 = vunpack.c.h.b16 %v1946
    %v2928 = vunpack.c.l.b16 %v1947
    %v2929 = vunpack.c.h.b16 %v1947
    %v2930 = vunpack.c.l.b16 %v1948
    %v2931 = vunpack.c.h.b16 %v1948
    %v2932 = vunpack.c.l.b16 %v1949
    %v2933 = vunpack.c.h.b16 %v1949
    %v2934 = vunpack.c.l.b16 %v1950
    %v2935 = vunpack.c.h.b16 %v1950
    %v2936 = vunpack.c.l.b16 %v1951
    %v2937 = vunpack.c.h.b16 %v1951
    %v2938 = vunpack.c.l.b16 %v1952
    %v2939 = vunpack.c.h.b16 %v1952
    %v2940 = vunpack.c.l.b16 %v1953
    %v2941 = vunpack.c.h.b16 %v1953
    %v2942 = vunpack.c.l.b16 %v1954
    %v2943 = vunpack.c.h.b16 %v1954
    %v2944 = vunpack.c.l.b16 %v1955
    %v2945 = vunpack.c.h.b16 %v1955
    %v2946 = vunpack.c.l.b16 %v1956
    %v2947 = vunpack.c.h.b16 %v1956
    %v2948 = vunpack.c.l.b16 %v1957
    %v2949 = vunpack.c.h.b16 %v1957
    %v2950 = vunpack.c.l.b16 %v1958
    %v2951 = vunpack.c.h.b16 %v1958
    %v2952 = vunpack.c.l.b16 %v1959
    %v2953 = vunpack.c.h.b16 %v1959
    %v2954 = vunpack.c.l.b16 %v1960
    %v2955 = vunpack.c.h.b16 %v1960
    %v2956 = vunpack.c.l.b16 %v1961
    %v2957 = vunpack.c.h.b16 %v1961
    %v2958 = vunpack.c.l.b16 %v1962
    %v2959 = vunpack.c.h.b16 %v1962
    %v2960 = vunpack.c.l.b16 %v1963
    %v2961 = vunpack.c.h.b16 %v1963
    %v2962 = vunpack.c.l.b16 %v1964
    %v2963 = vunpack.c.h.b16 %v1964
    %v2964 = vunpack.c.l.b16 %v1965
    %v2965 = vunpack.c.h.b16 %v1965
    %v2966 = vunpack.c.l.b16 %v1966
    %v2967 = vunpack.c.h.b16 %v1966
    %v2968 = vunpack.c.l.b16 %v1967
    %v2969 = vunpack.c.h.b16 %v1967
    %v2970 = vunpack.c.l.b16 %v1968
    %v2971 = vunpack.c.h.b16 %v1968
    %v2972 = vunpack.c.l.b16 %v1969
    %v2973 = vunpack.c.h.b16 %v1969
    %v2974 = vunpack.c.l.b16 %v1970
    %v2975 = vunpack.c.h.b16 %v1970
    %v2976 = vunpack.c.l.b16 %v1971
    %v2977 = vunpack.c.h.b16 %v1971
    %v2978 = vunpack.c.l.b16 %v1972
    %v2979 = vunpack.c.h.b16 %v1972
    %v2980 = vunpack.c.l.b16 %v1973
    %v2981 = vunpack.c.h.b16 %v1973
    %v2982 = vunpack.c.l.b16 %v1974
    %v2983 = vunpack.c.h.b16 %v1974
    %v2984 = vunpack.c.l.b16 %v1975
    %v2985 = vunpack.c.h.b16 %v1975
    %v2986 = vunpack.c.l.b16 %v1976
    %v2987 = vunpack.c.h.b16 %v1976
    %v2988 = vunpack.c.l.b16 %v1977
    %v2989 = vunpack.c.h.b16 %v1977
    %v2990 = vunpack.c.l.b16 %v1978
    %v2991 = vunpack.c.h.b16 %v1978
    %v2992 = vunpack.c.l.b16 %v1979
    %v2993 = vunpack.c.h.b16 %v1979
    %v2994 = vunpack.c.l.b16 %v1980
    %v2995 = vunpack.c.h.b16 %v1980
    %v2996 = vunpack.c.l.b16 %v1981
    %v2997 = vunpack.c.h.b16 %v1981
    %v2998 = vunpack.c.l.b16 %v1982
    %v2999 = vunpack.c.h.b16 %v1982
    %v3000 = vunpack.c.l.b16 %v1983
    %v3001 = vunpack.c.h.b16 %v1983
    %v3002 = vunpack.c.l.b16 %v1984
    %v3003 = vunpack.c.h.b16 %v1984
    %v3004 = vunpack.c.l.b16 %v1985
    %v3005 = vunpack.c.h.b16 %v1985
    %v3006 = vunpack.c.l.b16 %v1986
    %v3007 = vunpack.c.h.b16 %v1986
    %v3008 = vunpack.c.l.b16 %v1987
    %v3009 = vunpack.c.h.b16 %v1987
    %v3010 = vunpack.c.l.b16 %v1988
    %v3011 = vunpack.c.h.b16 %v1988
    %v3012 = vunpack.c.l.b16 %v1989
    %v3013 = vunpack.c.h.b16 %v1989
    %v3014 = vunpack.c.l.b16 %v1990
    %v3015 = vunpack.c.h.b16 %v1990
    %v3016 = vunpack.c.l.b16 %v1991
    %v3017 = vunpack.c.h.b16 %v1991
    %v3018 = vunpack.c.l.b16 %v1992
    %v3019 = vunpack.c.h.b16 %v1992
    %v3020 = vunpack.c.l.b16 %v1993
    %v3021 = vunpack.c.h.b16 %v1993
    %v3022 = vunpack.c.l.b16 %v1994
    %v3023 = vunpack.c.h.b16 %v1994
    %v3024 = vunpack.c.l.b16 %v1995
    %v3025 = vunpack.c.h.b16 %v1995
    %v3026 = vunpack.c.l.b16 %v1996
    %v3027 = vunpack.c.h.b16 %v1996
    %v3028 = vunpack.c.l.b16 %v1997
    %v3029 = vunpack.c.h.b16 %v1997
    %v3030 = vunpack.c.l.b16 %v1998
    %v3031 = vunpack.c.h.b16 %v1998
    %v3032 = vunpack.c.l.b16 %v1999
    %v3033 = vunpack.c.h.b16 %v1999
    %v3034 = vunpack.c.l.b16 %v2000
    %v3035 = vunpack.c.h.b16 %v2000
    %v3036 = vunpack.c.l.b16 %v2001
    %v3037 = vunpack.c.h.b16 %v2001
    %v3038 = vunpack.c.l.b16 %v2002
    %v3039 = vunpack.c.h.b16 %v2002
    %v3040 = vunpack.c.l.b16 %v2003
    %v3041 = vunpack.c.h.b16 %v2003
    %v3042 = vunpack.c.l.b16 %v2004
    %v3043 = vunpack.c.h.b16 %v2004
    %v3044 = vunpack.c.l.b16 %v2005
    %v3045 = vunpack.c.h.b16 %v2005
    %v3046 = vunpack.c.l.b16 %v2006
    %v3047 = vunpack.c.h.b16 %v2006
    %v3048 = vunpack.c.l.b16 %v2007
    %v3049 = vunpack.c.h.b16 %v2007
    %v3050 = vunpack.c.l.b16 %v2008
    %v3051 = vunpack.c.h.b16 %v2008
    %v3052 = vunpack.c.l.b16 %v2009
    %v3053 = vunpack.c.h.b16 %v2009
    %v3054 = vunpack.c.l.b16 %v2010
    %v3055 = vunpack.c.h.b16 %v2010
    %v3056 = vunpack.c.l.b16 %v2011
    %v3057 = vunpack.c.h.b16 %v2011
    %v3058 = vunpack.c.l.b16 %v2012
    %v3059 = vunpack.c.h.b16 %v2012
    %v3060 = vunpack.c.l.b16 %v2013
    %v3061 = vunpack.c.h.b16 %v2013
    %v3062 = vunpack.c.l.b16 %v2014
    %v3063 = vunpack.c.h.b16 %v2014
    %v3064 = vunpack.c.l.b16 %v2015
    %v3065 = vunpack.c.h.b16 %v2015
    %v3066 = vunpack.c.l.b16 %v2016
    %v3067 = vunpack.c.h.b16 %v2016
    %v3068 = vunpack.c.l.b16 %v2017
    %v3069 = vunpack.c.h.b16 %v2017
    %v3070 = vunpack.c.l.b16 %v2018
    %v3071 = vunpack.c.h.b16 %v2018
    %v3072 = vunpack.c.l.b16 %v2019
    %v3073 = vunpack.c.h.b16 %v2019
    %v3074 = vunpack.c.l.b16 %v2020
    %v3075 = vunpack.c.h.b16 %v2020
    %v3076 = vunpack.c.l.b16 %v2021
    %v3077 = vunpack.c.h.b16 %v2021
    %v3078 = vunpack.c.l.b16 %v2022
    %v3079 = vunpack.c.h.b16 %v2022
    %v3080 = vunpack.c.l.b16 %v2023
    %v3081 = vunpack.c.h.b16 %v2023
    %v3082 = vunpack.c.l.b16 %v2024
    %v3083 = vunpack.c.h.b16 %v2024
    %v3084 = vunpack.c.l.b16 %v2025
    %v3085 = vunpack.c.h.b16 %v2025
    %v3086 = vunpack.c.l.b16 %v2026
    %v3087 = vunpack.c.h.b16 %v2026
    %v3088 = vunpack.c.l.b16 %v2027
    %v3089 = vunpack.c.h.b16 %v2027
    %v3090 = vunpack.c.l.b16 %v2028
    %v3091 = vunpack.c.h.b16 %v2028
    %v3092 = vunpack.c.l.b16 %v2029
    %v3093 = vunpack.c.h.b16 %v2029
    %v3094 = vunpack.c.l.b16 %v2030
    %v3095 = vunpack.c.h.b16 %v2030
    %v3096 = vunpack.c.l.b16 %v2031
    %v3097 = vunpack.c.h.b16 %v2031
    %v3098 = vunpack.c.l.b16 %v2032
    %v3099 = vunpack.c.h.b16 %v2032
    %v3100 = vunpack.c.l.b16 %v2033
    %v3101 = vunpack.c.h.b16 %v2033
    %v3102 = vunpack.c.l.b16 %v2034
    %v3103 = vunpack.c.h.b16 %v2034
    %v3104 = vunpack.c.l.b16 %v2035
    %v3105 = vunpack.c.h.b16 %v2035
    %v3106 = vunpack.c.l.b16 %v2036
    %v3107 = vunpack.c.h.b16 %v2036
    %v3108 = vunpack.c.l.b16 %v2037
    %v3109 = vunpack.c.h.b16 %v2037
    %v3110 = vunpack.c.l.b16 %v2038
    %v3111 = vunpack.c.h.b16 %v2038
    %v3112 = vunpack.c.l.b16 %v2039
    %v3113 = vunpack.c.h.b16 %v2039
    %v3114 = vunpack.c.l.b16 %v2040
    %v3115 = vunpack.c.h.b16 %v2040
    %v3116 = vunpack.c.l.b16 %v2041
    %v3117 = vunpack.c.h.b16 %v2041
    %v3118 = vunpack.c.l.b16 %v2042
    %v3119 = vunpack.c.h.b16 %v2042
    %v3120 = vunpack.c.l.b16 %v2043
    %v3121 = vunpack.c.h.b16 %v2043
    %v3122 = vunpack.c.l.b16 %v2044
    %v3123 = vunpack.c.h.b16 %v2044
    %v3124 = vunpack.c.l.b16 %v2045
    %v3125 = vunpack.c.h.b16 %v2045
    %v3126 = vunpack.c.l.b16 %v2046
    %v3127 = vunpack.c.h.b16 %v2046
    %v3128 = vunpack.c.l.b16 %v2047
    %v3129 = vunpack.c.h.b16 %v2047
    %v3130 = vunpack.c.l.b16 %v2048
    %v3131 = vunpack.c.h.b16 %v2048
    %v3132 = vunpack.c.l.b16 %v2049
    %v3133 = vunpack.c.h.b16 %v2049
    %v3134 = vunpack.c.l.b16 %v2050
    %v3135 = vunpack.c.h.b16 %v2050
    %v3136 = vunpack.c.l.b16 %v2051
    %v3137 = vunpack.c.h.b16 %v2051
    %v3138 = vunpack.c.l.b16 %v2052
    %v3139 = vunpack.c.h.b16 %v2052
    %v3140 = vunpack.c.l.b16 %v2053
    %v3141 = vunpack.c.h.b16 %v2053
    %v3142 = vunpack.c.l.b16 %v2054
    %v3143 = vunpack.c.h.b16 %v2054
    %v3144 = vunpack.c.l.b16 %v2055
    %v3145 = vunpack.c.h.b16 %v2055
    %v3146 = vunpack.c.l.b16 %v2056
    %v3147 = vunpack.c.h.b16 %v2056
    %v3148 = vunpack.c.l.b16 %v2057
    %v3149 = vunpack.c.h.b16 %v2057
    %v3150 = vunpack.c.l.b16 %v2058
    %v3151 = vunpack.c.h.b16 %v2058
    %v3152 = vunpack.c.l.b16 %v2059
    %v3153 = vunpack.c.h.b16 %v2059
    %v3154 = vunpack.c.l.b16 %v2060
    %v3155 = vunpack.c.h.b16 %v2060
    %v3156 = vunpack.c.l.b16 %v2061
    %v3157 = vunpack.c.h.b16 %v2061
    %v3158 = vunpack.c.l.b16 %v2062
    %v3159 = vunpack.c.h.b16 %v2062
    %v3160 = vunpack.c.l.b16 %v2063
    %v3161 = vunpack.c.h.b16 %v2063
    %v3162 = vunpack.c.l.b16 %v2064
    %v3163 = vunpack.c.h.b16 %v2064
    %v3164 = vunpack.c.l.b16 %v2065
    %v3165 = vunpack.c.h.b16 %v2065
    %v3166 = vunpack.c.l.b16 %v2066
    %v3167 = vunpack.c.h.b16 %v2066
    %v3168 = vunpack.c.l.b16 %v2067
    %v3169 = vunpack.c.h.b16 %v2067
    %v3170 = vunpack.c.l.b16 %v2068
    %v3171 = vunpack.c.h.b16 %v2068
    %v3172 = vunpack.c.l.b16 %v2069
    %v3173 = vunpack.c.h.b16 %v2069
    %v3174 = vunpack.c.l.b16 %v2070
    %v3175 = vunpack.c.h.b16 %v2070
    %v3176 = vunpack.c.l.b16 %v2071
    %v3177 = vunpack.c.h.b16 %v2071
    %v3178 = vunpack.c.l.b16 %v2072
    %v3179 = vunpack.c.h.b16 %v2072
    %v3180 = vunpack.c.l.b16 %v2073
    %v3181 = vunpack.c.h.b16 %v2073
    %v3182 = vunpack.c.l.b16 %v2074
    %v3183 = vunpack.c.h.b16 %v2074
    %v3184 = vunpack.c.l.b16 %v2075
    %v3185 = vunpack.c.h.b16 %v2075
    %v3186 = vunpack.c.l.b16 %v2076
    %v3187 = vunpack.c.h.b16 %v2076
    %v3188 = vunpack.c.l.b16 %v2077
    %v3189 = vunpack.c.h.b16 %v2077
    %v3190 = vunpack.c.l.b16 %v2078
    %v3191 = vunpack.c.h.b16 %v2078
    %v3192 = vunpack.c.l.b16 %v2079
    %v3193 = vunpack.c.h.b16 %v2079
    %v3194 = vunpack.c.l.b16 %v2080
    %v3195 = vunpack.c.h.b16 %v2080
    %v3196 = vunpack.c.l.b16 %v2081
    %v3197 = vunpack.c.h.b16 %v2081
    %v3198 = vunpack.c.l.b16 %v2082
    %v3199 = vunpack.c.h.b16 %v2082
    %v3200 = vunpack.c.l.b16 %v2083
    %v3201 = vunpack.c.h.b16 %v2083
    %v3202 = vunpack.c.l.b16 %v2084
    %v3203 = vunpack.c.h.b16 %v2084
    %v3204 = vunpack.c.l.b16 %v2085
    %v3205 = vunpack.c.h.b16 %v2085
    %v3206 = vunpack.c.l.b16 %v2086
    %v3207 = vunpack.c.h.b16 %v2086
    %v3208 = vunpack.c.l.b16 %v2087
    %v3209 = vunpack.c.h.b16 %v2087
    %v3210 = vunpack.c.l.b16 %v2088
    %v3211 = vunpack.c.h.b16 %v2088
    %v3212 = vunpack.c.l.b16 %v2089
    %v3213 = vunpack.c.h.b16 %v2089
    %v3214 = vunpack.c.l.b16 %v2090
    %v3215 = vunpack.c.h.b16 %v2090
    %v3216 = vunpack.c.l.b16 %v2091
    %v3217 = vunpack.c.h.b16 %v2091
    %v3218 = vunpack.c.l.b16 %v2092
    %v3219 = vunpack.c.h.b16 %v2092
    %v3220 = vunpack.c.l.b16 %v2093
    %v3221 = vunpack.c.h.b16 %v2093
    %v3222 = vunpack.c.l.b16 %v2094
    %v3223 = vunpack.c.h.b16 %v2094
    %v3224 = vunpack.c.l.b16 %v2095
    %v3225 = vunpack.c.h.b16 %v2095
    %v3226 = vunpack.c.l.b16 %v2096
    %v3227 = vunpack.c.h.b16 %v2096
    %v3228 = vunpack.c.l.b16 %v2097
    %v3229 = vunpack.c.h.b16 %v2097
    %v3230 = vunpack.c.l.b16 %v2098
    %v3231 = vunpack.c.h.b16 %v2098
    %v3232 = vunpack.c.l.b16 %v2099
    %v3233 = vunpack.c.h.b16 %v2099
    %v3234 = vunpack.c.l.b16 %v2100
    %v3235 = vunpack.c.h.b16 %v2100
    %v3236 = vunpack.c.l.b16 %v2101
    %v3237 = vunpack.c.h.b16 %v2101
    %v3238 = vunpack.c.l.b16 %v2102
    %v3239 = vunpack.c.h.b16 %v2102
    %v3240 = vunpack.c.l.b16 %v2103
    %v3241 = vunpack.c.h.b16 %v2103
    %v3242 = vunpack.c.l.b16 %v2104
    %v3243 = vunpack.c.h.b16 %v2104
    %v3244 = vunpack.c.l.b16 %v2105
    %v3245 = vunpack.c.h.b16 %v2105
    %v3246 = vunpack.c.l.b16 %v2106
    %v3247 = vunpack.c.h.b16 %v2106
    %v3248 = vunpack.c.l.b16 %v2107
    %v3249 = vunpack.c.h.b16 %v2107
    %v3250 = vunpack.c.l.b16 %v2108
    %v3251 = vunpack.c.h.b16 %v2108
    %v3252 = vunpack.c.l.b16 %v2109
    %v3253 = vunpack.c.h.b16 %v2109
    %v3254 = vunpack.c.l.b16 %v2110
    %v3255 = vunpack.c.h.b16 %v2110
    %v3256 = vunpack.c.l.b16 %v2111
    %v3257 = vunpack.c.h.b16 %v2111
    %v3258 = vunpack.c.l.b16 %v2112
    %v3259 = vunpack.c.h.b16 %v2112
    %v3260 = vunpack.c.l.b16 %v2113
    %v3261 = vunpack.c.h.b16 %v2113
    %v3262 = vunpack.c.l.b16 %v2114
    %v3263 = vunpack.c.h.b16 %v2114
    %v3264 = vunpack.c.l.b16 %v2115
    %v3265 = vunpack.c.h.b16 %v2115
    %v3266 = vunpack.c.l.b16 %v2116
    %v3267 = vunpack.c.h.b16 %v2116
    %v3268 = vunpack.c.l.b16 %v2117
    %v3269 = vunpack.c.h.b16 %v2117
    %v3270 = vunpack.c.l.b16 %v2118
    %v3271 = vunpack.c.h.b16 %v2118
    %v3272 = vunpack.c.l.b16 %v2119
    %v3273 = vunpack.c.h.b16 %v2119
    %v3274 = vunpack.c.l.b16 %v2120
    %v3275 = vunpack.c.h.b16 %v2120
    %v3276 = vunpack.c.l.b16 %v2121
    %v3277 = vunpack.c.h.b16 %v2121
    %v3278 = vunpack.c.l.b16 %v2122
    %v3279 = vunpack.c.h.b16 %v2122
    %v3280 = vunpack.c.l.b16 %v2123
    %v3281 = vunpack.c.h.b16 %v2123
    %v3282 = vunpack.c.l.b16 %v2124
    %v3283 = vunpack.c.h.b16 %v2124
    %v3284 = vunpack.c.l.b16 %v2125
    %v3285 = vunpack.c.h.b16 %v2125
    %v3286 = vunpack.c.l.b16 %v2126
    %v3287 = vunpack.c.h.b16 %v2126
    %v3288 = vunpack.c.l.b16 %v2127
    %v3289 = vunpack.c.h.b16 %v2127
    %v3290 = vunpack.c.l.b16 %v2128
    %v3291 = vunpack.c.h.b16 %v2128
    %v3292 = vunpack.c.l.b16 %v2129
    %v3293 = vunpack.c.h.b16 %v2129
    %v3294 = vunpack.c.l.b16 %v2130
    %v3295 = vunpack.c.h.b16 %v2130
    %v3296 = vunpack.c.l.b16 %v2131
    %v3297 = vunpack.c.h.b16 %v2131
    %v3298 = vunpack.c.l.b16 %v2132
    %v3299 = vunpack.c.h.b16 %v2132
    %v3300 = vunpack.c.l.b16 %v2133
    %v3301 = vunpack.c.h.b16 %v2133
    %v3302 = vunpack.c.l.b16 %v2134
    %v3303 = vunpack.c.h.b16 %v2134
    %v3304 = vunpack.c.l.b16 %v2135
    %v3305 = vunpack.c.h.b16 %v2135
    %v3306 = vunpack.c.l.b16 %v2136
    %v3307 = vunpack.c.h.b16 %v2136
    %v3308 = vunpack.c.l.b16 %v2137
    %v3309 = vunpack.c.h.b16 %v2137
    %v3310 = vunpack.c.l.b16 %v2138
    %v3311 = vunpack.c.h.b16 %v2138
    %v3312 = vunpack.c.l.b16 %v2139
    %v3313 = vunpack.c.h.b16 %v2139
    %v3314 = vunpack.c.l.b16 %v2140
    %v3315 = vunpack.c.h.b16 %v2140
    %v3316 = vunpack.c.l.b16 %v2141
    %v3317 = vunpack.c.h.b16 %v2141
    %v3318 = vunpack.c.l.b16 %v2142
    %v3319 = vunpack.c.h.b16 %v2142
    %v3320 = vunpack.c.l.b16 %v2143
    %v3321 = vunpack.c.h.b16 %v2143
    %v3322 = vunpack.c.l.b16 %v2144
    %v3323 = vunpack.c.h.b16 %v2144
    %v3324 = vunpack.c.l.b16 %v2145
    %v3325 = vunpack.c.h.b16 %v2145
    %v3326 = vunpack.c.l.b16 %v2146
    %v3327 = vunpack.c.h.b16 %v2146
    %v3328 = vunpack.c.l.b16 %v2147
    %v3329 = vunpack.c.h.b16 %v2147
    %v3330 = vunpack.c.l.b16 %v2148
    %v3331 = vunpack.c.h.b16 %v2148
    %v3332 = vunpack.c.l.b16 %v2149
    %v3333 = vunpack.c.h.b16 %v2149
    %v3334 = vunpack.c.l.b16 %v2150
    %v3335 = vunpack.c.h.b16 %v2150
    %v3336 = vunpack.c.l.b16 %v2151
    %v3337 = vunpack.c.h.b16 %v2151
    %v3338 = vunpack.c.l.b16 %v2152
    %v3339 = vunpack.c.h.b16 %v2152
    %v3340 = vunpack.c.l.b16 %v2153
    %v3341 = vunpack.c.h.b16 %v2153
    %v3342 = vunpack.c.l.b16 %v2154
    %v3343 = vunpack.c.h.b16 %v2154
    %v3344 = vunpack.c.l.b16 %v2155
    %v3345 = vunpack.c.h.b16 %v2155
    %v3346 = vunpack.c.l.b16 %v2156
    %v3347 = vunpack.c.h.b16 %v2156
    %v3348 = vunpack.c.l.b16 %v2157
    %v3349 = vunpack.c.h.b16 %v2157
    %v3350 = vunpack.c.l.b16 %v2158
    %v3351 = vunpack.c.h.b16 %v2158
    %v3352 = vunpack.c.l.b16 %v2159
    %v3353 = vunpack.c.h.b16 %v2159
    %v3354 = vpack.c.b16 %v2594, %v2586
    %v3355 = vpack.c.b16 %v2595, %v2587
    %v3356 = vpack.c.b16 %v2596, %v2588
    %v3357 = vpack.c.b16 %v2597, %v2589
    %v3358 = vpack.c.b16 %v2598, %v2590
    %v3359 = vpack.c.b16 %v2599, %v2591
    %v3360 = vpack.c.b16 %v2600, %v2592
    %v3361 = vpack.c.b16 %v2601, %v2593
    %v3362 = vpack.c.b16 %v2610, %v2602
    %v3363 = vpack.c.b16 %v2611, %v2603
    %v3364 = vpack.c.b16 %v2612, %v2604
    %v3365 = vpack.c.b16 %v2613, %v2605
    %v3366 = vpack.c.b16 %v2614, %v2606
    %v3367 = vpack.c.b16 %v2615, %v2607
    %v3368 = vpack.c.b16 %v2616, %v2608
    %v3369 = vpack.c.b16 %v2617, %v2609
    %v3370 = vpack.c.b16 %v2626, %v2618
    %v3371 = vpack.c.b16 %v2627, %v2619
    %v3372 = vpack.c.b16 %v2628, %v2620
    %v3373 = vpack.c.b16 %v2629, %v2621
    %v3374 = vpack.c.b16 %v2630, %v2622
    %v3375 = vpack.c.b16 %v2631, %v2623
    %v3376 = vpack.c.b16 %v2632, %v2624
    %v3377 = vpack.c.b16 %v2633, %v2625
    %v3378 = vpack.c.b16 %v2642, %v2634
    %v3379 = vpack.c.b16 %v2643, %v2635
    %v3380 = vpack.c.b16 %v2644, %v2636
    %v3381 = vpack.c.b16 %v2645, %v2637
    %v3382 = vpack.c.b16 %v2646, %v2638
    %v3383 = vpack.c.b16 %v2647, %v2639
    %v3384 = vpack.c.b16 %v2648, %v2640
    %v3385 = vpack.c.b16 %v2649, %v2641
    %v3386 = vpack.c.b16 %v2658, %v2650
    %v3387 = vpack.c.b16 %v2659, %v2651
    %v3388 = vpack.c.b16 %v2660, %v2652
    %v3389 = vpack.c.b16 %v2661, %v2653
    %v3390 = vpack.c.b16 %v2662, %v2654
    %v3391 = vpack.c.b16 %v2663, %v2655
    %v3392 = vpack.c.b16 %v2664, %v2656
    %v3393 = vpack.c.b16 %v2665, %v2657
    %v3394 = vpack.c.b16 %v2674, %v2666
    %v3395 = vpack.c.b16 %v2675, %v2667
    %v3396 = vpack.c.b16 %v2676, %v2668
    %v3397 = vpack.c.b16 %v2677, %v2669
    %v3398 = vpack.c.b16 %v2678, %v2670
    %v3399 = vpack.c.b16 %v2679, %v2671
    %v3400 = vpack.c.b16 %v2680, %v2672
    %v3401 = vpack.c.b16 %v2681, %v2673
    %v3402 = vpack.c.b16 %v2690, %v2682
    %v3403 = vpack.c.b16 %v2691, %v2683
    %v3404 = vpack.c.b16 %v2692, %v2684
    %v3405 = vpack.c.b16 %v2693, %v2685
    %v3406 = vpack.c.b16 %v2694, %v2686
    %v3407 = vpack.c.b16 %v2695, %v2687
    %v3408 = vpack.c.b16 %v2696, %v2688
    %v3409 = vpack.c.b16 %v2697, %v2689
    %v3410 = vpack.c.b16 %v2706, %v2698
    %v3411 = vpack.c.b16 %v2707, %v2699
    %v3412 = vpack.c.b16 %v2708, %v2700
    %v3413 = vpack.c.b16 %v2709, %v2701
    %v3414 = vpack.c.b16 %v2710, %v2702
    %v3415 = vpack.c.b16 %v2711, %v2703
    %v3416 = vpack.c.b16 %v2712, %v2704
    %v3417 = vpack.c.b16 %v2713, %v2705
    %v3418 = vpack.c.b16 %v2722, %v2714
    %v3419 = vpack.c.b16 %v2723, %v2715
    %v3420 = vpack.c.b16 %v2724, %v2716
    %v3421 = vpack.c.b16 %v2725, %v2717
    %v3422 = vpack.c.b16 %v2726, %v2718
    %v3423 = vpack.c.b16 %v2727, %v2719
    %v3424 = vpack.c.b16 %v2728, %v2720
    %v3425 = vpack.c.b16 %v2729, %v2721
    %v3426 = vpack.c.b16 %v2738, %v2730
    %v3427 = vpack.c.b16 %v2739, %v2731
    %v3428 = vpack.c.b16 %v2740, %v2732
    %v3429 = vpack.c.b16 %v2741, %v2733
    %v3430 = vpack.c.b16 %v2742, %v2734
    %v3431 = vpack.c.b16 %v2743, %v2735
    %v3432 = vpack.c.b16 %v2744, %v2736
    %v3433 = vpack.c.b16 %v2745, %v2737
    %v3434 = vpack.c.b16 %v2754, %v2746
    %v3435 = vpack.c.b16 %v2755, %v2747
    %v3436 = vpack.c.b16 %v2756, %v2748
    %v3437 = vpack.c.b16 %v2757, %v2749
    %v3438 = vpack.c.b16 %v2758, %v2750
    %v3439 = vpack.c.b16 %v2759, %v2751
    %v3440 = vpack.c.b16 %v2760, %v2752
    %v3441 = vpack.c.b16 %v2761, %v2753
    %v3442 = vpack.c.b16 %v2770, %v2762
    %v3443 = vpack.c.b16 %v2771, %v2763
    %v3444 = vpack.c.b16 %v2772, %v2764
    %v3445 = vpack.c.b16 %v2773, %v2765
    %v3446 = vpack.c.b16 %v2774, %v2766
    %v3447 = vpack.c.b16 %v2775, %v2767
    %v3448 = vpack.c.b16 %v2776, %v2768
    %v3449 = vpack.c.b16 %v2777, %v2769
    %v3450 = vpack.c.b16 %v2786, %v2778
    %v3451 = vpack.c.b16 %v2787, %v2779
    %v3452 = vpack.c.b16 %v2788, %v2780
    %v3453 = vpack.c.b16 %v2789, %v2781
    %v3454 = vpack.c.b16 %v2790, %v2782
    %v3455 = vpack.c.b16 %v2791, %v2783
    %v3456 = vpack.c.b16 %v2792, %v2784
    %v3457 = vpack.c.b16 %v2793, %v2785
    %v3458 = vpack.c.b16 %v2802, %v2794
    %v3459 = vpack.c.b16 %v2803, %v2795
    %v3460 = vpack.c.b16 %v2804, %v2796
    %v3461 = vpack.c.b16 %v2805, %v2797
    %v3462 = vpack.c.b16 %v2806, %v2798
    %v3463 = vpack.c.b16 %v2807, %v2799
    %v3464 = vpack.c.b16 %v2808, %v2800
    %v3465 = vpack.c.b16 %v2809, %v2801
    %v3466 = vpack.c.b16 %v2818, %v2810
    %v3467 = vpack.c.b16 %v2819, %v2811
    %v3468 = vpack.c.b16 %v2820, %v2812
    %v3469 = vpack.c.b16 %v2821, %v2813
    %v3470 = vpack.c.b16 %v2822, %v2814
    %v3471 = vpack.c.b16 %v2823, %v2815
    %v3472 = vpack.c.b16 %v2824, %v2816
    %v3473 = vpack.c.b16 %v2825, %v2817
    %v3474 = vpack.c.b16 %v2834, %v2826
    %v3475 = vpack.c.b16 %v2835, %v2827
    %v3476 = vpack.c.b16 %v2836, %v2828
    %v3477 = vpack.c.b16 %v2837, %v2829
    %v3478 = vpack.c.b16 %v2838, %v2830
    %v3479 = vpack.c.b16 %v2839, %v2831
    %v3480 = vpack.c.b16 %v2840, %v2832
    %v3481 = vpack.c.b16 %v2841, %v2833
    %v3482 = vpack.c.b16 %v2850, %v2842
    %v3483 = vpack.c.b16 %v2851, %v2843
    %v3484 = vpack.c.b16 %v2852, %v2844
    %v3485 = vpack.c.b16 %v2853, %v2845
    %v3486 = vpack.c.b16 %v2854, %v2846
    %v3487 = vpack.c.b16 %v2855, %v2847
    %v3488 = vpack.c.b16 %v2856, %v2848
    %v3489 = vpack.c.b16 %v2857, %v2849
    %v3490 = vpack.c.b16 %v2866, %v2858
    %v3491 = vpack.c.b16 %v2867, %v2859
    %v3492 = vpack.c.b16 %v2868, %v2860
    %v3493 = vpack.c.b16 %v2869, %v2861
    %v3494 = vpack.c.b16 %v2870, %v2862
    %v3495 = vpack.c.b16 %v2871, %v2863
    %v3496 = vpack.c.b16 %v2872, %v2864
    %v3497 = vpack.c.b16 %v2873, %v2865
    %v3498 = vpack.c.b16 %v2882, %v2874
    %v3499 = vpack.c.b16 %v2883, %v2875
    %v3500 = vpack.c.b16 %v2884, %v2876
    %v3501 = vpack.c.b16 %v2885, %v2877
    %v3502 = vpack.c.b16 %v2886, %v2878
    %v3503 = vpack.c.b16 %v2887, %v2879
    %v3504 = vpack.c.b16 %v2888, %v2880
    %v3505 = vpack.c.b16 %v2889, %v2881
    %v3506 = vpack.c.b16 %v2898, %v2890
    %v3507 = vpack.c.b16 %v2899, %v2891
    %v3508 = vpack.c.b16 %v2900, %v2892
    %v3509 = vpack.c.b16 %v2901, %v2893
    %v3510 = vpack.c.b16 %v2902, %v2894
    %v3511 = vpack.c.b16 %v2903, %v2895
    %v3512 = vpack.c.b16 %v2904, %v2896
    %v3513 = vpack.c.b16 %v2905, %v2897
    %v3514 = vpack.c.b16 %v2914, %v2906
    %v3515 = vpack.c.b16 %v2915, %v2907
    %v3516 = vpack.c.b16 %v2916, %v2908
    %v3517 = vpack.c.b16 %v2917, %v2909
    %v3518 = vpack.c.b16 %v2918, %v2910
    %v3519 = vpack.c.b16 %v2919, %v2911
    %v3520 = vpack.c.b16 %v2920, %v2912
    %v3521 = vpack.c.b16 %v2921, %v2913
    %v3522 = vpack.c.b16 %v2930, %v2922
    %v3523 = vpack.c.b16 %v2931, %v2923
    %v3524 = vpack.c.b16 %v2932, %v2924
    %v3525 = vpack.c.b16 %v2933, %v2925
    %v3526 = vpack.c.b16 %v2934, %v2926
    %v3527 = vpack.c.b16 %v2935, %v2927
    %v3528 = vpack.c.b16 %v2936, %v2928
    %v3529 = vpack.c.b16 %v2937, %v2929
    %v3530 = vpack.c.b16 %v2946, %v2938
    %v3531 = vpack.c.b16 %v2947, %v2939
    %v3532 = vpack.c.b16 %v2948, %v2940
    %v3533 = vpack.c.b16 %v2949, %v2941
    %v3534 = vpack.c.b16 %v2950, %v2942
    %v3535 = vpack.c.b16 %v2951, %v2943
    %v3536 = vpack.c.b16 %v2952, %v2944
    %v3537 = vpack.c.b16 %v2953, %v2945
    %v3538 = vpack.c.b16 %v2962, %v2954
    %v3539 = vpack.c.b16 %v2963, %v2955
    %v3540 = vpack.c.b16 %v2964, %v2956
    %v3541 = vpack.c.b16 %v2965, %v2957
    %v3542 = vpack.c.b16 %v2966, %v2958
    %v3543 = vpack.c.b16 %v2967, %v2959
    %v3544 = vpack.c.b16 %v2968, %v2960
    %v3545 = vpack.c.b16 %v2969, %v2961
    %v3546 = vpack.c.b16 %v2978, %v2970
    %v3547 = vpack.c.b16 %v2979, %v2971
    %v3548 = vpack.c.b16 %v2980, %v2972
    %v3549 = vpack.c.b16 %v2981, %v2973
    %v3550 = vpack.c.b16 %v2982, %v2974
    %v3551 = vpack.c.b16 %v2983, %v2975
    %v3552 = vpack.c.b16 %v2984, %v2976
    %v3553 = vpack.c.b16 %v2985, %v2977
    %v3554 = vpack.c.b16 %v2994, %v2986
    %v3555 = vpack.c.b16 %v2995, %v2987
    %v3556 = vpack.c.b16 %v2996, %v2988
    %v3557 = vpack.c.b16 %v2997, %v2989
    %v3558 = vpack.c.b16 %v2998, %v2990
    %v3559 = vpack.c.b16 %v2999, %v2991
    %v3560 = vpack.c.b16 %v3000, %v2992
    %v3561 = vpack.c.b16 %v3001, %v2993
    %v3562 = vpack.c.b16 %v3010, %v3002
    %v3563 = vpack.c.b16 %v3011, %v3003
    %v3564 = vpack.c.b16 %v3012, %v3004
    %v3565 = vpack.c.b16 %v3013, %v3005
    %v3566 = vpack.c.b16 %v3014, %v3006
    %v3567 = vpack.c.b16 %v3015, %v3007
    %v3568 = vpack.c.b16 %v3016, %v3008
    %v3569 = vpack.c.b16 %v3017, %v3009
    %v3570 = vpack.c.b16 %v3026, %v3018
    %v3571 = vpack.c.b16 %v3027, %v3019
    %v3572 = vpack.c.b16 %v3028, %v3020
    %v3573 = vpack.c.b16 %v3029, %v3021
    %v3574 = vpack.c.b16 %v3030, %v3022
    %v3575 = vpack.c.b16 %v3031, %v3023
    %v3576 = vpack.c.b16 %v3032, %v3024
    %v3577 = vpack.c.b16 %v3033, %v3025
    %v3578 = vpack.c.b16 %v3042, %v3034
    %v3579 = vpack.c.b16 %v3043, %v3035
    %v3580 = vpack.c.b16 %v3044, %v3036
    %v3581 = vpack.c.b16 %v3045, %v3037
    %v3582 = vpack.c.b16 %v3046, %v3038
    %v3583 = vpack.c.b16 %v3047, %v3039
    %v3584 = vpack.c.b16 %v3048, %v3040
    %v3585 = vpack.c.b16 %v3049, %v3041
    %v3586 = vpack.c.b16 %v3058, %v3050
    %v3587 = vpack.c.b16 %v3059, %v3051
    %v3588 = vpack.c.b16 %v3060, %v3052
    %v3589 = vpack.c.b16 %v3061, %v3053
    %v3590 = vpack.c.b16 %v3062, %v3054
    %v3591 = vpack.c.b16 %v3063, %v3055
    %v3592 = vpack.c.b16 %v3064, %v3056
    %v3593 = vpack.c.b16 %v3065, %v3057
    %v3594 = vpack.c.b16 %v3074, %v3066
    %v3595 = vpack.c.b16 %v3075, %v3067
    %v3596 = vpack.c.b16 %v3076, %v3068
    %v3597 = vpack.c.b16 %v3077, %v3069
    %v3598 = vpack.c.b16 %v3078, %v3070
    %v3599 = vpack.c.b16 %v3079, %v3071
    %v3600 = vpack.c.b16 %v3080, %v3072
    %v3601 = vpack.c.b16 %v3081, %v3073
    %v3602 = vpack.c.b16 %v3090, %v3082
    %v3603 = vpack.c.b16 %v3091, %v3083
    %v3604 = vpack.c.b16 %v3092, %v3084
    %v3605 = vpack.c.b16 %v3093, %v3085
    %v3606 = vpack.c.b16 %v3094, %v3086
    %v3607 = vpack.c.b16 %v3095, %v3087
    %v3608 = vpack.c.b16 %v3096, %v3088
    %v3609 = vpack.c.b16 %v3097, %v3089
    %v3610 = vpack.c.b16 %v3106, %v3098
    %v3611 = vpack.c.b16 %v3107, %v3099
    %v3612 = vpack.c.b16 %v3108, %v3100
    %v3613 = vpack.c.b16 %v3109, %v3101
    %v3614 = vpack.c.b16 %v3110, %v3102
    %v3615 = vpack.c.b16 %v3111, %v3103
    %v3616 = vpack.c.b16 %v3112, %v3104
    %v3617 = vpack.c.b16 %v3113, %v3105
    %v3618 = vpack.c.b16 %v3122, %v3114
    %v3619 = vpack.c.b16 %v3123, %v3115
    %v3620 = vpack.c.b16 %v3124, %v3116
    %v3621 = vpack.c.b16 %v3125, %v3117
    %v3622 = vpack.c.b16 %v3126, %v3118
    %v3623 = vpack.c.b16 %v3127, %v3119
    %v3624 = vpack.c.b16 %v3128, %v3120
    %v3625 = vpack.c.b16 %v3129, %v3121
    %v3626 = vpack.c.b16 %v3138, %v3130
    %v3627 = vpack.c.b16 %v3139, %v3131
    %v3628 = vpack.c.b16 %v3140, %v3132
    %v3629 = vpack.c.b16 %v3141, %v3133
    %v3630 = vpack.c.b16 %v3142, %v3134
    %v3631 = vpack.c.b16 %v3143, %v3135
    %v3632 = vpack.c.b16 %v3144, %v3136
    %v3633 = vpack.c.b16 %v3145, %v3137
    %v3634 = vpack.c.b16 %v3154, %v3146
    %v3635 = vpack.c.b16 %v3155, %v3147
    %v3636 = vpack.c.b16 %v3156, %v3148
    %v3637 = vpack.c.b16 %v3157, %v3149
    %v3638 = vpack.c.b16 %v3158, %v3150
    %v3639 = vpack.c.b16 %v3159, %v3151
    %v3640 = vpack.c.b16 %v3160, %v3152
    %v3641 = vpack.c.b16 %v3161, %v3153
    %v3642 = vpack.c.b16 %v3170, %v3162
    %v3643 = vpack.c.b16 %v3171, %v3163
    %v3644 = vpack.c.b16 %v3172, %v3164
    %v3645 = vpack.c.b16 %v3173, %v3165
    %v3646 = vpack.c.b16 %v3174, %v3166
    %v3647 = vpack.c.b16 %v3175, %v3167
    %v3648 = vpack.c.b16 %v3176, %v3168
    %v3649 = vpack.c.b16 %v3177, %v3169
    %v3650 = vpack.c.b16 %v3186, %v3178
    %v3651 = vpack.c.b16 %v3187, %v3179
    %v3652 = vpack.c.b16 %v3188, %v3180
    %v3653 = vpack.c.b16 %v3189, %v3181
    %v3654 = vpack.c.b16 %v3190, %v3182
    %v3655 = vpack.c.b16 %v3191, %v3183
    %v3656 = vpack.c.b16 %v3192, %v3184
    %v3657 = vpack.c.b16 %v3193, %v3185
    %v3658 = vpack.c.b16 %v3202, %v3194
    %v3659 = vpack.c.b16 %v3203, %v3195
    %v3660 = vpack.c.b16 %v3204, %v3196
    %v3661 = vpack.c.b16 %v3205, %v3197
    %v3662 = vpack.c.b16 %v3206, %v3198
    %v3663 = vpack.c.b16 %v3207, %v3199
    %v3664 = vpack.c.b16 %v3208, %v3200
    %v3665 = vpack.c.b16 %v3209, %v3201
    %v3666 = vpack.c.b16 %v3218, %v3210
    %v3667 = vpack.c.b16 %v3219, %v3211
    %v3668 = vpack.c.b16 %v3220, %v3212
    %v3669 = vpack.c.b16 %v3221, %v3213
    %v3670 = vpack.c.b16 %v3222, %v3214
    %v3671 = vpack.c.b16 %v3223, %v3215
    %v3672 = vpack.c.b16 %v3224, %v3216
    %v3673 = vpack.c.b16 %v3225, %v3217
    %v3674 = vpack.c.b16 %v3234, %v3226
    %v3675 = vpack.c.b16 %v3235, %v3227
    %v3676 = vpack.c.b16 %v3236, %v3228
    %v3677 = vpack.c.b16 %v3237, %v3229
    %v3678 = vpack.c.b16 %v3238, %v3230
    %v3679 = vpack.c.b16 %v3239, %v3231
    %v3680 = vpack.c.b16 %v3240, %v3232
    %v3681 = vpack.c.b16 %v3241, %v3233
    %v3682 = vpack.c.b16 %v3250, %v3242
    %v3683 = vpack.c.b16 %v3251, %v3243
    %v3684 = vpack.c.b16 %v3252, %v3244
    %v3685 = vpack.c.b16 %v3253, %v3245
    %v3686 = vpack.c.b16 %v3254, %v3246
    %v3687 = vpack.c.b16 %v3255, %v3247
    %v3688 = vpack.c.b16 %v3256, %v3248
    %v3689 = vpack.c.b16 %v3257, %v3249
    %v3690 = vpack.c.b16 %v3266, %v3258
    %v3691 = vpack.c.b16 %v3267, %v3259
    %v3692 = vpack.c.b16 %v3268, %v3260
    %v3693 = vpack.c.b16 %v3269, %v3261
    %v3694 = vpack.c.b16 %v3270, %v3262
    %v3695 = vpack.c.b16 %v3271, %v3263
    %v3696 = vpack.c.b16 %v3272, %v3264
    %v3697 = vpack.c.b16 %v3273, %v3265
    %v3698 = vpack.c.b16 %v3282, %v3274
    %v3699 = vpack.c.b16 %v3283, %v3275
    %v3700 = vpack.c.b16 %v3284, %v3276
    %v3701 = vpack.c.b16 %v3285, %v3277
    %v3702 = vpack.c.b16 %v3286, %v3278
    %v3703 = vpack.c.b16 %v3287, %v3279
    %v3704 = vpack.c.b16 %v3288, %v3280
    %v3705 = vpack.c.b16 %v3289, %v3281
    %v3706 = vpack.c.b16 %v3298, %v3290
    %v3707 = vpack.c.b16 %v3299, %v3291
    %v3708 = vpack.c.b16 %v3300, %v3292
    %v3709 = vpack.c.b16 %v3301, %v3293
    %v3710 = vpack.c.b16 %v3302, %v3294
    %v3711 = vpack.c.b16 %v3303, %v3295
    %v3712 = vpack.c.b16 %v3304, %v3296
    %v3713 = vpack.c.b16 %v3305, %v3297
    %v3714 = vpack.c.b16 %v3314, %v3306
    %v3715 = vpack.c.b16 %v3315, %v3307
    %v3716 = vpack.c.b16 %v3316, %v3308
    %v3717 = vpack.c.b16 %v3317, %v3309
    %v3718 = vpack.c.b16 %v3318, %v3310
    %v3719 = vpack.c.b16 %v3319, %v3311
    %v3720 = vpack.c.b16 %v3320, %v3312
    %v3721 = vpack.c.b16 %v3321, %v3313
    %v3722 = vpack.c.b16 %v3330, %v3322
    %v3723 = vpack.c.b16 %v3331, %v3323
    %v3724 = vpack.c.b16 %v3332, %v3324
    %v3725 = vpack.c.b16 %v3333, %v3325
    %v3726 = vpack.c.b16 %v3334, %v3326
    %v3727 = vpack.c.b16 %v3335, %v3327
    %v3728 = vpack.c.b16 %v3336, %v3328
    %v3729 = vpack.c.b16 %v3337, %v3329
    %v3730 = vpack.c.b16 %v3346, %v3338
    %v3731 = vpack.c.b16 %v3347, %v3339
    %v3732 = vpack.c.b16 %v3348, %v3340
    %v3733 = vpack.c.b16 %v3349, %v3341
    %v3734 = vpack.c.b16 %v3350, %v3342
    %v3735 = vpack.c.b16 %v3351, %v3343
    %v3736 = vpack.c.b16 %v3352, %v3344
    %v3737 = vpack.c.b16 %v3353, %v3345
    %4122 = vmatprep.subr.bf16.mxu0 %v3355
    %4123 = vmatpush1.bf16.msra.mxu0 %v3354
    %4124 = vmatprep.subr.bf16.mxu0 %v3363
    %4125 = vmatpush1.bf16.msra.mxu0 %v3362
    %4126 = vmatprep.subr.bf16.mxu0 %v3371
    %4127 = vmatpush1.bf16.msra.mxu0 %v3370
    %4128 = vmatprep.subr.bf16.mxu0 %v3379
    %4129 = vmatpush1.bf16.msra.mxu0 %v3378
    %4130 = vmatprep.subr.bf16.mxu0 %v3387
    %4131 = vmatpush1.bf16.msra.mxu0 %v3386
    %4132 = vmatprep.subr.bf16.mxu0 %v3395
    %4133 = vmatpush1.bf16.msra.mxu0 %v3394
    %4134 = vmatprep.subr.bf16.mxu0 %v3403
    %4135 = vmatpush1.bf16.msra.mxu0 %v3402
    %4136 = vmatprep.subr.bf16.mxu0 %v3411
    %4137 = vmatpush1.bf16.msra.mxu0 %v3410
    %4138 = vmatprep.subr.bf16.mxu0 %v3419
    %4139 = vmatpush1.bf16.msra.mxu0 %v3418
    %4140 = vmatprep.subr.bf16.mxu0 %v3427
    %4141 = vmatpush1.bf16.msra.mxu0 %v3426
    %4142 = vmatprep.subr.bf16.mxu0 %v3435
    %4143 = vmatpush1.bf16.msra.mxu0 %v3434
    %4144 = vmatprep.subr.bf16.mxu0 %v3443
    %4145 = vmatpush1.bf16.msra.mxu0 %v3442
    %4146 = vmatprep.subr.bf16.mxu0 %v3451
    %4147 = vmatpush1.bf16.msra.mxu0 %v3450
    %4148 = vmatprep.subr.bf16.mxu0 %v3459
    %4149 = vmatpush1.bf16.msra.mxu0 %v3458
    %4150 = vmatprep.subr.bf16.mxu0 %v3467
    %4151 = vmatpush1.bf16.msra.mxu0 %v3466
    %4152 = vmatprep.subr.bf16.mxu0 %v3475
    %4153 = vmatpush1.bf16.msra.mxu0 %v3474
    %4154 = vmatprep.mubr.bf16.mxu0 %v1771
    %4155 = vmatmul.mubr.bf16.gmra.mrb[0].mxu0 %v1770
    %v4156 = vpop.f32.mrb[0].mxu0
    %v4157 = vadd.f32 %v2165, %v4156
    %v4158 = vpop.f32.mrb[0].mxu0
    %v4159 = vadd.f32 %v2169, %v4158
    %v4160 = vpop.f32.mrb[0].mxu0
    %v4161 = vpop.f32.mrb[0].mxu0
    %4162 = vdwg.mxu0
    %4163 = vmatprep.subr.bf16.mxu0 %v3483
    %4164 = vmatpush1.bf16.msra.mxu0 %v3482
    %4165 = vmatprep.subr.bf16.mxu0 %v3491
    %4166 = vmatpush1.bf16.msra.mxu0 %v3490
    %4167 = vmatprep.subr.bf16.mxu0 %v3499
    %4168 = vmatpush1.bf16.msra.mxu0 %v3498
    %4169 = vmatprep.subr.bf16.mxu0 %v3507
    %4170 = vmatpush1.bf16.msra.mxu0 %v3506
    %4171 = vmatprep.subr.bf16.mxu0 %v3515
    %4172 = vmatpush1.bf16.msra.mxu0 %v3514
    %4173 = vmatprep.subr.bf16.mxu0 %v3523
    %4174 = vmatpush1.bf16.msra.mxu0 %v3522
    %4175 = vmatprep.subr.bf16.mxu0 %v3531
    %4176 = vmatpush1.bf16.msra.mxu0 %v3530
    %4177 = vmatprep.subr.bf16.mxu0 %v3539
    %4178 = vmatpush1.bf16.msra.mxu0 %v3538
    %4179 = vmatprep.subr.bf16.mxu0 %v3547
    %4180 = vmatpush1.bf16.msra.mxu0 %v3546
    %4181 = vmatprep.subr.bf16.mxu0 %v3555
    %4182 = vmatpush1.bf16.msra.mxu0 %v3554
    %4183 = vmatprep.subr.bf16.mxu0 %v3563
    %4184 = vmatpush1.bf16.msra.mxu0 %v3562
    %4185 = vmatprep.subr.bf16.mxu0 %v3571
    %4186 = vmatpush1.bf16.msra.mxu0 %v3570
    %4187 = vmatprep.subr.bf16.mxu0 %v3579
    %4188 = vmatpush1.bf16.msra.mxu0 %v3578
    %4189 = vmatprep.subr.bf16.mxu0 %v3587
    %4190 = vmatpush1.bf16.msra.mxu0 %v3586
    %4191 = vmatprep.subr.bf16.mxu0 %v3595
    %4192 = vmatpush1.bf16.msra.mxu0 %v3594
    %4193 = vmatprep.subr.bf16.mxu0 %v3603
    %4194 = vmatpush1.bf16.msra.mxu0 %v3602
    %4195 = vmatprep.mubr.bf16.mxu0 %v1773
    %4196 = vmatmul.mubr.bf16.gmra.mrb[0].mxu0 %v1772
    %v4197 = vpop.f32.mrb[0].mxu0
    %v4198 = vadd.f32 %v4157, %v4197
    %v4199 = vpop.f32.mrb[0].mxu0
    %v4200 = vadd.f32 %v4159, %v4199
    %v4201 = vpop.f32.mrb[0].mxu0
    %v4202 = vpop.f32.mrb[0].mxu0
    %4203 = vdwg.mxu0
    %4204 = vmatprep.subr.bf16.mxu0 %v3611
    %4205 = vmatpush1.bf16.msra.mxu0 %v3610
    %4206 = vmatprep.subr.bf16.mxu0 %v3619
    %4207 = vmatpush1.bf16.msra.mxu0 %v3618
    %4208 = vmatprep.subr.bf16.mxu0 %v3627
    %4209 = vmatpush1.bf16.msra.mxu0 %v3626
    %4210 = vmatprep.subr.bf16.mxu0 %v3635
    %4211 = vmatpush1.bf16.msra.mxu0 %v3634
    %4212 = vmatprep.subr.bf16.mxu0 %v3643
    %4213 = vmatpush1.bf16.msra.mxu0 %v3642
    %4214 = vmatprep.subr.bf16.mxu0 %v3651
    %4215 = vmatpush1.bf16.msra.mxu0 %v3650
    %4216 = vmatprep.subr.bf16.mxu0 %v3659
    %4217 = vmatpush1.bf16.msra.mxu0 %v3658
    %4218 = vmatprep.subr.bf16.mxu0 %v3667
    %4219 = vmatpush1.bf16.msra.mxu0 %v3666
    %4220 = vmatprep.subr.bf16.mxu0 %v3675
    %4221 = vmatpush1.bf16.msra.mxu0 %v3674
    %4222 = vmatprep.subr.bf16.mxu0 %v3683
    %4223 = vmatpush1.bf16.msra.mxu0 %v3682
    %4224 = vmatprep.subr.bf16.mxu0 %v3691
    %4225 = vmatpush1.bf16.msra.mxu0 %v3690
    %4226 = vmatprep.subr.bf16.mxu0 %v3699
    %4227 = vmatpush1.bf16.msra.mxu0 %v3698
    %4228 = vmatprep.subr.bf16.mxu0 %v3707
    %4229 = vmatpush1.bf16.msra.mxu0 %v3706
    %4230 = vmatprep.subr.bf16.mxu0 %v3715
    %4231 = vmatpush1.bf16.msra.mxu0 %v3714
    %4232 = vmatprep.subr.bf16.mxu0 %v3723
    %4233 = vmatpush1.bf16.msra.mxu0 %v3722
    %4234 = vmatprep.subr.bf16.mxu0 %v3731
    %4235 = vmatpush1.bf16.msra.mxu0 %v3730
    %4236 = vmatprep.mubr.bf16.mxu0 %v1775
    %4237 = vmatmul.mubr.bf16.gmra.mrb[0].mxu0 %v1774
    %v4238 = vpop.f32.mrb[0].mxu0
    %v4239 = vadd.f32 %v4198, %v4238
    %v4240 = vpop.f32.mrb[0].mxu0
    %v4241 = vadd.f32 %v4200, %v4240
    %v4242 = vpop.f32.mrb[0].mxu0
    %v4243 = vpop.f32.mrb[0].mxu0
    %4244 = vdwg.mxu0
    %4245 = vmatprep.subr.bf16.mxu0 %v3357
    %4246 = vmatpush1.bf16.msra.mxu0 %v3356
    %4247 = vmatprep.subr.bf16.mxu0 %v3365
    %4248 = vmatpush1.bf16.msra.mxu0 %v3364
    %4249 = vmatprep.subr.bf16.mxu0 %v3373
    %4250 = vmatpush1.bf16.msra.mxu0 %v3372
    %4251 = vmatprep.subr.bf16.mxu0 %v3381
    %4252 = vmatpush1.bf16.msra.mxu0 %v3380
    %4253 = vmatprep.subr.bf16.mxu0 %v3389
    %4254 = vmatpush1.bf16.msra.mxu0 %v3388
    %4255 = vmatprep.subr.bf16.mxu0 %v3397
    %4256 = vmatpush1.bf16.msra.mxu0 %v3396
    %4257 = vmatprep.subr.bf16.mxu0 %v3405
    %4258 = vmatpush1.bf16.msra.mxu0 %v3404
    %4259 = vmatprep.subr.bf16.mxu0 %v3413
    %4260 = vmatpush1.bf16.msra.mxu0 %v3412
    %4261 = vmatprep.subr.bf16.mxu0 %v3421
    %4262 = vmatpush1.bf16.msra.mxu0 %v3420
    %4263 = vmatprep.subr.bf16.mxu0 %v3429
    %4264 = vmatpush1.bf16.msra.mxu0 %v3428
    %4265 = vmatprep.subr.bf16.mxu0 %v3437
    %4266 = vmatpush1.bf16.msra.mxu0 %v3436
    %4267 = vmatprep.subr.bf16.mxu0 %v3445
    %4268 = vmatpush1.bf16.msra.mxu0 %v3444
    %4269 = vmatprep.subr.bf16.mxu0 %v3453
    %4270 = vmatpush1.bf16.msra.mxu0 %v3452
    %4271 = vmatprep.subr.bf16.mxu0 %v3461
    %4272 = vmatpush1.bf16.msra.mxu0 %v3460
    %4273 = vmatprep.subr.bf16.mxu0 %v3469
    %4274 = vmatpush1.bf16.msra.mxu0 %v3468
    %4275 = vmatprep.subr.bf16.mxu0 %v3477
    %4276 = vmatpush1.bf16.msra.mxu0 %v3476
    %4277 = vmatprep.mubr.bf16.mxu0 %v1771
    %4278 = vmatmul.mubr.bf16.gmra.mrb[0].mxu0 %v1770
    %v4279 = vpop.f32.mrb[0].mxu0
    %v4280 = vadd.f32 %v2173, %v4279
    %v4281 = vpop.f32.mrb[0].mxu0
    %v4282 = vadd.f32 %v2177, %v4281
    %v4283 = vpop.f32.mrb[0].mxu0
    %v4284 = vpop.f32.mrb[0].mxu0
    %4285 = vdwg.mxu0
    %4286 = vmatprep.subr.bf16.mxu0 %v3485
    %4287 = vmatpush1.bf16.msra.mxu0 %v3484
    %4288 = vmatprep.subr.bf16.mxu0 %v3493
    %4289 = vmatpush1.bf16.msra.mxu0 %v3492
    %4290 = vmatprep.subr.bf16.mxu0 %v3501
    %4291 = vmatpush1.bf16.msra.mxu0 %v3500
    %4292 = vmatprep.subr.bf16.mxu0 %v3509
    %4293 = vmatpush1.bf16.msra.mxu0 %v3508
    %4294 = vmatprep.subr.bf16.mxu0 %v3517
    %4295 = vmatpush1.bf16.msra.mxu0 %v3516
    %4296 = vmatprep.subr.bf16.mxu0 %v3525
    %4297 = vmatpush1.bf16.msra.mxu0 %v3524
    %4298 = vmatprep.subr.bf16.mxu0 %v3533
    %4299 = vmatpush1.bf16.msra.mxu0 %v3532
    %4300 = vmatprep.subr.bf16.mxu0 %v3541
    %4301 = vmatpush1.bf16.msra.mxu0 %v3540
    %4302 = vmatprep.subr.bf16.mxu0 %v3549
    %4303 = vmatpush1.bf16.msra.mxu0 %v3548
    %4304 = vmatprep.subr.bf16.mxu0 %v3557
    %4305 = vmatpush1.bf16.msra.mxu0 %v3556
    %4306 = vmatprep.subr.bf16.mxu0 %v3565
    %4307 = vmatpush1.bf16.msra.mxu0 %v3564
    %4308 = vmatprep.subr.bf16.mxu0 %v3573
    %4309 = vmatpush1.bf16.msra.mxu0 %v3572
    %4310 = vmatprep.subr.bf16.mxu0 %v3581
    %4311 = vmatpush1.bf16.msra.mxu0 %v3580
    %4312 = vmatprep.subr.bf16.mxu0 %v3589
    %4313 = vmatpush1.bf16.msra.mxu0 %v3588
    %4314 = vmatprep.subr.bf16.mxu0 %v3597
    %4315 = vmatpush1.bf16.msra.mxu0 %v3596
    %4316 = vmatprep.subr.bf16.mxu0 %v3605
    %4317 = vmatpush1.bf16.msra.mxu0 %v3604
    %4318 = vmatprep.mubr.bf16.mxu0 %v1773
    %4319 = vmatmul.mubr.bf16.gmra.mrb[0].mxu0 %v1772
    %v4320 = vpop.f32.mrb[0].mxu0
    %v4321 = vadd.f32 %v4280, %v4320
    %v4322 = vpop.f32.mrb[0].mxu0
    %v4323 = vadd.f32 %v4282, %v4322
    %v4324 = vpop.f32.mrb[0].mxu0
    %v4325 = vpop.f32.mrb[0].mxu0
    %4326 = vdwg.mxu0
    %4327 = vmatprep.subr.bf16.mxu0 %v3613
    %4328 = vmatpush1.bf16.msra.mxu0 %v3612
    %4329 = vmatprep.subr.bf16.mxu0 %v3621
    %4330 = vmatpush1.bf16.msra.mxu0 %v3620
    %4331 = vmatprep.subr.bf16.mxu0 %v3629
    %4332 = vmatpush1.bf16.msra.mxu0 %v3628
    %4333 = vmatprep.subr.bf16.mxu0 %v3637
    %4334 = vmatpush1.bf16.msra.mxu0 %v3636
    %4335 = vmatprep.subr.bf16.mxu0 %v3645
    %4336 = vmatpush1.bf16.msra.mxu0 %v3644
    %4337 = vmatprep.subr.bf16.mxu0 %v3653
    %4338 = vmatpush1.bf16.msra.mxu0 %v3652
    %4339 = vmatprep.subr.bf16.mxu0 %v3661
    %4340 = vmatpush1.bf16.msra.mxu0 %v3660
    %4341 = vmatprep.subr.bf16.mxu0 %v3669
    %4342 = vmatpush1.bf16.msra.mxu0 %v3668
    %4343 = vmatprep.subr.bf16.mxu0 %v3677
    %4344 = vmatpush1.bf16.msra.mxu0 %v3676
    %4345 = vmatprep.subr.bf16.mxu0 %v3685
    %4346 = vmatpush1.bf16.msra.mxu0 %v3684
    %4347 = vmatprep.subr.bf16.mxu0 %v3693
    %4348 = vmatpush1.bf16.msra.mxu0 %v3692
    %4349 = vmatprep.subr.bf16.mxu0 %v3701
    %4350 = vmatpush1.bf16.msra.mxu0 %v3700
    %4351 = vmatprep.subr.bf16.mxu0 %v3709
    %4352 = vmatpush1.bf16.msra.mxu0 %v3708
    %4353 = vmatprep.subr.bf16.mxu0 %v3717
    %4354 = vmatpush1.bf16.msra.mxu0 %v3716
    %4355 = vmatprep.subr.bf16.mxu0 %v3725
    %4356 = vmatpush1.bf16.msra.mxu0 %v3724
    %4357 = vmatprep.subr.bf16.mxu0 %v3733
    %4358 = vmatpush1.bf16.msra.mxu0 %v3732
    %4359 = vmatprep.mubr.bf16.mxu0 %v1775
    %4360 = vmatmul.mubr.bf16.gmra.mrb[0].mxu0 %v1774
    %v4361 = vpop.f32.mrb[0].mxu0
    %v4362 = vadd.f32 %v4321, %v4361
    %v4363 = vpop.f32.mrb[0].mxu0
    %v4364 = vadd.f32 %v4323, %v4363
    %v4365 = vpop.f32.mrb[0].mxu0
    %v4366 = vpop.f32.mrb[0].mxu0
    %4367 = vdwg.mxu0
    %4368 = vmatprep.subr.bf16.mxu0 %v3359
    %4369 = vmatpush1.bf16.msra.mxu0 %v3358
    %4370 = vmatprep.subr.bf16.mxu0 %v3367
    %4371 = vmatpush1.bf16.msra.mxu0 %v3366
    %4372 = vmatprep.subr.bf16.mxu0 %v3375
    %4373 = vmatpush1.bf16.msra.mxu0 %v3374
    %4374 = vmatprep.subr.bf16.mxu0 %v3383
    %4375 = vmatpush1.bf16.msra.mxu0 %v3382
    %4376 = vmatprep.subr.bf16.mxu0 %v3391
    %4377 = vmatpush1.bf16.msra.mxu0 %v3390
    %4378 = vmatprep.subr.bf16.mxu0 %v3399
    %4379 = vmatpush1.bf16.msra.mxu0 %v3398
    %4380 = vmatprep.subr.bf16.mxu0 %v3407
    %4381 = vmatpush1.bf16.msra.mxu0 %v3406
    %4382 = vmatprep.subr.bf16.mxu0 %v3415
    %4383 = vmatpush1.bf16.msra.mxu0 %v3414
    %4384 = vmatprep.subr.bf16.mxu0 %v3423
    %4385 = vmatpush1.bf16.msra.mxu0 %v3422
    %4386 = vmatprep.subr.bf16.mxu0 %v3431
    %4387 = vmatpush1.bf16.msra.mxu0 %v3430
    %4388 = vmatprep.subr.bf16.mxu0 %v3439
    %4389 = vmatpush1.bf16.msra.mxu0 %v3438
    %4390 = vmatprep.subr.bf16.mxu0 %v3447
    %4391 = vmatpush1.bf16.msra.mxu0 %v3446
    %4392 = vmatprep.subr.bf16.mxu0 %v3455
    %4393 = vmatpush1.bf16.msra.mxu0 %v3454
    %4394 = vmatprep.subr.bf16.mxu0 %v3463
    %4395 = vmatpush1.bf16.msra.mxu0 %v3462
    %4396 = vmatprep.subr.bf16.mxu0 %v3471
    %4397 = vmatpush1.bf16.msra.mxu0 %v3470
    %4398 = vmatprep.subr.bf16.mxu0 %v3479
    %4399 = vmatpush1.bf16.msra.mxu0 %v3478
    %4400 = vmatprep.mubr.bf16.mxu0 %v1771
    %4401 = vmatmul.mubr.bf16.gmra.mrb[0].mxu0 %v1770
    %v4402 = vpop.f32.mrb[0].mxu0
    %v4403 = vadd.f32 %v2181, %v4402
    %v4404 = vpop.f32.mrb[0].mxu0
    %v4405 = vadd.f32 %v2185, %v4404
    %v4406 = vpop.f32.mrb[0].mxu0
    %v4407 = vpop.f32.mrb[0].mxu0
    %4408 = vdwg.mxu0
    %4409 = vmatprep.subr.bf16.mxu0 %v3487
    %4410 = vmatpush1.bf16.msra.mxu0 %v3486
    %4411 = vmatprep.subr.bf16.mxu0 %v3495
    %4412 = vmatpush1.bf16.msra.mxu0 %v3494
    %4413 = vmatprep.subr.bf16.mxu0 %v3503
    %4414 = vmatpush1.bf16.msra.mxu0 %v3502
    %4415 = vmatprep.subr.bf16.mxu0 %v3511
    %4416 = vmatpush1.bf16.msra.mxu0 %v3510
    %4417 = vmatprep.subr.bf16.mxu0 %v3519
    %4418 = vmatpush1.bf16.msra.mxu0 %v3518
    %4419 = vmatprep.subr.bf16.mxu0 %v3527
    %4420 = vmatpush1.bf16.msra.mxu0 %v3526
    %4421 = vmatprep.subr.bf16.mxu0 %v3535
    %4422 = vmatpush1.bf16.msra.mxu0 %v3534
    %4423 = vmatprep.subr.bf16.mxu0 %v3543
    %4424 = vmatpush1.bf16.msra.mxu0 %v3542
    %4425 = vmatprep.subr.bf16.mxu0 %v3551
    %4426 = vmatpush1.bf16.msra.mxu0 %v3550
    %4427 = vmatprep.subr.bf16.mxu0 %v3559
    %4428 = vmatpush1.bf16.msra.mxu0 %v3558
    %4429 = vmatprep.subr.bf16.mxu0 %v3567
    %4430 = vmatpush1.bf16.msra.mxu0 %v3566
    %4431 = vmatprep.subr.bf16.mxu0 %v3575
    %4432 = vmatpush1.bf16.msra.mxu0 %v3574
    %4433 = vmatprep.subr.bf16.mxu0 %v3583
    %4434 = vmatpush1.bf16.msra.mxu0 %v3582
    %4435 = vmatprep.subr.bf16.mxu0 %v3591
    %4436 = vmatpush1.bf16.msra.mxu0 %v3590
    %4437 = vmatprep.subr.bf16.mxu0 %v3599
    %4438 = vmatpush1.bf16.msra.mxu0 %v3598
    %4439 = vmatprep.subr.bf16.mxu0 %v3607
    %4440 = vmatpush1.bf16.msra.mxu0 %v3606
    %4441 = vmatprep.mubr.bf16.mxu0 %v1773
    %4442 = vmatmul.mubr.bf16.gmra.mrb[0].mxu0 %v1772
    %v4443 = vpop.f32.mrb[0].mxu0
    %v4444 = vadd.f32 %v4403, %v4443
    %v4445 = vpop.f32.mrb[0].mxu0
    %v4446 = vadd.f32 %v4405, %v4445
    %v4447 = vpop.f32.mrb[0].mxu0
    %v4448 = vpop.f32.mrb[0].mxu0
    %4449 = vdwg.mxu0
    %4450 = vmatprep.subr.bf16.mxu0 %v3615
    %4451 = vmatpush1.bf16.msra.mxu0 %v3614
    %4452 = vmatprep.subr.bf16.mxu0 %v3623
    %4453 = vmatpush1.bf16.msra.mxu0 %v3622
    %4454 = vmatprep.subr.bf16.mxu0 %v3631
    %4455 = vmatpush1.bf16.msra.mxu0 %v3630
    %4456 = vmatprep.subr.bf16.mxu0 %v3639
    %4457 = vmatpush1.bf16.msra.mxu0 %v3638
    %4458 = vmatprep.subr.bf16.mxu0 %v3647
    %4459 = vmatpush1.bf16.msra.mxu0 %v3646
    %4460 = vmatprep.subr.bf16.mxu0 %v3655
    %4461 = vmatpush1.bf16.msra.mxu0 %v3654
    %4462 = vmatprep.subr.bf16.mxu0 %v3663
    %4463 = vmatpush1.bf16.msra.mxu0 %v3662
    %4464 = vmatprep.subr.bf16.mxu0 %v3671
    %4465 = vmatpush1.bf16.msra.mxu0 %v3670
    %4466 = vmatprep.subr.bf16.mxu0 %v3679
    %4467 = vmatpush1.bf16.msra.mxu0 %v3678
    %4468 = vmatprep.subr.bf16.mxu0 %v3687
    %4469 = vmatpush1.bf16.msra.mxu0 %v3686
    %4470 = vmatprep.subr.bf16.mxu0 %v3695
    %4471 = vmatpush1.bf16.msra.mxu0 %v3694
    %4472 = vmatprep.subr.bf16.mxu0 %v3703
    %4473 = vmatpush1.bf16.msra.mxu0 %v3702
    %4474 = vmatprep.subr.bf16.mxu0 %v3711
    %4475 = vmatpush1.bf16.msra.mxu0 %v3710
    %4476 = vmatprep.subr.bf16.mxu0 %v3719
    %4477 = vmatpush1.bf16.msra.mxu0 %v3718
    %4478 = vmatprep.subr.bf16.mxu0 %v3727
    %4479 = vmatpush1.bf16.msra.mxu0 %v3726
    %4480 = vmatprep.subr.bf16.mxu0 %v3735
    %4481 = vmatpush1.bf16.msra.mxu0 %v3734
    %4482 = vmatprep.mubr.bf16.mxu0 %v1775
    %4483 = vmatmul.mubr.bf16.gmra.mrb[0].mxu0 %v1774
    %v4484 = vpop.f32.mrb[0].mxu0
    %v4485 = vadd.f32 %v4444, %v4484
    %v4486 = vpop.f32.mrb[0].mxu0
    %v4487 = vadd.f32 %v4446, %v4486
    %v4488 = vpop.f32.mrb[0].mxu0
    %v4489 = vpop.f32.mrb[0].mxu0
    %4490 = vdwg.mxu0
    %4491 = vmatprep.subr.bf16.mxu0 %v3361
    %4492 = vmatpush1.bf16.msra.mxu0 %v3360
    %4493 = vmatprep.subr.bf16.mxu0 %v3369
    %4494 = vmatpush1.bf16.msra.mxu0 %v3368
    %4495 = vmatprep.subr.bf16.mxu0 %v3377
    %4496 = vmatpush1.bf16.msra.mxu0 %v3376
    %4497 = vmatprep.subr.bf16.mxu0 %v3385
    %4498 = vmatpush1.bf16.msra.mxu0 %v3384
    %4499 = vmatprep.subr.bf16.mxu0 %v3393
    %4500 = vmatpush1.bf16.msra.mxu0 %v3392
    %4501 = vmatprep.subr.bf16.mxu0 %v3401
    %4502 = vmatpush1.bf16.msra.mxu0 %v3400
    %4503 = vmatprep.subr.bf16.mxu0 %v3409
    %4504 = vmatpush1.bf16.msra.mxu0 %v3408
    %4505 = vmatprep.subr.bf16.mxu0 %v3417
    %4506 = vmatpush1.bf16.msra.mxu0 %v3416
    %4507 = vmatprep.subr.bf16.mxu0 %v3425
    %4508 = vmatpush1.bf16.msra.mxu0 %v3424
    %4509 = vmatprep.subr.bf16.mxu0 %v3433
    %4510 = vmatpush1.bf16.msra.mxu0 %v3432
    %4511 = vmatprep.subr.bf16.mxu0 %v3441
    %4512 = vmatpush1.bf16.msra.mxu0 %v3440
    %4513 = vmatprep.subr.bf16.mxu0 %v3449
    %4514 = vmatpush1.bf16.msra.mxu0 %v3448
    %4515 = vmatprep.subr.bf16.mxu0 %v3457
    %4516 = vmatpush1.bf16.msra.mxu0 %v3456
    %4517 = vmatprep.subr.bf16.mxu0 %v3465
    %4518 = vmatpush1.bf16.msra.mxu0 %v3464
    %4519 = vmatprep.subr.bf16.mxu0 %v3473
    %4520 = vmatpush1.bf16.msra.mxu0 %v3472
    %4521 = vmatprep.subr.bf16.mxu0 %v3481
    %4522 = vmatpush1.bf16.msra.mxu0 %v3480
    %4523 = vmatprep.mubr.bf16.mxu0 %v1771
    %4524 = vmatmul.mubr.bf16.gmra.mrb[0].mxu0 %v1770
    %v4525 = vpop.f32.mrb[0].mxu0
    %v4526 = vadd.f32 %v2189, %v4525
    %v4527 = vpop.f32.mrb[0].mxu0
    %v4528 = vadd.f32 %v2193, %v4527
    %v4529 = vpop.f32.mrb[0].mxu0
    %v4530 = vpop.f32.mrb[0].mxu0
    %4531 = vdwg.mxu0
    %4532 = vmatprep.subr.bf16.mxu0 %v3489
    %4533 = vmatpush1.bf16.msra.mxu0 %v3488
    %4534 = vmatprep.subr.bf16.mxu0 %v3497
    %4535 = vmatpush1.bf16.msra.mxu0 %v3496
    %4536 = vmatprep.subr.bf16.mxu0 %v3505
    %4537 = vmatpush1.bf16.msra.mxu0 %v3504
    %4538 = vmatprep.subr.bf16.mxu0 %v3513
    %4539 = vmatpush1.bf16.msra.mxu0 %v3512
    %4540 = vmatprep.subr.bf16.mxu0 %v3521
    %4541 = vmatpush1.bf16.msra.mxu0 %v3520
    %4542 = vmatprep.subr.bf16.mxu0 %v3529
    %4543 = vmatpush1.bf16.msra.mxu0 %v3528
    %4544 = vmatprep.subr.bf16.mxu0 %v3537
    %4545 = vmatpush1.bf16.msra.mxu0 %v3536
    %4546 = vmatprep.subr.bf16.mxu0 %v3545
    %4547 = vmatpush1.bf16.msra.mxu0 %v3544
    %4548 = vmatprep.subr.bf16.mxu0 %v3553
    %4549 = vmatpush1.bf16.msra.mxu0 %v3552
    %4550 = vmatprep.subr.bf16.mxu0 %v3561
    %4551 = vmatpush1.bf16.msra.mxu0 %v3560
    %4552 = vmatprep.subr.bf16.mxu0 %v3569
    %4553 = vmatpush1.bf16.msra.mxu0 %v3568
    %4554 = vmatprep.subr.bf16.mxu0 %v3577
    %4555 = vmatpush1.bf16.msra.mxu0 %v3576
    %4556 = vmatprep.subr.bf16.mxu0 %v3585
    %4557 = vmatpush1.bf16.msra.mxu0 %v3584
    %4558 = vmatprep.subr.bf16.mxu0 %v3593
    %4559 = vmatpush1.bf16.msra.mxu0 %v3592
    %4560 = vmatprep.subr.bf16.mxu0 %v3601
    %4561 = vmatpush1.bf16.msra.mxu0 %v3600
    %4562 = vmatprep.subr.bf16.mxu0 %v3609
    %4563 = vmatpush1.bf16.msra.mxu0 %v3608
    %4564 = vmatprep.mubr.bf16.mxu0 %v1773
    %4565 = vmatmul.mubr.bf16.gmra.mrb[0].mxu0 %v1772
    %v4566 = vpop.f32.mrb[0].mxu0
    %v4567 = vadd.f32 %v4526, %v4566
    %v4568 = vpop.f32.mrb[0].mxu0
    %v4569 = vadd.f32 %v4528, %v4568
    %v4570 = vpop.f32.mrb[0].mxu0
    %v4571 = vpop.f32.mrb[0].mxu0
    %4572 = vdwg.mxu0
    %4573 = vmatprep.subr.bf16.mxu0 %v3617
    %4574 = vmatpush1.bf16.msra.mxu0 %v3616
    %4575 = vmatprep.subr.bf16.mxu0 %v3625
    %4576 = vmatpush1.bf16.msra.mxu0 %v3624
    %4577 = vmatprep.subr.bf16.mxu0 %v3633
    %4578 = vmatpush1.bf16.msra.mxu0 %v3632
    %4579 = vmatprep.subr.bf16.mxu0 %v3641
    %4580 = vmatpush1.bf16.msra.mxu0 %v3640
    %4581 = vmatprep.subr.bf16.mxu0 %v3649
    %4582 = vmatpush1.bf16.msra.mxu0 %v3648
    %4583 = vmatprep.subr.bf16.mxu0 %v3657
    %4584 = vmatpush1.bf16.msra.mxu0 %v3656
    %4585 = vmatprep.subr.bf16.mxu0 %v3665
    %4586 = vmatpush1.bf16.msra.mxu0 %v3664
    %4587 = vmatprep.subr.bf16.mxu0 %v3673
    %4588 = vmatpush1.bf16.msra.mxu0 %v3672
    %4589 = vmatprep.subr.bf16.mxu0 %v3681
    %4590 = vmatpush1.bf16.msra.mxu0 %v3680
    %4591 = vmatprep.subr.bf16.mxu0 %v3689
    %4592 = vmatpush1.bf16.msra.mxu0 %v3688
    %4593 = vmatprep.subr.bf16.mxu0 %v3697
    %4594 = vmatpush1.bf16.msra.mxu0 %v3696
    %4595 = vmatprep.subr.bf16.mxu0 %v3705
    %4596 = vmatpush1.bf16.msra.mxu0 %v3704
    %4597 = vmatprep.subr.bf16.mxu0 %v3713
    %4598 = vmatpush1.bf16.msra.mxu0 %v3712
    %4599 = vmatprep.subr.bf16.mxu0 %v3721
    %4600 = vmatpush1.bf16.msra.mxu0 %v3720
    %4601 = vmatprep.subr.bf16.mxu0 %v3729
    %4602 = vmatpush1.bf16.msra.mxu0 %v3728
    %4603 = vmatprep.subr.bf16.mxu0 %v3737
    %4604 = vmatpush1.bf16.msra.mxu0 %v3736
    %4605 = vmatprep.mubr.bf16.mxu0 %v1775
    %4606 = vmatmul.mubr.bf16.gmra.mrb[0].mxu0 %v1774
    %v4607 = vpop.f32.mrb[0].mxu0
    %v4608 = vadd.f32 %v4567, %v4607
    %v4609 = vpop.f32.mrb[0].mxu0
    %v4610 = vadd.f32 %v4569, %v4609
    %v4611 = vpop.f32.mrb[0].mxu0
    %v4612 = vpop.f32.mrb[0].mxu0
    %4613 = vdwg.mxu0
    %v4622 = vcombine.low %v4239, %v4241
    %v4623 = vcombine.low %v4362, %v4364
    %v4625 = vunpack.c.l.s4 1983009808
    %v4626 = vunpack.c.0.s8 %v4625
    %v4627 = vlaneseq
    %v4628 = vshrl.u32 %v4627, 7
    %v4629 = vsub.s32 %v4626, %v4628
    %v4630 = vrot.slane %v4622, %v4629
    %v4632 = vunpack.c.l.s4 1983009808
    %v4633 = vunpack.c.0.s8 %v4632
    %v4634 = vlaneseq
    %v4635 = vshrl.u32 %v4634, 7
    %v4636 = vsub.s32 %v4633, %v4635
    %v4637 = vrot.slane %v4623, %v4636
    %v4638 = vcombine.low %v4630, %v4637
    %v4639 = vcombine.low %v4485, %v4487
    %v4640 = vcombine.low %v4608, %v4610
    %v4642 = vunpack.c.l.s4 1983009808
    %v4643 = vunpack.c.0.s8 %v4642
    %v4644 = vlaneseq
    %v4645 = vshrl.u32 %v4644, 7
    %v4646 = vsub.s32 %v4643, %v4645
    %v4647 = vrot.slane %v4639, %v4646
    %v4649 = vunpack.c.l.s4 1983009808
    %v4650 = vunpack.c.0.s8 %v4649
    %v4651 = vlaneseq
    %v4652 = vshrl.u32 %v4651, 7
    %v4653 = vsub.s32 %v4650, %v4652
    %v4654 = vrot.slane %v4640, %v4653
    %v4655 = vcombine.low %v4647, %v4654
    %4658 = vst [vmem:[#allocation2] sm:$0xff] %v4638
    %4659 = vst [vmem:[#allocation2 + $0x8] sm:$0xff] %v4655
    // Predicated region
    $region34: #{auxiliary_head_imagenet.1} parent=1 // pred_check
      _
    $region35: #{auxiliary_head_imagenet.1} parent=1 // pred_check_branch
      %4661 = sbr.rel (0) target = $region37
    $region36: #{auxiliary_head_imagenet.1} parent=1 // pred_region
      %s4663 = ssub.s32 256, 256
      %4664 = vsyncadd [#allocation3], %s4663
      %s4666 = sshll.u32 [#allocation2], 4
      %s4667 = int_to_ptr.vmem [resolvable:$true] %s4666
      %4669 = dma.vmem_to_hbm [thread:$0]  %s4667, 256, %s8, [#allocation3]
    $region37: #{auxiliary_head_imagenet.1} parent=1 // pred_fallthru
      _
    // Predicated region
    $region38: #{auxiliary_head_imagenet.1} parent=1 // pred_check
      _
    $region39: #{auxiliary_head_imagenet.1} parent=1 // pred_check_branch
      %4671 = sbr.rel (0) target = $region41
    $region40: #{auxiliary_head_imagenet.1} parent=1 // pred_region
      %4672 = dma.done [#allocation3], 256
    $region41: #{auxiliary_head_imagenet.1} parent=1 // pred_fallthru
      _
    %4673 = vsyncpa [#allocation3], 1

</llo_original>
